<compile_context>
chip_gen: v5e
topology: v5e:2x2
jax: 0.10.0
libtpu: 0.0.40
codegen_flags: <defaults>
</compile_context>

<pallas_src>
import jax
import jax.numpy as jnp
import numpy as np
from jax import lax
from jax.experimental import pallas as pl
from jax.experimental.pallas import tpu as pltpu

EPS = 1e-5


def make_cnn_forward(conv_params, batch, height, width):
    (ci1, C1, k1, s1, pd1), (ci2, C2, k2, s2, pd2), \
        (ci3, C3, k3, s3, pd3), (ci4, C4, k4, s4, pd4) = conv_params

    # The fused kernel is specialised to this module configuration.
    assert (k1, k2, k3, k4) == (3, 3, 3, 3)
    assert (pd1, pd2, pd3, pd4) == (1, 1, 1, 1)
    assert (s1, s2, s3, s4) == (1, 2, 1, 2)
    assert ci2 == C1 and ci3 == C2 and ci4 == C3

    N = batch
    H1, W1 = height, width              # layer-1 output spatial (stride 1, 'same')
    OH2, OW2 = H1 // 2, W1 // 2         # layer-2 output spatial (stride 2)
    OH3, OW3 = OH2, OW2                 # layer-3 output spatial (stride 1)
    OH4, OW4 = OH3 // 2, OW3 // 2       # layer-4 output spatial (stride 2)
    # keep every in-kernel flatten 8-aligned on the sublane dimension
    assert W1 % 16 == 0 and H1 % 4 == 0 and OW3 % 8 == 0

    M1 = N * H1 * W1
    M2 = N * OH2 * OW2
    M3 = N * OH3 * OW3
    M4r = N * OH4 * OW4                 # real layer-4 output positions
    M4f = N * OH4 * (2 * OW4)           # rows incl. fake (odd) columns
    K1 = 9 * ci1
    K1P = ((K1 + 7) // 8) * 8
    K2, K3, K4 = 9 * C1, 9 * C2, 9 * C3
    PATM, PATK = max(M2, M3, M4f), max(K2, K3, K4)

    HP2 = H1 + 2                        # padded rows of layer-2 input
    WPH = W1 // 2 + 1                   # width of each column-parity plane
    HP3, WP3 = OH2 + 2, OW2 + 2
    HP4, WP4 = OH3 + 2, OW3 + 2

    # ------------------------------ kernel --------------------------------- #
    def kernel(p1_ref, w1_ref, bgb1_ref, w2_ref, bgb2_ref,
               w3_ref, bgb3_ref, w4_ref, bgb4_ref, out_ref,
               xe_ref, xo_ref, xp3_ref, xp4_ref, pat_ref):

        def bias_relu_bn(acc, bgb_ref, mask=None, count=None):
            bias = bgb_ref[0:1, :]
            gamma = bgb_ref[1:2, :]
            beta = bgb_ref[2:3, :]
            y = jnp.maximum(acc + bias, 0.0)
            if mask is None:
                inv_m = 1.0 / float(acc.shape[0])
                mean = jnp.sum(y, axis=0, keepdims=True) * inv_m
                d = y - mean
                var = jnp.sum(d * d, axis=0, keepdims=True) * inv_m
            else:
                inv_m = 1.0 / float(count)
                mean = jnp.sum(y * mask, axis=0, keepdims=True) * inv_m
                d = y - mean
                var = jnp.sum(d * d * mask, axis=0, keepdims=True) * inv_m
            scale = gamma * lax.rsqrt(var + EPS)
            return d * scale + beta

        # -------- layer 1: single matmul on host-built im2col patches --------
        acc1 = jnp.dot(p1_ref[...], w1_ref[...],
                       preferred_element_type=jnp.float32)
        x1 = bias_relu_bn(acc1, bgb1_ref)      # (M1, C1), rows (n, y, xpar, xhalf)

        # -------- scatter layer-1 output into column-parity padded planes ----
        xe_ref[...] = jnp.zeros(xe_ref.shape, jnp.float32)
        xo_ref[...] = jnp.zeros(xo_ref.shape, jnp.float32)
        x1r = x1.reshape(N, H1, 2, W1 // 2, C1)            # (n, y, parity, xhalf, c)
        # original col x = 2*xhalf   -> padded col 2*xhalf+1 (odd plane, j = xhalf)
        xo_ref[:, 1:1 + H1, 0:W1 // 2, :] = x1r[:, :, 0, :, :]
        # original col x = 2*xhalf+1 -> padded col 2*xhalf+2 (even plane, j = xhalf+1)
        xe_ref[:, 1:1 + H1, 1:1 + W1 // 2, :] = x1r[:, :, 1, :, :]

        # -------- layer 2: stride-2 conv, taps read from parity planes -------
        for kh in range(3):
            for kw in range(3):
                t = kh * 3 + kw
                src = xe_ref if kw % 2 == 0 else xo_ref
                j0 = kw // 2
                win = src[:, kh:kh + 2 * OH2, j0:j0 + OW2, :]        # (N,2*OH2,OW2,C1)
                win = win.reshape(N * OH2, 2, OW2, C1)[:, 0, :, :]   # even row offsets
                pat_ref[:, t * C1:(t + 1) * C1] = win.reshape(M2, C1)
        acc2 = jnp.dot(pat_ref[:, 0:K2], w2_ref[...],
                       preferred_element_type=jnp.float32)
        x2 = bias_relu_bn(acc2, bgb2_ref)                            # (M2, C2)

        # -------- layer 3: stride-1 conv on padded scratch --------------------
        xp3_ref[...] = jnp.zeros(xp3_ref.shape, jnp.float32)
        xp3_ref[:, 1:1 + OH2, 1:1 + OW2, :] = x2.reshape(N, OH2, OW2, C2)
        for kh in range(3):
            for kw in range(3):
                t = kh * 3 + kw
                win = xp3_ref[:, kh:kh + OH3, kw:kw + OW3, :]        # (N,OH3,OW3,C2)
                pat_ref[:, t * C2:(t + 1) * C2] = win.reshape(M3, C2)
        acc3 = jnp.dot(pat_ref[...], w3_ref[...],
                       preferred_element_type=jnp.float32)
        x3 = bias_relu_bn(acc3, bgb3_ref)                            # (M3, C3)

        # -------- layer 4: stride-2, final layer ------------------------------
        # Rows subsampled in-kernel; columns kept at stride 1 ("fake" odd
        # columns, dropped by the wrapper).  BN stats masked to real positions.
        xp4_ref[...] = jnp.zeros(xp4_ref.shape, jnp.float32)
        xp4_ref[:, 1:1 + OH3, 1:1 + OW3, :] = x3.reshape(N, OH3, OW3, C3)
        for kh in range(3):
            for kw in range(3):
                t = kh * 3 + kw
                win = xp4_ref[:, kh:kh + 2 * OH4, kw:kw + 2 * OW4, :]    # (N,2OH4,2OW4,C3)
                win = win.reshape(N * OH4, 2, 2 * OW4, C3)[:, 0, :, :]   # even row offsets
                pat_ref[0:M4f, t * C3:(t + 1) * C3] = win.reshape(M4f, C3)
        acc4 = jnp.dot(pat_ref[0:M4f, :], w4_ref[...],
                       preferred_element_type=jnp.float32)               # (M4f, C4)
        rows = lax.broadcasted_iota(jnp.int32, (M4f, 1), 0)
        real = ((rows & 1) == 0).astype(jnp.float32)                     # even cols real
        out_ref[...] = bias_relu_bn(acc4, bgb4_ref, mask=real, count=M4r)

    # --------------------------- host-side glue ---------------------------- #
    def _im2col3x3(x_nhwc):
        # 3x3, stride 1, pad 1; rows ordered (n, y, x), columns (kh, kw, c).
        n, h, w, c = x_nhwc.shape
        xp = jnp.pad(x_nhwc, ((0, 0), (1, 1), (1, 1), (0, 0)))
        cols = []
        for kh in range(3):
            for kw in range(3):
                cols.append(xp[:, kh:kh + h, kw:kw + w, :])
        return jnp.stack(cols, axis=3).reshape(n * h * w, 9 * c)

    @jax.jit
    def forward(x_nchw, params):
        x = jnp.transpose(x_nchw, (0, 2, 3, 1))                       # NHWC

        # Layer-1 im2col at the network boundary; rows permuted to
        # (n, y, x_parity, x_half) so the kernel can phase-split layer-1's
        # output using aligned reshapes only.
        patches = _im2col3x3(x)                                       # (M1, K1)
        patches = (patches.reshape(N, H1, W1 // 2, 2, K1)
                   .transpose(0, 1, 3, 2, 4)
                   .reshape(M1, K1))
        patches = jnp.pad(patches, ((0, 0), (0, K1P - K1)))

        w1, b1, g1, bt1 = params[0]
        w1m = jnp.transpose(w1, (2, 3, 1, 0)).reshape(K1, C1)
        w1m = jnp.pad(w1m, ((0, K1P - K1), (0, 0)))
        kernel_inputs = [patches, w1m, jnp.stack([b1, g1, bt1], axis=0)]
        for li in range(1, 4):
            wl, bl, gl, btl = params[li]
            cin, cout = conv_params[li][0], conv_params[li][1]
            kernel_inputs.append(
                jnp.transpose(wl, (2, 3, 1, 0)).reshape(9 * cin, cout))
            kernel_inputs.append(jnp.stack([bl, gl, btl], axis=0))

        out2d = pl.pallas_call(
            kernel,
            out_shape=jax.ShapeDtypeStruct((M4f, C4), jnp.float32),
            grid=(1,),
            in_specs=[pl.BlockSpec(a.shape, lambda i, nd=a.ndim: (0,) * nd)
                      for a in kernel_inputs],
            out_specs=pl.BlockSpec((M4f, C4), lambda i: (0, 0)),
            scratch_shapes=[
                pltpu.VMEM((N, HP2, WPH, C1), jnp.float32),   # even-column plane
                pltpu.VMEM((N, HP2, WPH, C1), jnp.float32),   # odd-column plane
                pltpu.VMEM((N, HP3, WP3, C2), jnp.float32),   # padded layer-3 input
                pltpu.VMEM((N, HP4, WP4, C3), jnp.float32),   # padded layer-4 input
                pltpu.VMEM((PATM, PATK), jnp.float32),        # shared patch matrix
            ],
            compiler_params=pltpu.CompilerParams(
                dimension_semantics=("arbitrary",)),
        )(*kernel_inputs)

        # Drop the fake (odd) layer-4 columns and return NCHW.
        out = out2d.reshape(N, OH4, 2 * OW4, C4)[:, :, 0::2, :]
        return jnp.transpose(out, (0, 3, 1, 2))

    return forward


# ------------------------------ reference (JAX) ----------------------------- #
def reference_forward(x_nchw, params, conv_params, eps=EPS):
    x = x_nchw
    for (w, b, g, bt), cp in zip(params, conv_params):
        _, _, _, stride, padding = cp
        y = lax.conv_general_dilated(
            x, w, window_strides=(stride, stride),
            padding=[(padding, padding), (padding, padding)],
            dimension_numbers=("NCHW", "OIHW", "NCHW"))
        y = y + b.reshape(1, -1, 1, 1)
        y = jnp.maximum(y, 0.0)
        mean = jnp.mean(y, axis=(0, 2, 3), keepdims=True)
        var = jnp.mean((y - mean) ** 2, axis=(0, 2, 3), keepdims=True)
        x = ((y - mean) * lax.rsqrt(var + eps) * g.reshape(1, -1, 1, 1)
             + bt.reshape(1, -1, 1, 1))
    return x


# ---------------------------------- main ------------------------------------ #
if __name__ == "__main__":
    # conv_params[i] = (in_ch, out_ch, kernel, stride, padding)
    conv_params = [
        (3, 8, 3, 1, 1),
        (8, 16, 3, 2, 1),
        (16, 16, 3, 1, 1),
        (16, 32, 3, 2, 1),
    ]

    key = jax.random.PRNGKey(0)
    params = []
    for (cin, cout, k, _, _) in conv_params:
        key, kw_, kb_ = jax.random.split(key, 3)
        w = jax.random.normal(kw_, (cout, cin, k, k), dtype=jnp.float32) * 0.1
        b = jax.random.normal(kb_, (cout,), dtype=jnp.float32) * 0.1
        gamma = jnp.ones((cout,), jnp.float32)   # PyTorch BN default init
        beta = jnp.zeros((cout,), jnp.float32)
        params.append((w, b, gamma, beta))

    key, kx = jax.random.split(key)
    x = jax.random.normal(kx, (2, 3, 16, 16), dtype=jnp.float32)      # NCHW input

    forward = make_cnn_forward(conv_params, batch=2, height=16, width=16)
    out = jax.block_until_ready(forward(x, params))

    ref = jax.block_until_ready(reference_forward(x, params, conv_params))
    np.testing.assert_allclose(np.asarray(out), np.asarray(ref),
                               rtol=1e-2, atol=1e-2)

    assert out.shape == (2, 32, 4, 4), out.shape
    print("KERNEL_OK")
</pallas_src>

<mosaic_0001>
module attributes {stable_mosaic.version = 11 : i64} {
  func.func @kernel(%arg0: i32, %arg1: memref<512x32xf32, #tpu.memory_space<vmem>>, %arg2: memref<32x8xf32, #tpu.memory_space<vmem>>, %arg3: memref<3x8xf32, #tpu.memory_space<vmem>>, %arg4: memref<72x16xf32, #tpu.memory_space<vmem>>, %arg5: memref<3x16xf32, #tpu.memory_space<vmem>>, %arg6: memref<144x16xf32, #tpu.memory_space<vmem>>, %arg7: memref<3x16xf32, #tpu.memory_space<vmem>>, %arg8: memref<144x32xf32, #tpu.memory_space<vmem>>, %arg9: memref<3x32xf32, #tpu.memory_space<vmem>>, %arg10: memref<64x32xf32, #tpu.memory_space<vmem>>, %arg11: memref<2x18x9x8xf32, #tpu.memory_space<vmem>>, %arg12: memref<2x18x9x8xf32, #tpu.memory_space<vmem>>, %arg13: memref<2x10x10x16xf32, #tpu.memory_space<vmem>>, %arg14: memref<2x10x10x16xf32, #tpu.memory_space<vmem>>, %arg15: memref<128x144xf32, #tpu.memory_space<vmem>>) attributes {dimension_semantics = [#tpu.dimension_semantics<arbitrary>], iteration_bounds = array<i64: 1>, scalar_prefetch = 0 : i64, scratch_operands = 5 : i64, tpu.core_type = #tpu.core_type<tc>, window_params = [{pipeline_mode = #tpu.pipeline_mode<synchronous>, transform_indices = @transform_0, window_bounds = array<i64: 512, 32>}, {pipeline_mode = #tpu.pipeline_mode<synchronous>, transform_indices = @transform_1, window_bounds = array<i64: 32, 8>}, {pipeline_mode = #tpu.pipeline_mode<synchronous>, transform_indices = @transform_2, window_bounds = array<i64: 3, 8>}, {pipeline_mode = #tpu.pipeline_mode<synchronous>, transform_indices = @transform_3, window_bounds = array<i64: 72, 16>}, {pipeline_mode = #tpu.pipeline_mode<synchronous>, transform_indices = @transform_4, window_bounds = array<i64: 3, 16>}, {pipeline_mode = #tpu.pipeline_mode<synchronous>, transform_indices = @transform_5, window_bounds = array<i64: 144, 16>}, {pipeline_mode = #tpu.pipeline_mode<synchronous>, transform_indices = @transform_6, window_bounds = array<i64: 3, 16>}, {pipeline_mode = #tpu.pipeline_mode<synchronous>, transform_indices = @transform_7, window_bounds = array<i64: 144, 32>}, {pipeline_mode = #tpu.pipeline_mode<synchronous>, transform_indices = @transform_8, window_bounds = array<i64: 3, 32>}, {pipeline_mode = #tpu.pipeline_mode<synchronous>, transform_indices = @transform_9, window_bounds = array<i64: 64, 32>}]} {
    %c0 = arith.constant 0 : index
    %c0_0 = arith.constant 0 : index
    %0 = vector.load %arg1[%c0, %c0_0] : memref<512x32xf32, #tpu.memory_space<vmem>>, vector<512x32xf32>
    %c0_1 = arith.constant 0 : index
    %c0_2 = arith.constant 0 : index
    %1 = vector.load %arg2[%c0_1, %c0_2] : memref<32x8xf32, #tpu.memory_space<vmem>>, vector<32x8xf32>
    %cst = arith.constant dense<0.000000e+00> : vector<512x8xf32>
    %2 = tpu.matmul %0, %1, %cst {dimension_numbers = #tpu.dot_dimension_numbers<[1], [0], [0], [1], [0, 0, 1, 1], [], []>} : vector<512x32xf32>, vector<32x8xf32>, vector<512x8xf32> -> vector<512x8xf32>
    %c0_3 = arith.constant 0 : index
    %c0_4 = arith.constant 0 : index
    %3 = vector.load %arg3[%c0_3, %c0_4] : memref<3x8xf32, #tpu.memory_space<vmem>>, vector<1x8xf32>
    %c1 = arith.constant 1 : index
    %c0_5 = arith.constant 0 : index
    %4 = vector.load %arg3[%c1, %c0_5] : memref<3x8xf32, #tpu.memory_space<vmem>>, vector<1x8xf32>
    %c2 = arith.constant 2 : index
    %c0_6 = arith.constant 0 : index
    %5 = vector.load %arg3[%c2, %c0_6] : memref<3x8xf32, #tpu.memory_space<vmem>>, vector<1x8xf32>
    %6 = vector.broadcast %3 : vector<1x8xf32> to vector<512x8xf32>
    %7 = arith.addf %2, %6 : vector<512x8xf32>
    %cst_7 = arith.constant 0.000000e+00 : f32
    %8 = vector.broadcast %cst_7 : f32 to vector<512x8xf32>
    %9 = arith.maximumf %7, %8 : vector<512x8xf32>
    %cst_8 = arith.constant dense<0.000000e+00> : vector<8xf32>
    %10 = vector.multi_reduction <add>, %9, %cst_8 [0] : vector<512x8xf32> to vector<8xf32>
    %11 = vector.shape_cast %10 : vector<8xf32> to vector<1x8xf32>
    %cst_9 = arith.constant 0.001953125 : f32
    %12 = vector.broadcast %cst_9 : f32 to vector<1x8xf32>
    %13 = arith.mulf %11, %12 : vector<1x8xf32>
    %14 = vector.broadcast %13 : vector<1x8xf32> to vector<512x8xf32>
    %15 = arith.subf %9, %14 : vector<512x8xf32>
    %16 = arith.mulf %15, %15 : vector<512x8xf32>
    %cst_10 = arith.constant dense<0.000000e+00> : vector<8xf32>
    %17 = vector.multi_reduction <add>, %16, %cst_10 [0] : vector<512x8xf32> to vector<8xf32>
    %18 = vector.shape_cast %17 : vector<8xf32> to vector<1x8xf32>
    %cst_11 = arith.constant 0.001953125 : f32
    %19 = vector.broadcast %cst_11 : f32 to vector<1x8xf32>
    %20 = arith.mulf %18, %19 : vector<1x8xf32>
    %cst_12 = arith.constant 9.99999974E-6 : f32
    %21 = vector.broadcast %cst_12 : f32 to vector<1x8xf32>
    %22 = arith.addf %20, %21 : vector<1x8xf32>
    %23 = math.rsqrt %22 : vector<1x8xf32>
    %24 = arith.mulf %4, %23 : vector<1x8xf32>
    %25 = vector.broadcast %24 : vector<1x8xf32> to vector<512x8xf32>
    %26 = arith.mulf %15, %25 : vector<512x8xf32>
    %27 = vector.broadcast %5 : vector<1x8xf32> to vector<512x8xf32>
    %28 = arith.addf %26, %27 : vector<512x8xf32>
    %cst_13 = arith.constant 0.000000e+00 : f32
    %29 = vector.broadcast %cst_13 : f32 to vector<2x18x9x8xf32>
    %c0_14 = arith.constant 0 : index
    %c0_15 = arith.constant 0 : index
    %c0_16 = arith.constant 0 : index
    %c0_17 = arith.constant 0 : index
    %30 = vector.load %arg11[%c0_14, %c0_15, %c0_16, %c0_17] : memref<2x18x9x8xf32, #tpu.memory_space<vmem>>, vector<2x18x9x8xf32>
    tpu.vector_store %arg11[%c0_14, %c0_15, %c0_16, %c0_17], %29 {strides = array<i32>} : memref<2x18x9x8xf32, #tpu.memory_space<vmem>>, vector<2x18x9x8xf32>,
    %cst_18 = arith.constant 0.000000e+00 : f32
    %31 = vector.broadcast %cst_18 : f32 to vector<2x18x9x8xf32>
    %c0_19 = arith.constant 0 : index
    %c0_20 = arith.constant 0 : index
    %c0_21 = arith.constant 0 : index
    %c0_22 = arith.constant 0 : index
    %32 = vector.load %arg12[%c0_19, %c0_20, %c0_21, %c0_22] : memref<2x18x9x8xf32, #tpu.memory_space<vmem>>, vector<2x18x9x8xf32>
    tpu.vector_store %arg12[%c0_19, %c0_20, %c0_21, %c0_22], %31 {strides = array<i32>} : memref<2x18x9x8xf32, #tpu.memory_space<vmem>>, vector<2x18x9x8xf32>,
    %33 = vector.shape_cast %28 : vector<512x8xf32> to vector<2x16x2x8x8xf32>
    %34 = vector.extract_strided_slice %33 {offsets = [0, 0, 0, 0, 0], sizes = [2, 16, 1, 8, 8], strides = [1, 1, 1, 1, 1]} : vector<2x16x2x8x8xf32> to vector<2x16x1x8x8xf32>
    %35 = vector.shape_cast %34 : vector<2x16x1x8x8xf32> to vector<2x16x8x8xf32>
    %c0_23 = arith.constant 0 : index
    %c1_24 = arith.constant 1 : index
    %c0_25 = arith.constant 0 : index
    %c0_26 = arith.constant 0 : index
    %36 = vector.load %arg12[%c0_23, %c1_24, %c0_25, %c0_26] : memref<2x18x9x8xf32, #tpu.memory_space<vmem>>, vector<2x16x8x8xf32>
    tpu.vector_store %arg12[%c0_23, %c1_24, %c0_25, %c0_26], %35 {strides = array<i32>} : memref<2x18x9x8xf32, #tpu.memory_space<vmem>>, vector<2x16x8x8xf32>,
    %37 = vector.extract_strided_slice %33 {offsets = [0, 0, 1, 0, 0], sizes = [2, 16, 1, 8, 8], strides = [1, 1, 1, 1, 1]} : vector<2x16x2x8x8xf32> to vector<2x16x1x8x8xf32>
    %38 = vector.shape_cast %37 : vector<2x16x1x8x8xf32> to vector<2x16x8x8xf32>
    %c0_27 = arith.constant 0 : index
    %c1_28 = arith.constant 1 : index
    %c1_29 = arith.constant 1 : index
    %c0_30 = arith.constant 0 : index
    %39 = vector.load %arg11[%c0_27, %c1_28, %c1_29, %c0_30] : memref<2x18x9x8xf32, #tpu.memory_space<vmem>>, vector<2x16x8x8xf32>
    tpu.vector_store %arg11[%c0_27, %c1_28, %c1_29, %c0_30], %38 {strides = array<i32>} : memref<2x18x9x8xf32, #tpu.memory_space<vmem>>, vector<2x16x8x8xf32>,
    %c0_31 = arith.constant 0 : index
    %c0_32 = arith.constant 0 : index
    %c0_33 = arith.constant 0 : index
    %c0_34 = arith.constant 0 : index
    %40 = vector.load %arg11[%c0_31, %c0_32, %c0_33, %c0_34] : memref<2x18x9x8xf32, #tpu.memory_space<vmem>>, vector<2x16x8x8xf32>
    %41 = vector.shape_cast %40 : vector<2x16x8x8xf32> to vector<16x2x8x8xf32>
    %42 = vector.extract_strided_slice %41 {offsets = [0, 0, 0, 0], sizes = [16, 1, 8, 8], strides = [1, 1, 1, 1]} : vector<16x2x8x8xf32> to vector<16x1x8x8xf32>
    %43 = vector.shape_cast %42 : vector<16x1x8x8xf32> to vector<16x8x8xf32>
    %44 = vector.shape_cast %43 : vector<16x8x8xf32> to vector<128x8xf32>
    %c0_35 = arith.constant 0 : index
    %c0_36 = arith.constant 0 : index
    %45 = vector.load %arg15[%c0_35, %c0_36] : memref<128x144xf32, #tpu.memory_space<vmem>>, vector<128x8xf32>
    tpu.vector_store %arg15[%c0_35, %c0_36], %44 {strides = array<i32>} : memref<128x144xf32, #tpu.memory_space<vmem>>, vector<128x8xf32>,
    %c0_37 = arith.constant 0 : index
    %c0_38 = arith.constant 0 : index
    %c0_39 = arith.constant 0 : index
    %c0_40 = arith.constant 0 : index
    %46 = vector.load %arg12[%c0_37, %c0_38, %c0_39, %c0_40] : memref<2x18x9x8xf32, #tpu.memory_space<vmem>>, vector<2x16x8x8xf32>
    %47 = vector.shape_cast %46 : vector<2x16x8x8xf32> to vector<16x2x8x8xf32>
    %48 = vector.extract_strided_slice %47 {offsets = [0, 0, 0, 0], sizes = [16, 1, 8, 8], strides = [1, 1, 1, 1]} : vector<16x2x8x8xf32> to vector<16x1x8x8xf32>
    %49 = vector.shape_cast %48 : vector<16x1x8x8xf32> to vector<16x8x8xf32>
    %50 = vector.shape_cast %49 : vector<16x8x8xf32> to vector<128x8xf32>
    %c0_41 = arith.constant 0 : index
    %c8 = arith.constant 8 : index
    %51 = vector.load %arg15[%c0_41, %c8] : memref<128x144xf32, #tpu.memory_space<vmem>>, vector<128x8xf32>
    tpu.vector_store %arg15[%c0_41, %c8], %50 {strides = array<i32>} : memref<128x144xf32, #tpu.memory_space<vmem>>, vector<128x8xf32>,
    %c0_42 = arith.constant 0 : index
    %c0_43 = arith.constant 0 : index
    %c1_44 = arith.constant 1 : index
    %c0_45 = arith.constant 0 : index
    %52 = vector.load %arg11[%c0_42, %c0_43, %c1_44, %c0_45] : memref<2x18x9x8xf32, #tpu.memory_space<vmem>>, vector<2x16x8x8xf32>
    %53 = vector.shape_cast %52 : vector<2x16x8x8xf32> to vector<16x2x8x8xf32>
    %54 = vector.extract_strided_slice %53 {offsets = [0, 0, 0, 0], sizes = [16, 1, 8, 8], strides = [1, 1, 1, 1]} : vector<16x2x8x8xf32> to vector<16x1x8x8xf32>
    %55 = vector.shape_cast %54 : vector<16x1x8x8xf32> to vector<16x8x8xf32>
    %56 = vector.shape_cast %55 : vector<16x8x8xf32> to vector<128x8xf32>
    %c0_46 = arith.constant 0 : index
    %c16 = arith.constant 16 : index
    %57 = vector.load %arg15[%c0_46, %c16] : memref<128x144xf32, #tpu.memory_space<vmem>>, vector<128x8xf32>
    tpu.vector_store %arg15[%c0_46, %c16], %56 {strides = array<i32>} : memref<128x144xf32, #tpu.memory_space<vmem>>, vector<128x8xf32>,
    %c0_47 = arith.constant 0 : index
    %c1_48 = arith.constant 1 : index
    %c0_49 = arith.constant 0 : index
    %c0_50 = arith.constant 0 : index
    %58 = vector.load %arg11[%c0_47, %c1_48, %c0_49, %c0_50] : memref<2x18x9x8xf32, #tpu.memory_space<vmem>>, vector<2x16x8x8xf32>
    %59 = vector.shape_cast %58 : vector<2x16x8x8xf32> to vector<16x2x8x8xf32>
    %60 = vector.extract_strided_slice %59 {offsets = [0, 0, 0, 0], sizes = [16, 1, 8, 8], strides = [1, 1, 1, 1]} : vector<16x2x8x8xf32> to vector<16x1x8x8xf32>
    %61 = vector.shape_cast %60 : vector<16x1x8x8xf32> to vector<16x8x8xf32>
    %62 = vector.shape_cast %61 : vector<16x8x8xf32> to vector<128x8xf32>
    %c0_51 = arith.constant 0 : index
    %c24 = arith.constant 24 : index
    %63 = vector.load %arg15[%c0_51, %c24] : memref<128x144xf32, #tpu.memory_space<vmem>>, vector<128x8xf32>
    tpu.vector_store %arg15[%c0_51, %c24], %62 {strides = array<i32>} : memref<128x144xf32, #tpu.memory_space<vmem>>, vector<128x8xf32>,
    %c0_52 = arith.constant 0 : index
    %c1_53 = arith.constant 1 : index
    %c0_54 = arith.constant 0 : index
    %c0_55 = arith.constant 0 : index
    %64 = vector.load %arg12[%c0_52, %c1_53, %c0_54, %c0_55] : memref<2x18x9x8xf32, #tpu.memory_space<vmem>>, vector<2x16x8x8xf32>
    %65 = vector.shape_cast %64 : vector<2x16x8x8xf32> to vector<16x2x8x8xf32>
    %66 = vector.extract_strided_slice %65 {offsets = [0, 0, 0, 0], sizes = [16, 1, 8, 8], strides = [1, 1, 1, 1]} : vector<16x2x8x8xf32> to vector<16x1x8x8xf32>
    %67 = vector.shape_cast %66 : vector<16x1x8x8xf32> to vector<16x8x8xf32>
    %68 = vector.shape_cast %67 : vector<16x8x8xf32> to vector<128x8xf32>
    %c0_56 = arith.constant 0 : index
    %c32 = arith.constant 32 : index
    %69 = vector.load %arg15[%c0_56, %c32] : memref<128x144xf32, #tpu.memory_space<vmem>>, vector<128x8xf32>
    tpu.vector_store %arg15[%c0_56, %c32], %68 {strides = array<i32>} : memref<128x144xf32, #tpu.memory_space<vmem>>, vector<128x8xf32>,
    %c0_57 = arith.constant 0 : index
    %c1_58 = arith.constant 1 : index
    %c1_59 = arith.constant 1 : index
    %c0_60 = arith.constant 0 : index
    %70 = vector.load %arg11[%c0_57, %c1_58, %c1_59, %c0_60] : memref<2x18x9x8xf32, #tpu.memory_space<vmem>>, vector<2x16x8x8xf32>
    %71 = vector.shape_cast %70 : vector<2x16x8x8xf32> to vector<16x2x8x8xf32>
    %72 = vector.extract_strided_slice %71 {offsets = [0, 0, 0, 0], sizes = [16, 1, 8, 8], strides = [1, 1, 1, 1]} : vector<16x2x8x8xf32> to vector<16x1x8x8xf32>
    %73 = vector.shape_cast %72 : vector<16x1x8x8xf32> to vector<16x8x8xf32>
    %74 = vector.shape_cast %73 : vector<16x8x8xf32> to vector<128x8xf32>
    %c0_61 = arith.constant 0 : index
    %c40 = arith.constant 40 : index
    %75 = vector.load %arg15[%c0_61, %c40] : memref<128x144xf32, #tpu.memory_space<vmem>>, vector<128x8xf32>
    tpu.vector_store %arg15[%c0_61, %c40], %74 {strides = array<i32>} : memref<128x144xf32, #tpu.memory_space<vmem>>, vector<128x8xf32>,
    %c0_62 = arith.constant 0 : index
    %c2_63 = arith.constant 2 : index
    %c0_64 = arith.constant 0 : index
    %c0_65 = arith.constant 0 : index
    %76 = vector.load %arg11[%c0_62, %c2_63, %c0_64, %c0_65] : memref<2x18x9x8xf32, #tpu.memory_space<vmem>>, vector<2x16x8x8xf32>
    %77 = vector.shape_cast %76 : vector<2x16x8x8xf32> to vector<16x2x8x8xf32>
    %78 = vector.extract_strided_slice %77 {offsets = [0, 0, 0, 0], sizes = [16, 1, 8, 8], strides = [1, 1, 1, 1]} : vector<16x2x8x8xf32> to vector<16x1x8x8xf32>
    %79 = vector.shape_cast %78 : vector<16x1x8x8xf32> to vector<16x8x8xf32>
    %80 = vector.shape_cast %79 : vector<16x8x8xf32> to vector<128x8xf32>
    %c0_66 = arith.constant 0 : index
    %c48 = arith.constant 48 : index
    %81 = vector.load %arg15[%c0_66, %c48] : memref<128x144xf32, #tpu.memory_space<vmem>>, vector<128x8xf32>
    tpu.vector_store %arg15[%c0_66, %c48], %80 {strides = array<i32>} : memref<128x144xf32, #tpu.memory_space<vmem>>, vector<128x8xf32>,
    %c0_67 = arith.constant 0 : index
    %c2_68 = arith.constant 2 : index
    %c0_69 = arith.constant 0 : index
    %c0_70 = arith.constant 0 : index
    %82 = vector.load %arg12[%c0_67, %c2_68, %c0_69, %c0_70] : memref<2x18x9x8xf32, #tpu.memory_space<vmem>>, vector<2x16x8x8xf32>
    %83 = vector.shape_cast %82 : vector<2x16x8x8xf32> to vector<16x2x8x8xf32>
    %84 = vector.extract_strided_slice %83 {offsets = [0, 0, 0, 0], sizes = [16, 1, 8, 8], strides = [1, 1, 1, 1]} : vector<16x2x8x8xf32> to vector<16x1x8x8xf32>
    %85 = vector.shape_cast %84 : vector<16x1x8x8xf32> to vector<16x8x8xf32>
    %86 = vector.shape_cast %85 : vector<16x8x8xf32> to vector<128x8xf32>
    %c0_71 = arith.constant 0 : index
    %c56 = arith.constant 56 : index
    %87 = vector.load %arg15[%c0_71, %c56] : memref<128x144xf32, #tpu.memory_space<vmem>>, vector<128x8xf32>
    tpu.vector_store %arg15[%c0_71, %c56], %86 {strides = array<i32>} : memref<128x144xf32, #tpu.memory_space<vmem>>, vector<128x8xf32>,
    %c0_72 = arith.constant 0 : index
    %c2_73 = arith.constant 2 : index
    %c1_74 = arith.constant 1 : index
    %c0_75 = arith.constant 0 : index
    %88 = vector.load %arg11[%c0_72, %c2_73, %c1_74, %c0_75] : memref<2x18x9x8xf32, #tpu.memory_space<vmem>>, vector<2x16x8x8xf32>
    %89 = vector.shape_cast %88 : vector<2x16x8x8xf32> to vector<16x2x8x8xf32>
    %90 = vector.extract_strided_slice %89 {offsets = [0, 0, 0, 0], sizes = [16, 1, 8, 8], strides = [1, 1, 1, 1]} : vector<16x2x8x8xf32> to vector<16x1x8x8xf32>
    %91 = vector.shape_cast %90 : vector<16x1x8x8xf32> to vector<16x8x8xf32>
    %92 = vector.shape_cast %91 : vector<16x8x8xf32> to vector<128x8xf32>
    %c0_76 = arith.constant 0 : index
    %c64 = arith.constant 64 : index
    %93 = vector.load %arg15[%c0_76, %c64] : memref<128x144xf32, #tpu.memory_space<vmem>>, vector<128x8xf32>
    tpu.vector_store %arg15[%c0_76, %c64], %92 {strides = array<i32>} : memref<128x144xf32, #tpu.memory_space<vmem>>, vector<128x8xf32>,
    %c0_77 = arith.constant 0 : index
    %c0_78 = arith.constant 0 : index
    %94 = vector.load %arg15[%c0_77, %c0_78] : memref<128x144xf32, #tpu.memory_space<vmem>>, vector<128x72xf32>
    %c0_79 = arith.constant 0 : index
    %c0_80 = arith.constant 0 : index
    %95 = vector.load %arg4[%c0_79, %c0_80] : memref<72x16xf32, #tpu.memory_space<vmem>>, vector<72x16xf32>
    %cst_81 = arith.constant dense<0.000000e+00> : vector<128x16xf32>
    %96 = tpu.matmul %94, %95, %cst_81 {dimension_numbers = #tpu.dot_dimension_numbers<[1], [0], [0], [1], [0, 0, 1, 1], [], []>} : vector<128x72xf32>, vector<72x16xf32>, vector<128x16xf32> -> vector<128x16xf32>
    %c0_82 = arith.constant 0 : index
    %c0_83 = arith.constant 0 : index
    %97 = vector.load %arg5[%c0_82, %c0_83] : memref<3x16xf32, #tpu.memory_space<vmem>>, vector<1x16xf32>
    %c1_84 = arith.constant 1 : index
    %c0_85 = arith.constant 0 : index
    %98 = vector.load %arg5[%c1_84, %c0_85] : memref<3x16xf32, #tpu.memory_space<vmem>>, vector<1x16xf32>
    %c2_86 = arith.constant 2 : index
    %c0_87 = arith.constant 0 : index
    %99 = vector.load %arg5[%c2_86, %c0_87] : memref<3x16xf32, #tpu.memory_space<vmem>>, vector<1x16xf32>
    %100 = vector.broadcast %97 : vector<1x16xf32> to vector<128x16xf32>
    %101 = arith.addf %96, %100 : vector<128x16xf32>
    %cst_88 = arith.constant 0.000000e+00 : f32
    %102 = vector.broadcast %cst_88 : f32 to vector<128x16xf32>
    %103 = arith.maximumf %101, %102 : vector<128x16xf32>
    %cst_89 = arith.constant dense<0.000000e+00> : vector<16xf32>
    %104 = vector.multi_reduction <add>, %103, %cst_89 [0] : vector<128x16xf32> to vector<16xf32>
    %105 = vector.shape_cast %104 : vector<16xf32> to vector<1x16xf32>
    %cst_90 = arith.constant 7.812500e-03 : f32
    %106 = vector.broadcast %cst_90 : f32 to vector<1x16xf32>
    %107 = arith.mulf %105, %106 : vector<1x16xf32>
    %108 = vector.broadcast %107 : vector<1x16xf32> to vector<128x16xf32>
    %109 = arith.subf %103, %108 : vector<128x16xf32>
    %110 = arith.mulf %109, %109 : vector<128x16xf32>
    %cst_91 = arith.constant dense<0.000000e+00> : vector<16xf32>
    %111 = vector.multi_reduction <add>, %110, %cst_91 [0] : vector<128x16xf32> to vector<16xf32>
    %112 = vector.shape_cast %111 : vector<16xf32> to vector<1x16xf32>
    %cst_92 = arith.constant 7.812500e-03 : f32
    %113 = vector.broadcast %cst_92 : f32 to vector<1x16xf32>
    %114 = arith.mulf %112, %113 : vector<1x16xf32>
    %cst_93 = arith.constant 9.99999974E-6 : f32
    %115 = vector.broadcast %cst_93 : f32 to vector<1x16xf32>
    %116 = arith.addf %114, %115 : vector<1x16xf32>
    %117 = math.rsqrt %116 : vector<1x16xf32>
    %118 = arith.mulf %98, %117 : vector<1x16xf32>
    %119 = vector.broadcast %118 : vector<1x16xf32> to vector<128x16xf32>
    %120 = arith.mulf %109, %119 : vector<128x16xf32>
    %121 = vector.broadcast %99 : vector<1x16xf32> to vector<128x16xf32>
    %122 = arith.addf %120, %121 : vector<128x16xf32>
    %cst_94 = arith.constant 0.000000e+00 : f32
    %123 = vector.broadcast %cst_94 : f32 to vector<2x10x10x16xf32>
    %c0_95 = arith.constant 0 : index
    %c0_96 = arith.constant 0 : index
    %c0_97 = arith.constant 0 : index
    %c0_98 = arith.constant 0 : index
    %124 = vector.load %arg13[%c0_95, %c0_96, %c0_97, %c0_98] : memref<2x10x10x16xf32, #tpu.memory_space<vmem>>, vector<2x10x10x16xf32>
    tpu.vector_store %arg13[%c0_95, %c0_96, %c0_97, %c0_98], %123 {strides = array<i32>} : memref<2x10x10x16xf32, #tpu.memory_space<vmem>>, vector<2x10x10x16xf32>,
    %125 = vector.shape_cast %122 : vector<128x16xf32> to vector<2x8x8x16xf32>
    %c0_99 = arith.constant 0 : index
    %c1_100 = arith.constant 1 : index
    %c1_101 = arith.constant 1 : index
    %c0_102 = arith.constant 0 : index
    %126 = vector.load %arg13[%c0_99, %c1_100, %c1_101, %c0_102] : memref<2x10x10x16xf32, #tpu.memory_space<vmem>>, vector<2x8x8x16xf32>
    tpu.vector_store %arg13[%c0_99, %c1_100, %c1_101, %c0_102], %125 {strides = array<i32>} : memref<2x10x10x16xf32, #tpu.memory_space<vmem>>, vector<2x8x8x16xf32>,
    %c0_103 = arith.constant 0 : index
    %c0_104 = arith.constant 0 : index
    %c0_105 = arith.constant 0 : index
    %c0_106 = arith.constant 0 : index
    %127 = vector.load %arg13[%c0_103, %c0_104, %c0_105, %c0_106] : memref<2x10x10x16xf32, #tpu.memory_space<vmem>>, vector<2x8x8x16xf32>
    %128 = vector.shape_cast %127 : vector<2x8x8x16xf32> to vector<128x16xf32>
    %c0_107 = arith.constant 0 : index
    %c0_108 = arith.constant 0 : index
    %129 = vector.load %arg15[%c0_107, %c0_108] : memref<128x144xf32, #tpu.memory_space<vmem>>, vector<128x16xf32>
    tpu.vector_store %arg15[%c0_107, %c0_108], %128 {strides = array<i32>} : memref<128x144xf32, #tpu.memory_space<vmem>>, vector<128x16xf32>,
    %c0_109 = arith.constant 0 : index
    %c0_110 = arith.constant 0 : index
    %c1_111 = arith.constant 1 : index
    %c0_112 = arith.constant 0 : index
    %130 = vector.load %arg13[%c0_109, %c0_110, %c1_111, %c0_112] : memref<2x10x10x16xf32, #tpu.memory_space<vmem>>, vector<2x8x8x16xf32>
    %131 = vector.shape_cast %130 : vector<2x8x8x16xf32> to vector<128x16xf32>
    %c0_113 = arith.constant 0 : index
    %c16_114 = arith.constant 16 : index
    %132 = vector.load %arg15[%c0_113, %c16_114] : memref<128x144xf32, #tpu.memory_space<vmem>>, vector<128x16xf32>
    tpu.vector_store %arg15[%c0_113, %c16_114], %131 {strides = array<i32>} : memref<128x144xf32, #tpu.memory_space<vmem>>, vector<128x16xf32>,
    %c0_115 = arith.constant 0 : index
    %c0_116 = arith.constant 0 : index
    %c2_117 = arith.constant 2 : index
    %c0_118 = arith.constant 0 : index
    %133 = vector.load %arg13[%c0_115, %c0_116, %c2_117, %c0_118] : memref<2x10x10x16xf32, #tpu.memory_space<vmem>>, vector<2x8x8x16xf32>
    %134 = vector.shape_cast %133 : vector<2x8x8x16xf32> to vector<128x16xf32>
    %c0_119 = arith.constant 0 : index
    %c32_120 = arith.constant 32 : index
    %135 = vector.load %arg15[%c0_119, %c32_120] : memref<128x144xf32, #tpu.memory_space<vmem>>, vector<128x16xf32>
    tpu.vector_store %arg15[%c0_119, %c32_120], %134 {strides = array<i32>} : memref<128x144xf32, #tpu.memory_space<vmem>>, vector<128x16xf32>,
    %c0_121 = arith.constant 0 : index
    %c1_122 = arith.constant 1 : index
    %c0_123 = arith.constant 0 : index
    %c0_124 = arith.constant 0 : index
    %136 = vector.load %arg13[%c0_121, %c1_122, %c0_123, %c0_124] : memref<2x10x10x16xf32, #tpu.memory_space<vmem>>, vector<2x8x8x16xf32>
    %137 = vector.shape_cast %136 : vector<2x8x8x16xf32> to vector<128x16xf32>
    %c0_125 = arith.constant 0 : index
    %c48_126 = arith.constant 48 : index
    %138 = vector.load %arg15[%c0_125, %c48_126] : memref<128x144xf32, #tpu.memory_space<vmem>>, vector<128x16xf32>
    tpu.vector_store %arg15[%c0_125, %c48_126], %137 {strides = array<i32>} : memref<128x144xf32, #tpu.memory_space<vmem>>, vector<128x16xf32>,
    %c0_127 = arith.constant 0 : index
    %c1_128 = arith.constant 1 : index
    %c1_129 = arith.constant 1 : index
    %c0_130 = arith.constant 0 : index
    %139 = vector.load %arg13[%c0_127, %c1_128, %c1_129, %c0_130] : memref<2x10x10x16xf32, #tpu.memory_space<vmem>>, vector<2x8x8x16xf32>
    %140 = vector.shape_cast %139 : vector<2x8x8x16xf32> to vector<128x16xf32>
    %c0_131 = arith.constant 0 : index
    %c64_132 = arith.constant 64 : index
    %141 = vector.load %arg15[%c0_131, %c64_132] : memref<128x144xf32, #tpu.memory_space<vmem>>, vector<128x16xf32>
    tpu.vector_store %arg15[%c0_131, %c64_132], %140 {strides = array<i32>} : memref<128x144xf32, #tpu.memory_space<vmem>>, vector<128x16xf32>,
    %c0_133 = arith.constant 0 : index
    %c1_134 = arith.constant 1 : index
    %c2_135 = arith.constant 2 : index
    %c0_136 = arith.constant 0 : index
    %142 = vector.load %arg13[%c0_133, %c1_134, %c2_135, %c0_136] : memref<2x10x10x16xf32, #tpu.memory_space<vmem>>, vector<2x8x8x16xf32>
    %143 = vector.shape_cast %142 : vector<2x8x8x16xf32> to vector<128x16xf32>
    %c0_137 = arith.constant 0 : index
    %c80 = arith.constant 80 : index
    %144 = vector.load %arg15[%c0_137, %c80] : memref<128x144xf32, #tpu.memory_space<vmem>>, vector<128x16xf32>
    tpu.vector_store %arg15[%c0_137, %c80], %143 {strides = array<i32>} : memref<128x144xf32, #tpu.memory_space<vmem>>, vector<128x16xf32>,
    %c0_138 = arith.constant 0 : index
    %c2_139 = arith.constant 2 : index
    %c0_140 = arith.constant 0 : index
    %c0_141 = arith.constant 0 : index
    %145 = vector.load %arg13[%c0_138, %c2_139, %c0_140, %c0_141] : memref<2x10x10x16xf32, #tpu.memory_space<vmem>>, vector<2x8x8x16xf32>
    %146 = vector.shape_cast %145 : vector<2x8x8x16xf32> to vector<128x16xf32>
    %c0_142 = arith.constant 0 : index
    %c96 = arith.constant 96 : index
    %147 = vector.load %arg15[%c0_142, %c96] : memref<128x144xf32, #tpu.memory_space<vmem>>, vector<128x16xf32>
    tpu.vector_store %arg15[%c0_142, %c96], %146 {strides = array<i32>} : memref<128x144xf32, #tpu.memory_space<vmem>>, vector<128x16xf32>,
    %c0_143 = arith.constant 0 : index
    %c2_144 = arith.constant 2 : index
    %c1_145 = arith.constant 1 : index
    %c0_146 = arith.constant 0 : index
    %148 = vector.load %arg13[%c0_143, %c2_144, %c1_145, %c0_146] : memref<2x10x10x16xf32, #tpu.memory_space<vmem>>, vector<2x8x8x16xf32>
    %149 = vector.shape_cast %148 : vector<2x8x8x16xf32> to vector<128x16xf32>
    %c0_147 = arith.constant 0 : index
    %c112 = arith.constant 112 : index
    %150 = vector.load %arg15[%c0_147, %c112] : memref<128x144xf32, #tpu.memory_space<vmem>>, vector<128x16xf32>
    tpu.vector_store %arg15[%c0_147, %c112], %149 {strides = array<i32>} : memref<128x144xf32, #tpu.memory_space<vmem>>, vector<128x16xf32>,
    %c0_148 = arith.constant 0 : index
    %c2_149 = arith.constant 2 : index
    %c2_150 = arith.constant 2 : index
    %c0_151 = arith.constant 0 : index
    %151 = vector.load %arg13[%c0_148, %c2_149, %c2_150, %c0_151] : memref<2x10x10x16xf32, #tpu.memory_space<vmem>>, vector<2x8x8x16xf32>
    %152 = vector.shape_cast %151 : vector<2x8x8x16xf32> to vector<128x16xf32>
    %c0_152 = arith.constant 0 : index
    %c128 = arith.constant 128 : index
    %153 = vector.load %arg15[%c0_152, %c128] : memref<128x144xf32, #tpu.memory_space<vmem>>, vector<128x16xf32>
    tpu.vector_store %arg15[%c0_152, %c128], %152 {strides = array<i32>} : memref<128x144xf32, #tpu.memory_space<vmem>>, vector<128x16xf32>,
    %c0_153 = arith.constant 0 : index
    %c0_154 = arith.constant 0 : index
    %154 = vector.load %arg15[%c0_153, %c0_154] : memref<128x144xf32, #tpu.memory_space<vmem>>, vector<128x144xf32>
    %c0_155 = arith.constant 0 : index
    %c0_156 = arith.constant 0 : index
    %155 = vector.load %arg6[%c0_155, %c0_156] : memref<144x16xf32, #tpu.memory_space<vmem>>, vector<144x16xf32>
    %cst_157 = arith.constant dense<0.000000e+00> : vector<128x16xf32>
    %156 = tpu.matmul %154, %155, %cst_157 {dimension_numbers = #tpu.dot_dimension_numbers<[1], [0], [0], [1], [0, 0, 1, 1], [], []>} : vector<128x144xf32>, vector<144x16xf32>, vector<128x16xf32> -> vector<128x16xf32>
    %c0_158 = arith.constant 0 : index
    %c0_159 = arith.constant 0 : index
    %157 = vector.load %arg7[%c0_158, %c0_159] : memref<3x16xf32, #tpu.memory_space<vmem>>, vector<1x16xf32>
    %c1_160 = arith.constant 1 : index
    %c0_161 = arith.constant 0 : index
    %158 = vector.load %arg7[%c1_160, %c0_161] : memref<3x16xf32, #tpu.memory_space<vmem>>, vector<1x16xf32>
    %c2_162 = arith.constant 2 : index
    %c0_163 = arith.constant 0 : index
    %159 = vector.load %arg7[%c2_162, %c0_163] : memref<3x16xf32, #tpu.memory_space<vmem>>, vector<1x16xf32>
    %160 = vector.broadcast %157 : vector<1x16xf32> to vector<128x16xf32>
    %161 = arith.addf %156, %160 : vector<128x16xf32>
    %cst_164 = arith.constant 0.000000e+00 : f32
    %162 = vector.broadcast %cst_164 : f32 to vector<128x16xf32>
    %163 = arith.maximumf %161, %162 : vector<128x16xf32>
    %cst_165 = arith.constant dense<0.000000e+00> : vector<16xf32>
    %164 = vector.multi_reduction <add>, %163, %cst_165 [0] : vector<128x16xf32> to vector<16xf32>
    %165 = vector.shape_cast %164 : vector<16xf32> to vector<1x16xf32>
    %cst_166 = arith.constant 7.812500e-03 : f32
    %166 = vector.broadcast %cst_166 : f32 to vector<1x16xf32>
    %167 = arith.mulf %165, %166 : vector<1x16xf32>
    %168 = vector.broadcast %167 : vector<1x16xf32> to vector<128x16xf32>
    %169 = arith.subf %163, %168 : vector<128x16xf32>
    %170 = arith.mulf %169, %169 : vector<128x16xf32>
    %cst_167 = arith.constant dense<0.000000e+00> : vector<16xf32>
    %171 = vector.multi_reduction <add>, %170, %cst_167 [0] : vector<128x16xf32> to vector<16xf32>
    %172 = vector.shape_cast %171 : vector<16xf32> to vector<1x16xf32>
    %cst_168 = arith.constant 7.812500e-03 : f32
    %173 = vector.broadcast %cst_168 : f32 to vector<1x16xf32>
    %174 = arith.mulf %172, %173 : vector<1x16xf32>
    %cst_169 = arith.constant 9.99999974E-6 : f32
    %175 = vector.broadcast %cst_169 : f32 to vector<1x16xf32>
    %176 = arith.addf %174, %175 : vector<1x16xf32>
    %177 = math.rsqrt %176 : vector<1x16xf32>
    %178 = arith.mulf %158, %177 : vector<1x16xf32>
    %179 = vector.broadcast %178 : vector<1x16xf32> to vector<128x16xf32>
    %180 = arith.mulf %169, %179 : vector<128x16xf32>
    %181 = vector.broadcast %159 : vector<1x16xf32> to vector<128x16xf32>
    %182 = arith.addf %180, %181 : vector<128x16xf32>
    %cst_170 = arith.constant 0.000000e+00 : f32
    %183 = vector.broadcast %cst_170 : f32 to vector<2x10x10x16xf32>
    %c0_171 = arith.constant 0 : index
    %c0_172 = arith.constant 0 : index
    %c0_173 = arith.constant 0 : index
    %c0_174 = arith.constant 0 : index
    %184 = vector.load %arg14[%c0_171, %c0_172, %c0_173, %c0_174] : memref<2x10x10x16xf32, #tpu.memory_space<vmem>>, vector<2x10x10x16xf32>
    tpu.vector_store %arg14[%c0_171, %c0_172, %c0_173, %c0_174], %183 {strides = array<i32>} : memref<2x10x10x16xf32, #tpu.memory_space<vmem>>, vector<2x10x10x16xf32>,
    %185 = vector.shape_cast %182 : vector<128x16xf32> to vector<2x8x8x16xf32>
    %c0_175 = arith.constant 0 : index
    %c1_176 = arith.constant 1 : index
    %c1_177 = arith.constant 1 : index
    %c0_178 = arith.constant 0 : index
    %186 = vector.load %arg14[%c0_175, %c1_176, %c1_177, %c0_178] : memref<2x10x10x16xf32, #tpu.memory_space<vmem>>, vector<2x8x8x16xf32>
    tpu.vector_store %arg14[%c0_175, %c1_176, %c1_177, %c0_178], %185 {strides = array<i32>} : memref<2x10x10x16xf32, #tpu.memory_space<vmem>>, vector<2x8x8x16xf32>,
    %c0_179 = arith.constant 0 : index
    %c0_180 = arith.constant 0 : index
    %c0_181 = arith.constant 0 : index
    %c0_182 = arith.constant 0 : index
    %187 = vector.load %arg14[%c0_179, %c0_180, %c0_181, %c0_182] : memref<2x10x10x16xf32, #tpu.memory_space<vmem>>, vector<2x8x8x16xf32>
    %188 = vector.shape_cast %187 : vector<2x8x8x16xf32> to vector<8x2x8x16xf32>
    %189 = vector.extract_strided_slice %188 {offsets = [0, 0, 0, 0], sizes = [8, 1, 8, 16], strides = [1, 1, 1, 1]} : vector<8x2x8x16xf32> to vector<8x1x8x16xf32>
    %190 = vector.shape_cast %189 : vector<8x1x8x16xf32> to vector<8x8x16xf32>
    %191 = vector.shape_cast %190 : vector<8x8x16xf32> to vector<64x16xf32>
    %c0_183 = arith.constant 0 : index
    %c0_184 = arith.constant 0 : index
    %192 = vector.load %arg15[%c0_183, %c0_184] : memref<128x144xf32, #tpu.memory_space<vmem>>, vector<64x16xf32>
    tpu.vector_store %arg15[%c0_183, %c0_184], %191 {strides = array<i32>} : memref<128x144xf32, #tpu.memory_space<vmem>>, vector<64x16xf32>,
    %c0_185 = arith.constant 0 : index
    %c0_186 = arith.constant 0 : index
    %c1_187 = arith.constant 1 : index
    %c0_188 = arith.constant 0 : index
    %193 = vector.load %arg14[%c0_185, %c0_186, %c1_187, %c0_188] : memref<2x10x10x16xf32, #tpu.memory_space<vmem>>, vector<2x8x8x16xf32>
    %194 = vector.shape_cast %193 : vector<2x8x8x16xf32> to vector<8x2x8x16xf32>
    %195 = vector.extract_strided_slice %194 {offsets = [0, 0, 0, 0], sizes = [8, 1, 8, 16], strides = [1, 1, 1, 1]} : vector<8x2x8x16xf32> to vector<8x1x8x16xf32>
    %196 = vector.shape_cast %195 : vector<8x1x8x16xf32> to vector<8x8x16xf32>
    %197 = vector.shape_cast %196 : vector<8x8x16xf32> to vector<64x16xf32>
    %c0_189 = arith.constant 0 : index
    %c16_190 = arith.constant 16 : index
    %198 = vector.load %arg15[%c0_189, %c16_190] : memref<128x144xf32, #tpu.memory_space<vmem>>, vector<64x16xf32>
    tpu.vector_store %arg15[%c0_189, %c16_190], %197 {strides = array<i32>} : memref<128x144xf32, #tpu.memory_space<vmem>>, vector<64x16xf32>,
    %c0_191 = arith.constant 0 : index
    %c0_192 = arith.constant 0 : index
    %c2_193 = arith.constant 2 : index
    %c0_194 = arith.constant 0 : index
    %199 = vector.load %arg14[%c0_191, %c0_192, %c2_193, %c0_194] : memref<2x10x10x16xf32, #tpu.memory_space<vmem>>, vector<2x8x8x16xf32>
    %200 = vector.shape_cast %199 : vector<2x8x8x16xf32> to vector<8x2x8x16xf32>
    %201 = vector.extract_strided_slice %200 {offsets = [0, 0, 0, 0], sizes = [8, 1, 8, 16], strides = [1, 1, 1, 1]} : vector<8x2x8x16xf32> to vector<8x1x8x16xf32>
    %202 = vector.shape_cast %201 : vector<8x1x8x16xf32> to vector<8x8x16xf32>
    %203 = vector.shape_cast %202 : vector<8x8x16xf32> to vector<64x16xf32>
    %c0_195 = arith.constant 0 : index
    %c32_196 = arith.constant 32 : index
    %204 = vector.load %arg15[%c0_195, %c32_196] : memref<128x144xf32, #tpu.memory_space<vmem>>, vector<64x16xf32>
    tpu.vector_store %arg15[%c0_195, %c32_196], %203 {strides = array<i32>} : memref<128x144xf32, #tpu.memory_space<vmem>>, vector<64x16xf32>,
    %c0_197 = arith.constant 0 : index
    %c1_198 = arith.constant 1 : index
    %c0_199 = arith.constant 0 : index
    %c0_200 = arith.constant 0 : index
    %205 = vector.load %arg14[%c0_197, %c1_198, %c0_199, %c0_200] : memref<2x10x10x16xf32, #tpu.memory_space<vmem>>, vector<2x8x8x16xf32>
    %206 = vector.shape_cast %205 : vector<2x8x8x16xf32> to vector<8x2x8x16xf32>
    %207 = vector.extract_strided_slice %206 {offsets = [0, 0, 0, 0], sizes = [8, 1, 8, 16], strides = [1, 1, 1, 1]} : vector<8x2x8x16xf32> to vector<8x1x8x16xf32>
    %208 = vector.shape_cast %207 : vector<8x1x8x16xf32> to vector<8x8x16xf32>
    %209 = vector.shape_cast %208 : vector<8x8x16xf32> to vector<64x16xf32>
    %c0_201 = arith.constant 0 : index
    %c48_202 = arith.constant 48 : index
    %210 = vector.load %arg15[%c0_201, %c48_202] : memref<128x144xf32, #tpu.memory_space<vmem>>, vector<64x16xf32>
    tpu.vector_store %arg15[%c0_201, %c48_202], %209 {strides = array<i32>} : memref<128x144xf32, #tpu.memory_space<vmem>>, vector<64x16xf32>,
    %c0_203 = arith.constant 0 : index
    %c1_204 = arith.constant 1 : index
    %c1_205 = arith.constant 1 : index
    %c0_206 = arith.constant 0 : index
    %211 = vector.load %arg14[%c0_203, %c1_204, %c1_205, %c0_206] : memref<2x10x10x16xf32, #tpu.memory_space<vmem>>, vector<2x8x8x16xf32>
    %212 = vector.shape_cast %211 : vector<2x8x8x16xf32> to vector<8x2x8x16xf32>
    %213 = vector.extract_strided_slice %212 {offsets = [0, 0, 0, 0], sizes = [8, 1, 8, 16], strides = [1, 1, 1, 1]} : vector<8x2x8x16xf32> to vector<8x1x8x16xf32>
    %214 = vector.shape_cast %213 : vector<8x1x8x16xf32> to vector<8x8x16xf32>
    %215 = vector.shape_cast %214 : vector<8x8x16xf32> to vector<64x16xf32>
    %c0_207 = arith.constant 0 : index
    %c64_208 = arith.constant 64 : index
    %216 = vector.load %arg15[%c0_207, %c64_208] : memref<128x144xf32, #tpu.memory_space<vmem>>, vector<64x16xf32>
    tpu.vector_store %arg15[%c0_207, %c64_208], %215 {strides = array<i32>} : memref<128x144xf32, #tpu.memory_space<vmem>>, vector<64x16xf32>,
    %c0_209 = arith.constant 0 : index
    %c1_210 = arith.constant 1 : index
    %c2_211 = arith.constant 2 : index
    %c0_212 = arith.constant 0 : index
    %217 = vector.load %arg14[%c0_209, %c1_210, %c2_211, %c0_212] : memref<2x10x10x16xf32, #tpu.memory_space<vmem>>, vector<2x8x8x16xf32>
    %218 = vector.shape_cast %217 : vector<2x8x8x16xf32> to vector<8x2x8x16xf32>
    %219 = vector.extract_strided_slice %218 {offsets = [0, 0, 0, 0], sizes = [8, 1, 8, 16], strides = [1, 1, 1, 1]} : vector<8x2x8x16xf32> to vector<8x1x8x16xf32>
    %220 = vector.shape_cast %219 : vector<8x1x8x16xf32> to vector<8x8x16xf32>
    %221 = vector.shape_cast %220 : vector<8x8x16xf32> to vector<64x16xf32>
    %c0_213 = arith.constant 0 : index
    %c80_214 = arith.constant 80 : index
    %222 = vector.load %arg15[%c0_213, %c80_214] : memref<128x144xf32, #tpu.memory_space<vmem>>, vector<64x16xf32>
    tpu.vector_store %arg15[%c0_213, %c80_214], %221 {strides = array<i32>} : memref<128x144xf32, #tpu.memory_space<vmem>>, vector<64x16xf32>,
    %c0_215 = arith.constant 0 : index
    %c2_216 = arith.constant 2 : index
    %c0_217 = arith.constant 0 : index
    %c0_218 = arith.constant 0 : index
    %223 = vector.load %arg14[%c0_215, %c2_216, %c0_217, %c0_218] : memref<2x10x10x16xf32, #tpu.memory_space<vmem>>, vector<2x8x8x16xf32>
    %224 = vector.shape_cast %223 : vector<2x8x8x16xf32> to vector<8x2x8x16xf32>
    %225 = vector.extract_strided_slice %224 {offsets = [0, 0, 0, 0], sizes = [8, 1, 8, 16], strides = [1, 1, 1, 1]} : vector<8x2x8x16xf32> to vector<8x1x8x16xf32>
    %226 = vector.shape_cast %225 : vector<8x1x8x16xf32> to vector<8x8x16xf32>
    %227 = vector.shape_cast %226 : vector<8x8x16xf32> to vector<64x16xf32>
    %c0_219 = arith.constant 0 : index
    %c96_220 = arith.constant 96 : index
    %228 = vector.load %arg15[%c0_219, %c96_220] : memref<128x144xf32, #tpu.memory_space<vmem>>, vector<64x16xf32>
    tpu.vector_store %arg15[%c0_219, %c96_220], %227 {strides = array<i32>} : memref<128x144xf32, #tpu.memory_space<vmem>>, vector<64x16xf32>,
    %c0_221 = arith.constant 0 : index
    %c2_222 = arith.constant 2 : index
    %c1_223 = arith.constant 1 : index
    %c0_224 = arith.constant 0 : index
    %229 = vector.load %arg14[%c0_221, %c2_222, %c1_223, %c0_224] : memref<2x10x10x16xf32, #tpu.memory_space<vmem>>, vector<2x8x8x16xf32>
    %230 = vector.shape_cast %229 : vector<2x8x8x16xf32> to vector<8x2x8x16xf32>
    %231 = vector.extract_strided_slice %230 {offsets = [0, 0, 0, 0], sizes = [8, 1, 8, 16], strides = [1, 1, 1, 1]} : vector<8x2x8x16xf32> to vector<8x1x8x16xf32>
    %232 = vector.shape_cast %231 : vector<8x1x8x16xf32> to vector<8x8x16xf32>
    %233 = vector.shape_cast %232 : vector<8x8x16xf32> to vector<64x16xf32>
    %c0_225 = arith.constant 0 : index
    %c112_226 = arith.constant 112 : index
    %234 = vector.load %arg15[%c0_225, %c112_226] : memref<128x144xf32, #tpu.memory_space<vmem>>, vector<64x16xf32>
    tpu.vector_store %arg15[%c0_225, %c112_226], %233 {strides = array<i32>} : memref<128x144xf32, #tpu.memory_space<vmem>>, vector<64x16xf32>,
    %c0_227 = arith.constant 0 : index
    %c2_228 = arith.constant 2 : index
    %c2_229 = arith.constant 2 : index
    %c0_230 = arith.constant 0 : index
    %235 = vector.load %arg14[%c0_227, %c2_228, %c2_229, %c0_230] : memref<2x10x10x16xf32, #tpu.memory_space<vmem>>, vector<2x8x8x16xf32>
    %236 = vector.shape_cast %235 : vector<2x8x8x16xf32> to vector<8x2x8x16xf32>
    %237 = vector.extract_strided_slice %236 {offsets = [0, 0, 0, 0], sizes = [8, 1, 8, 16], strides = [1, 1, 1, 1]} : vector<8x2x8x16xf32> to vector<8x1x8x16xf32>
    %238 = vector.shape_cast %237 : vector<8x1x8x16xf32> to vector<8x8x16xf32>
    %239 = vector.shape_cast %238 : vector<8x8x16xf32> to vector<64x16xf32>
    %c0_231 = arith.constant 0 : index
    %c128_232 = arith.constant 128 : index
    %240 = vector.load %arg15[%c0_231, %c128_232] : memref<128x144xf32, #tpu.memory_space<vmem>>, vector<64x16xf32>
    tpu.vector_store %arg15[%c0_231, %c128_232], %239 {strides = array<i32>} : memref<128x144xf32, #tpu.memory_space<vmem>>, vector<64x16xf32>,
    %c0_233 = arith.constant 0 : index
    %c0_234 = arith.constant 0 : index
    %241 = vector.load %arg15[%c0_233, %c0_234] : memref<128x144xf32, #tpu.memory_space<vmem>>, vector<64x144xf32>
    %c0_235 = arith.constant 0 : index
    %c0_236 = arith.constant 0 : index
    %242 = vector.load %arg8[%c0_235, %c0_236] : memref<144x32xf32, #tpu.memory_space<vmem>>, vector<144x32xf32>
    %cst_237 = arith.constant dense<0.000000e+00> : vector<64x32xf32>
    %243 = tpu.matmul %241, %242, %cst_237 {dimension_numbers = #tpu.dot_dimension_numbers<[1], [0], [0], [1], [0, 0, 1, 1], [], []>} : vector<64x144xf32>, vector<144x32xf32>, vector<64x32xf32> -> vector<64x32xf32>
    %244 = tpu.iota {dimensions = array<i32: 0>} : vector<64x1xi32>
    %c1_i32 = arith.constant 1 : i32
    %245 = vector.broadcast %c1_i32 : i32 to vector<64x1xi32>
    %246 = arith.andi %244, %245 : vector<64x1xi32>
    %c0_i32 = arith.constant 0 : i32
    %247 = vector.broadcast %c0_i32 : i32 to vector<64x1xi32>
    %248 = arith.cmpi eq, %246, %247 : vector<64x1xi32>
    %249 = arith.extui %248 : vector<64x1xi1> to vector<64x1xi32>
    %250 = arith.sitofp %249 : vector<64x1xi32> to vector<64x1xf32>
    %c0_238 = arith.constant 0 : index
    %c0_239 = arith.constant 0 : index
    %251 = vector.load %arg9[%c0_238, %c0_239] : memref<3x32xf32, #tpu.memory_space<vmem>>, vector<1x32xf32>
    %c1_240 = arith.constant 1 : index
    %c0_241 = arith.constant 0 : index
    %252 = vector.load %arg9[%c1_240, %c0_241] : memref<3x32xf32, #tpu.memory_space<vmem>>, vector<1x32xf32>
    %c2_242 = arith.constant 2 : index
    %c0_243 = arith.constant 0 : index
    %253 = vector.load %arg9[%c2_242, %c0_243] : memref<3x32xf32, #tpu.memory_space<vmem>>, vector<1x32xf32>
    %254 = vector.broadcast %251 : vector<1x32xf32> to vector<64x32xf32>
    %255 = arith.addf %243, %254 : vector<64x32xf32>
    %cst_244 = arith.constant 0.000000e+00 : f32
    %256 = vector.broadcast %cst_244 : f32 to vector<64x32xf32>
    %257 = arith.maximumf %255, %256 : vector<64x32xf32>
    %258 = vector.broadcast %250 : vector<64x1xf32> to vector<64x32xf32>
    %259 = arith.mulf %257, %258 : vector<64x32xf32>
    %cst_245 = arith.constant dense<0.000000e+00> : vector<32xf32>
    %260 = vector.multi_reduction <add>, %259, %cst_245 [0] : vector<64x32xf32> to vector<32xf32>
    %261 = vector.shape_cast %260 : vector<32xf32> to vector<1x32xf32>
    %cst_246 = arith.constant 3.125000e-02 : f32
    %262 = vector.broadcast %cst_246 : f32 to vector<1x32xf32>
    %263 = arith.mulf %261, %262 : vector<1x32xf32>
    %264 = vector.broadcast %263 : vector<1x32xf32> to vector<64x32xf32>
    %265 = arith.subf %257, %264 : vector<64x32xf32>
    %266 = arith.mulf %265, %265 : vector<64x32xf32>
    %267 = vector.broadcast %250 : vector<64x1xf32> to vector<64x32xf32>
    %268 = arith.mulf %266, %267 : vector<64x32xf32>
    %cst_247 = arith.constant dense<0.000000e+00> : vector<32xf32>
    %269 = vector.multi_reduction <add>, %268, %cst_247 [0] : vector<64x32xf32> to vector<32xf32>
    %270 = vector.shape_cast %269 : vector<32xf32> to vector<1x32xf32>
    %cst_248 = arith.constant 3.125000e-02 : f32
    %271 = vector.broadcast %cst_248 : f32 to vector<1x32xf32>
    %272 = arith.mulf %270, %271 : vector<1x32xf32>
    %cst_249 = arith.constant 9.99999974E-6 : f32
    %273 = vector.broadcast %cst_249 : f32 to vector<1x32xf32>
    %274 = arith.addf %272, %273 : vector<1x32xf32>
    %275 = math.rsqrt %274 : vector<1x32xf32>
    %276 = arith.mulf %252, %275 : vector<1x32xf32>
    %277 = vector.broadcast %276 : vector<1x32xf32> to vector<64x32xf32>
    %278 = arith.mulf %265, %277 : vector<64x32xf32>
    %279 = vector.broadcast %253 : vector<1x32xf32> to vector<64x32xf32>
    %280 = arith.addf %278, %279 : vector<64x32xf32>
    %c0_250 = arith.constant 0 : index
    %c0_251 = arith.constant 0 : index
    %281 = vector.load %arg10[%c0_250, %c0_251] : memref<64x32xf32, #tpu.memory_space<vmem>>, vector<64x32xf32>
    tpu.vector_store %arg10[%c0_250, %c0_251], %280 {strides = array<i32>} : memref<64x32xf32, #tpu.memory_space<vmem>>, vector<64x32xf32>,
    return
  }
  func.func @transform_0(%arg0: i32) -> (i32, i32) {
    %c0_i32 = arith.constant 0 : i32
    %c0_i32_0 = arith.constant 0 : i32
    %c0_i32_1 = arith.constant 0 : i32
    return %c0_i32, %c0_i32_0 : i32, i32
  }
  func.func @transform_1(%arg0: i32) -> (i32, i32) {
    %c0_i32 = arith.constant 0 : i32
    %c0_i32_0 = arith.constant 0 : i32
    %c0_i32_1 = arith.constant 0 : i32
    return %c0_i32, %c0_i32_0 : i32, i32
  }
  func.func @transform_2(%arg0: i32) -> (i32, i32) {
    %c0_i32 = arith.constant 0 : i32
    %c0_i32_0 = arith.constant 0 : i32
    %c0_i32_1 = arith.constant 0 : i32
    return %c0_i32, %c0_i32_0 : i32, i32
  }
  func.func @transform_3(%arg0: i32) -> (i32, i32) {
    %c0_i32 = arith.constant 0 : i32
    %c0_i32_0 = arith.constant 0 : i32
    %c0_i32_1 = arith.constant 0 : i32
    return %c0_i32, %c0_i32_0 : i32, i32
  }
  func.func @transform_4(%arg0: i32) -> (i32, i32) {
    %c0_i32 = arith.constant 0 : i32
    %c0_i32_0 = arith.constant 0 : i32
    %c0_i32_1 = arith.constant 0 : i32
    return %c0_i32, %c0_i32_0 : i32, i32
  }
  func.func @transform_5(%arg0: i32) -> (i32, i32) {
    %c0_i32 = arith.constant 0 : i32
    %c0_i32_0 = arith.constant 0 : i32
    %c0_i32_1 = arith.constant 0 : i32
    return %c0_i32, %c0_i32_0 : i32, i32
  }
  func.func @transform_6(%arg0: i32) -> (i32, i32) {
    %c0_i32 = arith.constant 0 : i32
    %c0_i32_0 = arith.constant 0 : i32
    %c0_i32_1 = arith.constant 0 : i32
    return %c0_i32, %c0_i32_0 : i32, i32
  }
  func.func @transform_7(%arg0: i32) -> (i32, i32) {
    %c0_i32 = arith.constant 0 : i32
    %c0_i32_0 = arith.constant 0 : i32
    %c0_i32_1 = arith.constant 0 : i32
    return %c0_i32, %c0_i32_0 : i32, i32
  }
  func.func @transform_8(%arg0: i32) -> (i32, i32) {
    %c0_i32 = arith.constant 0 : i32
    %c0_i32_0 = arith.constant 0 : i32
    %c0_i32_1 = arith.constant 0 : i32
    return %c0_i32, %c0_i32_0 : i32, i32
  }
  func.func @transform_9(%arg0: i32) -> (i32, i32) {
    %c0_i32 = arith.constant 0 : i32
    %c0_i32_0 = arith.constant 0 : i32
    %c0_i32_1 = arith.constant 0 : i32
    return %c0_i32, %c0_i32_0 : i32, i32
  }
}

</mosaic_0001>

<llo_original>
// kernel: forward.1
$region0: #{forward.1}
  #allocation0 [shape = 'u32[]', space=smem, size = 0x4, offset = 0x4, fixed_abs, tag = 'smem constant byte address 0x4 - core index']
  #allocation1 [shape = 'u32[72,128]{1,0:T(1,128)}', space=vmem, size = 0x9000, scoped, tag = 'internal scratch']
  #allocation2 [shape = 'f32[2,18,9,8]{3,2,1,0:T(8,128)}', space=vmem, size = 0x48000, scoped, tag = 'scratch operand']
  #allocation3 [shape = 'f32[2,18,9,8]{3,2,1,0:T(8,128)}', space=vmem, size = 0x48000, scoped, tag = 'scratch operand']
  #allocation4 [shape = 'f32[2,10,10,16]{3,2,1,0:T(8,128)}', space=vmem, size = 0x28000, scoped, tag = 'scratch operand']
  #allocation5 [shape = 'f32[2,10,10,16]{3,2,1,0:T(8,128)}', space=vmem, size = 0x28000, scoped, tag = 'scratch operand']
  #allocation6 [shape = 'f32[128,144]{1,0:T(8,128)}', space=vmem, size = 0x20000, scoped, tag = 'scratch operand']
  %s0 = inlined_call_operand.vmem [shape: f32[512,32], index: 0, kind: input, shape index: {}]
  %s1 = inlined_call_operand.vmem [shape: f32[32,8], index: 1, kind: input, shape index: {}]
  %s2 = inlined_call_operand.vmem [shape: f32[3,8], index: 2, kind: input, shape index: {}]
  %s3 = inlined_call_operand.vmem [shape: f32[72,16], index: 3, kind: input, shape index: {}]
  %s4 = inlined_call_operand.vmem [shape: f32[3,16], index: 4, kind: input, shape index: {}]
  %s5 = inlined_call_operand.vmem [shape: f32[144,16], index: 5, kind: input, shape index: {}]
  %s6 = inlined_call_operand.vmem [shape: f32[3,16], index: 6, kind: input, shape index: {}]
  %s7 = inlined_call_operand.vmem [shape: f32[144,32], index: 7, kind: input, shape index: {}]
  %s8 = inlined_call_operand.vmem [shape: f32[3,32], index: 8, kind: input, shape index: {}]
  %s9 = inlined_call_operand.vmem [shape: f32[64,32], index: 9, kind: output, shape index: {}]
  %s10 = sld [smem:[#allocation0]]
  $region46: #{forward.1} parent=0
    _
  %s12 = ssub.s32 1, %s10
  %s13 = scalar_select 0, %s12, %s10
  // Predicated region
  $region2: #{forward.1} parent=0 // pred_check
    _
  $region3: #{forward.1} parent=0 // pred_check_branch
    %15 = sbr.rel (0) target = $region5
  $region4: #{forward.1} parent=0 // pred_region
    _
  $region5: #{forward.1} parent=0 // pred_fallthru
    _
  // Predicated region
  $region6: #{forward.1} parent=0 // pred_check
    _
  $region7: #{forward.1} parent=0 // pred_check_branch
    %17 = sbr.rel (0) target = $region9
  $region8: #{forward.1} parent=0 // pred_region
    _
  $region9: #{forward.1} parent=0 // pred_fallthru
    _
  // Predicated region
  $region10: #{forward.1} parent=0 // pred_check
    _
  $region11: #{forward.1} parent=0 // pred_check_branch
    %19 = sbr.rel (0) target = $region13
  $region12: #{forward.1} parent=0 // pred_region
    _
  $region13: #{forward.1} parent=0 // pred_fallthru
    _
  // Predicated region
  $region14: #{forward.1} parent=0 // pred_check
    _
  $region15: #{forward.1} parent=0 // pred_check_branch
    %21 = sbr.rel (0) target = $region17
  $region16: #{forward.1} parent=0 // pred_region
    _
  $region17: #{forward.1} parent=0 // pred_fallthru
    _
  // Predicated region
  $region18: #{forward.1} parent=0 // pred_check
    _
  $region19: #{forward.1} parent=0 // pred_check_branch
    %23 = sbr.rel (0) target = $region21
  $region20: #{forward.1} parent=0 // pred_region
    _
  $region21: #{forward.1} parent=0 // pred_fallthru
    _
  // Predicated region
  $region22: #{forward.1} parent=0 // pred_check
    _
  $region23: #{forward.1} parent=0 // pred_check_branch
    %25 = sbr.rel (0) target = $region25
  $region24: #{forward.1} parent=0 // pred_region
    _
  $region25: #{forward.1} parent=0 // pred_fallthru
    _
  // Predicated region
  $region26: #{forward.1} parent=0 // pred_check
    _
  $region27: #{forward.1} parent=0 // pred_check_branch
    %27 = sbr.rel (0) target = $region29
  $region28: #{forward.1} parent=0 // pred_region
    _
  $region29: #{forward.1} parent=0 // pred_fallthru
    _
  // Predicated region
  $region30: #{forward.1} parent=0 // pred_check
    _
  $region31: #{forward.1} parent=0 // pred_check_branch
    %29 = sbr.rel (0) target = $region33
  $region32: #{forward.1} parent=0 // pred_region
    _
  $region33: #{forward.1} parent=0 // pred_fallthru
    _
  // Predicated region
  $region34: #{forward.1} parent=0 // pred_check
    _
  $region35: #{forward.1} parent=0 // pred_check_branch
    %31 = sbr.rel (0) target = $region37
  $region36: #{forward.1} parent=0 // pred_region
    _
  $region37: #{forward.1} parent=0 // pred_fallthru
    _
  %v32 = vld [vmem:[%s0] sm:$0xff]
  %v33 = vld [vmem:[%s0 + $0x8] sm:$0xff]
  %v34 = vld [vmem:[%s0 + $0x10] sm:$0xff]
  %v35 = vld [vmem:[%s0 + $0x18] sm:$0xff]
  %v36 = vld [vmem:[%s0 + $0x20] sm:$0xff]
  %v37 = vld [vmem:[%s0 + $0x28] sm:$0xff]
  %v38 = vld [vmem:[%s0 + $0x30] sm:$0xff]
  %v39 = vld [vmem:[%s0 + $0x38] sm:$0xff]
  %v40 = vld [vmem:[%s0 + $0x40] sm:$0xff]
  %v41 = vld [vmem:[%s0 + $0x48] sm:$0xff]
  %v42 = vld [vmem:[%s0 + $0x50] sm:$0xff]
  %v43 = vld [vmem:[%s0 + $0x58] sm:$0xff]
  %v44 = vld [vmem:[%s0 + $0x60] sm:$0xff]
  %v45 = vld [vmem:[%s0 + $0x68] sm:$0xff]
  %v46 = vld [vmem:[%s0 + $0x70] sm:$0xff]
  %v47 = vld [vmem:[%s0 + $0x78] sm:$0xff]
  %v48 = vld [vmem:[%s0 + $0x80] sm:$0xff]
  %v49 = vld [vmem:[%s0 + $0x88] sm:$0xff]
  %v50 = vld [vmem:[%s0 + $0x90] sm:$0xff]
  %v51 = vld [vmem:[%s0 + $0x98] sm:$0xff]
  %v52 = vld [vmem:[%s0 + $0xa0] sm:$0xff]
  %v53 = vld [vmem:[%s0 + $0xa8] sm:$0xff]
  %v54 = vld [vmem:[%s0 + $0xb0] sm:$0xff]
  %v55 = vld [vmem:[%s0 + $0xb8] sm:$0xff]
  %v56 = vld [vmem:[%s0 + $0xc0] sm:$0xff]
  %v57 = vld [vmem:[%s0 + $0xc8] sm:$0xff]
  %v58 = vld [vmem:[%s0 + $0xd0] sm:$0xff]
  %v59 = vld [vmem:[%s0 + $0xd8] sm:$0xff]
  %v60 = vld [vmem:[%s0 + $0xe0] sm:$0xff]
  %v61 = vld [vmem:[%s0 + $0xe8] sm:$0xff]
  %v62 = vld [vmem:[%s0 + $0xf0] sm:$0xff]
  %v63 = vld [vmem:[%s0 + $0xf8] sm:$0xff]
  %v64 = vld [vmem:[%s0 + $0x100] sm:$0xff]
  %v65 = vld [vmem:[%s0 + $0x108] sm:$0xff]
  %v66 = vld [vmem:[%s0 + $0x110] sm:$0xff]
  %v67 = vld [vmem:[%s0 + $0x118] sm:$0xff]
  %v68 = vld [vmem:[%s0 + $0x120] sm:$0xff]
  %v69 = vld [vmem:[%s0 + $0x128] sm:$0xff]
  %v70 = vld [vmem:[%s0 + $0x130] sm:$0xff]
  %v71 = vld [vmem:[%s0 + $0x138] sm:$0xff]
  %v72 = vld [vmem:[%s0 + $0x140] sm:$0xff]
  %v73 = vld [vmem:[%s0 + $0x148] sm:$0xff]
  %v74 = vld [vmem:[%s0 + $0x150] sm:$0xff]
  %v75 = vld [vmem:[%s0 + $0x158] sm:$0xff]
  %v76 = vld [vmem:[%s0 + $0x160] sm:$0xff]
  %v77 = vld [vmem:[%s0 + $0x168] sm:$0xff]
  %v78 = vld [vmem:[%s0 + $0x170] sm:$0xff]
  %v79 = vld [vmem:[%s0 + $0x178] sm:$0xff]
  %v80 = vld [vmem:[%s0 + $0x180] sm:$0xff]
  %v81 = vld [vmem:[%s0 + $0x188] sm:$0xff]
  %v82 = vld [vmem:[%s0 + $0x190] sm:$0xff]
  %v83 = vld [vmem:[%s0 + $0x198] sm:$0xff]
  %v84 = vld [vmem:[%s0 + $0x1a0] sm:$0xff]
  %v85 = vld [vmem:[%s0 + $0x1a8] sm:$0xff]
  %v86 = vld [vmem:[%s0 + $0x1b0] sm:$0xff]
  %v87 = vld [vmem:[%s0 + $0x1b8] sm:$0xff]
  %v88 = vld [vmem:[%s0 + $0x1c0] sm:$0xff]
  %v89 = vld [vmem:[%s0 + $0x1c8] sm:$0xff]
  %v90 = vld [vmem:[%s0 + $0x1d0] sm:$0xff]
  %v91 = vld [vmem:[%s0 + $0x1d8] sm:$0xff]
  %v92 = vld [vmem:[%s0 + $0x1e0] sm:$0xff]
  %v93 = vld [vmem:[%s0 + $0x1e8] sm:$0xff]
  %v94 = vld [vmem:[%s0 + $0x1f0] sm:$0xff]
  %v95 = vld [vmem:[%s0 + $0x1f8] sm:$0xff]
  %v96 = vld [vmem:[%s1] sm:$0xff]
  %v97 = vld [vmem:[%s1 + $0x8] sm:$0xff]
  %v98 = vld [vmem:[%s1 + $0x10] sm:$0xff]
  %v99 = vld [vmem:[%s1 + $0x18] sm:$0xff]
  %v100 = vld [vmem:[%s2] sm:$0x1]
  %v101 = vld [vmem:[%s2 + $0x1] sm:$0x1]
  %v102 = vld [vmem:[%s2 + $0x2] sm:$0x1]
  %v103 = vperm.slane %v100, 0
  %vm104 = vcmask 261120
  %v106 = vsel %vm104, %v32, 0
  %v109 = vsel %vm104, %v33, 0
  %v112 = vsel %vm104, %v34, 0
  %v115 = vsel %vm104, %v35, 0
  %v118 = vsel %vm104, %v36, 0
  %v121 = vsel %vm104, %v37, 0
  %v124 = vsel %vm104, %v38, 0
  %v127 = vsel %vm104, %v39, 0
  %v130 = vsel %vm104, %v40, 0
  %v133 = vsel %vm104, %v41, 0
  %v136 = vsel %vm104, %v42, 0
  %v139 = vsel %vm104, %v43, 0
  %v142 = vsel %vm104, %v44, 0
  %v145 = vsel %vm104, %v45, 0
  %v148 = vsel %vm104, %v46, 0
  %v151 = vsel %vm104, %v47, 0
  %v154 = vsel %vm104, %v48, 0
  %v157 = vsel %vm104, %v49, 0
  %v160 = vsel %vm104, %v50, 0
  %v163 = vsel %vm104, %v51, 0
  %v166 = vsel %vm104, %v52, 0
  %v169 = vsel %vm104, %v53, 0
  %v172 = vsel %vm104, %v54, 0
  %v175 = vsel %vm104, %v55, 0
  %v178 = vsel %vm104, %v56, 0
  %v181 = vsel %vm104, %v57, 0
  %v184 = vsel %vm104, %v58, 0
  %v187 = vsel %vm104, %v59, 0
  %v190 = vsel %vm104, %v60, 0
  %v193 = vsel %vm104, %v61, 0
  %v196 = vsel %vm104, %v62, 0
  %v199 = vsel %vm104, %v63, 0
  %v202 = vsel %vm104, %v64, 0
  %v205 = vsel %vm104, %v65, 0
  %v208 = vsel %vm104, %v66, 0
  %v211 = vsel %vm104, %v67, 0
  %v214 = vsel %vm104, %v68, 0
  %v217 = vsel %vm104, %v69, 0
  %v220 = vsel %vm104, %v70, 0
  %v223 = vsel %vm104, %v71, 0
  %v226 = vsel %vm104, %v72, 0
  %v229 = vsel %vm104, %v73, 0
  %v232 = vsel %vm104, %v74, 0
  %v235 = vsel %vm104, %v75, 0
  %v238 = vsel %vm104, %v76, 0
  %v241 = vsel %vm104, %v77, 0
  %v244 = vsel %vm104, %v78, 0
  %v247 = vsel %vm104, %v79, 0
  %v250 = vsel %vm104, %v80, 0
  %v253 = vsel %vm104, %v81, 0
  %v256 = vsel %vm104, %v82, 0
  %v259 = vsel %vm104, %v83, 0
  %v262 = vsel %vm104, %v84, 0
  %v265 = vsel %vm104, %v85, 0
  %v268 = vsel %vm104, %v86, 0
  %v271 = vsel %vm104, %v87, 0
  %v274 = vsel %vm104, %v88, 0
  %v277 = vsel %vm104, %v89, 0
  %v280 = vsel %vm104, %v90, 0
  %v283 = vsel %vm104, %v91, 0
  %v286 = vsel %vm104, %v92, 0
  %v289 = vsel %vm104, %v93, 0
  %v292 = vsel %vm104, %v94, 0
  %v295 = vsel %vm104, %v95, 0
  %297 = vmatpush.msra.mxu0 0.0
  %298 = vmatpush.msra.mxu0 0.0
  %299 = vmatpush.msra.mxu0 0.0
  %300 = vmatpush.msra.mxu0 0.0
  %301 = vmatpush.msra.mxu0 0.0
  %302 = vmatpush.msra.mxu0 0.0
  %303 = vmatpush.msra.mxu0 0.0
  %304 = vmatpush.msra.mxu0 0.0
  %305 = vmatpush.msra.mxu0 0.0
  %306 = vmatpush.msra.mxu0 0.0
  %307 = vmatpush.msra.mxu0 0.0
  %308 = vmatpush.msra.mxu0 0.0
  %309 = vmatpush.msra.mxu0 %v99
  %310 = vmatpush.msra.mxu0 %v98
  %311 = vmatpush.msra.mxu0 %v97
  %312 = vmatpush.msra.mxu0 %v96
  %313 = vmatmul.f32.gmra.mxu0 %v106
  %v314 = vpop.f32.mrf.mxu0
  %v315 = vadd.f32 %v103, %v314
  %316 = vmatmul.f32.gmra.mxu0 %v109
  %v317 = vpop.f32.mrf.mxu0
  %v318 = vadd.f32 %v103, %v317
  %319 = vmatmul.f32.gmra.mxu0 %v112
  %v320 = vpop.f32.mrf.mxu0
  %v321 = vadd.f32 %v103, %v320
  %322 = vmatmul.f32.gmra.mxu0 %v115
  %v323 = vpop.f32.mrf.mxu0
  %v324 = vadd.f32 %v103, %v323
  %325 = vmatmul.f32.gmra.mxu0 %v118
  %v326 = vpop.f32.mrf.mxu0
  %v327 = vadd.f32 %v103, %v326
  %328 = vmatmul.f32.gmra.mxu0 %v121
  %v329 = vpop.f32.mrf.mxu0
  %v330 = vadd.f32 %v103, %v329
  %331 = vmatmul.f32.gmra.mxu0 %v124
  %v332 = vpop.f32.mrf.mxu0
  %v333 = vadd.f32 %v103, %v332
  %334 = vmatmul.f32.gmra.mxu0 %v127
  %v335 = vpop.f32.mrf.mxu0
  %v336 = vadd.f32 %v103, %v335
  %337 = vmatmul.f32.gmra.mxu0 %v130
  %v338 = vpop.f32.mrf.mxu0
  %v339 = vadd.f32 %v103, %v338
  %340 = vmatmul.f32.gmra.mxu0 %v133
  %v341 = vpop.f32.mrf.mxu0
  %v342 = vadd.f32 %v103, %v341
  %343 = vmatmul.f32.gmra.mxu0 %v136
  %v344 = vpop.f32.mrf.mxu0
  %v345 = vadd.f32 %v103, %v344
  %346 = vmatmul.f32.gmra.mxu0 %v139
  %v347 = vpop.f32.mrf.mxu0
  %v348 = vadd.f32 %v103, %v347
  %349 = vmatmul.f32.gmra.mxu0 %v142
  %v350 = vpop.f32.mrf.mxu0
  %v351 = vadd.f32 %v103, %v350
  %352 = vmatmul.f32.gmra.mxu0 %v145
  %v353 = vpop.f32.mrf.mxu0
  %v354 = vadd.f32 %v103, %v353
  %355 = vmatmul.f32.gmra.mxu0 %v148
  %v356 = vpop.f32.mrf.mxu0
  %v357 = vadd.f32 %v103, %v356
  %358 = vmatmul.f32.gmra.mxu0 %v151
  %v359 = vpop.f32.mrf.mxu0
  %v360 = vadd.f32 %v103, %v359
  %361 = vmatmul.f32.gmra.mxu0 %v154
  %v362 = vpop.f32.mrf.mxu0
  %v363 = vadd.f32 %v103, %v362
  %364 = vmatmul.f32.gmra.mxu0 %v157
  %v365 = vpop.f32.mrf.mxu0
  %v366 = vadd.f32 %v103, %v365
  %367 = vmatmul.f32.gmra.mxu0 %v160
  %v368 = vpop.f32.mrf.mxu0
  %v369 = vadd.f32 %v103, %v368
  %370 = vmatmul.f32.gmra.mxu0 %v163
  %v371 = vpop.f32.mrf.mxu0
  %v372 = vadd.f32 %v103, %v371
  %373 = vmatmul.f32.gmra.mxu0 %v166
  %v374 = vpop.f32.mrf.mxu0
  %v375 = vadd.f32 %v103, %v374
  %376 = vmatmul.f32.gmra.mxu0 %v169
  %v377 = vpop.f32.mrf.mxu0
  %v378 = vadd.f32 %v103, %v377
  %379 = vmatmul.f32.gmra.mxu0 %v172
  %v380 = vpop.f32.mrf.mxu0
  %v381 = vadd.f32 %v103, %v380
  %382 = vmatmul.f32.gmra.mxu0 %v175
  %v383 = vpop.f32.mrf.mxu0
  %v384 = vadd.f32 %v103, %v383
  %385 = vmatmul.f32.gmra.mxu0 %v178
  %v386 = vpop.f32.mrf.mxu0
  %v387 = vadd.f32 %v103, %v386
  %388 = vmatmul.f32.gmra.mxu0 %v181
  %v389 = vpop.f32.mrf.mxu0
  %v390 = vadd.f32 %v103, %v389
  %391 = vmatmul.f32.gmra.mxu0 %v184
  %v392 = vpop.f32.mrf.mxu0
  %v393 = vadd.f32 %v103, %v392
  %394 = vmatmul.f32.gmra.mxu0 %v187
  %v395 = vpop.f32.mrf.mxu0
  %v396 = vadd.f32 %v103, %v395
  %397 = vmatmul.f32.gmra.mxu0 %v190
  %v398 = vpop.f32.mrf.mxu0
  %v399 = vadd.f32 %v103, %v398
  %400 = vmatmul.f32.gmra.mxu0 %v193
  %v401 = vpop.f32.mrf.mxu0
  %v402 = vadd.f32 %v103, %v401
  %403 = vmatmul.f32.gmra.mxu0 %v196
  %v404 = vpop.f32.mrf.mxu0
  %v405 = vadd.f32 %v103, %v404
  %406 = vmatmul.f32.gmra.mxu0 %v199
  %v407 = vpop.f32.mrf.mxu0
  %v408 = vadd.f32 %v103, %v407
  %409 = vmatmul.f32.gmra.mxu0 %v202
  %v410 = vpop.f32.mrf.mxu0
  %v411 = vadd.f32 %v103, %v410
  %412 = vmatmul.f32.gmra.mxu0 %v205
  %v413 = vpop.f32.mrf.mxu0
  %v414 = vadd.f32 %v103, %v413
  %415 = vmatmul.f32.gmra.mxu0 %v208
  %v416 = vpop.f32.mrf.mxu0
  %v417 = vadd.f32 %v103, %v416
  %418 = vmatmul.f32.gmra.mxu0 %v211
  %v419 = vpop.f32.mrf.mxu0
  %v420 = vadd.f32 %v103, %v419
  %421 = vmatmul.f32.gmra.mxu0 %v214
  %v422 = vpop.f32.mrf.mxu0
  %v423 = vadd.f32 %v103, %v422
  %424 = vmatmul.f32.gmra.mxu0 %v217
  %v425 = vpop.f32.mrf.mxu0
  %v426 = vadd.f32 %v103, %v425
  %427 = vmatmul.f32.gmra.mxu0 %v220
  %v428 = vpop.f32.mrf.mxu0
  %v429 = vadd.f32 %v103, %v428
  %430 = vmatmul.f32.gmra.mxu0 %v223
  %v431 = vpop.f32.mrf.mxu0
  %v432 = vadd.f32 %v103, %v431
  %433 = vmatmul.f32.gmra.mxu0 %v226
  %v434 = vpop.f32.mrf.mxu0
  %v435 = vadd.f32 %v103, %v434
  %436 = vmatmul.f32.gmra.mxu0 %v229
  %v437 = vpop.f32.mrf.mxu0
  %v438 = vadd.f32 %v103, %v437
  %439 = vmatmul.f32.gmra.mxu0 %v232
  %v440 = vpop.f32.mrf.mxu0
  %v441 = vadd.f32 %v103, %v440
  %442 = vmatmul.f32.gmra.mxu0 %v235
  %v443 = vpop.f32.mrf.mxu0
  %v444 = vadd.f32 %v103, %v443
  %445 = vmatmul.f32.gmra.mxu0 %v238
  %v446 = vpop.f32.mrf.mxu0
  %v447 = vadd.f32 %v103, %v446
  %448 = vmatmul.f32.gmra.mxu0 %v241
  %v449 = vpop.f32.mrf.mxu0
  %v450 = vadd.f32 %v103, %v449
  %451 = vmatmul.f32.gmra.mxu0 %v244
  %v452 = vpop.f32.mrf.mxu0
  %v453 = vadd.f32 %v103, %v452
  %454 = vmatmul.f32.gmra.mxu0 %v247
  %v455 = vpop.f32.mrf.mxu0
  %v456 = vadd.f32 %v103, %v455
  %457 = vmatmul.f32.gmra.mxu0 %v250
  %v458 = vpop.f32.mrf.mxu0
  %v459 = vadd.f32 %v103, %v458
  %460 = vmatmul.f32.gmra.mxu0 %v253
  %v461 = vpop.f32.mrf.mxu0
  %v462 = vadd.f32 %v103, %v461
  %463 = vmatmul.f32.gmra.mxu0 %v256
  %v464 = vpop.f32.mrf.mxu0
  %v465 = vadd.f32 %v103, %v464
  %466 = vmatmul.f32.gmra.mxu0 %v259
  %v467 = vpop.f32.mrf.mxu0
  %v468 = vadd.f32 %v103, %v467
  %469 = vmatmul.f32.gmra.mxu0 %v262
  %v470 = vpop.f32.mrf.mxu0
  %v471 = vadd.f32 %v103, %v470
  %472 = vmatmul.f32.gmra.mxu0 %v265
  %v473 = vpop.f32.mrf.mxu0
  %v474 = vadd.f32 %v103, %v473
  %475 = vmatmul.f32.gmra.mxu0 %v268
  %v476 = vpop.f32.mrf.mxu0
  %v477 = vadd.f32 %v103, %v476
  %478 = vmatmul.f32.gmra.mxu0 %v271
  %v479 = vpop.f32.mrf.mxu0
  %v480 = vadd.f32 %v103, %v479
  %481 = vmatmul.f32.gmra.mxu0 %v274
  %v482 = vpop.f32.mrf.mxu0
  %v483 = vadd.f32 %v103, %v482
  %484 = vmatmul.f32.gmra.mxu0 %v277
  %v485 = vpop.f32.mrf.mxu0
  %v486 = vadd.f32 %v103, %v485
  %487 = vmatmul.f32.gmra.mxu0 %v280
  %v488 = vpop.f32.mrf.mxu0
  %v489 = vadd.f32 %v103, %v488
  %490 = vmatmul.f32.gmra.mxu0 %v283
  %v491 = vpop.f32.mrf.mxu0
  %v492 = vadd.f32 %v103, %v491
  %493 = vmatmul.f32.gmra.mxu0 %v286
  %v494 = vpop.f32.mrf.mxu0
  %v495 = vadd.f32 %v103, %v494
  %496 = vmatmul.f32.gmra.mxu0 %v289
  %v497 = vpop.f32.mrf.mxu0
  %v498 = vadd.f32 %v103, %v497
  %499 = vmatmul.f32.gmra.mxu0 %v292
  %v500 = vpop.f32.mrf.mxu0
  %v501 = vadd.f32 %v103, %v500
  %502 = vmatmul.f32.gmra.mxu0 %v295
  %v503 = vpop.f32.mrf.mxu0
  %v504 = vadd.f32 %v103, %v503
  %505 = vdwg.mxu0
  %v506 = vmax.f32 %v315, 0.0
  %v507 = vmax.f32 %v318, 0.0
  %v508 = vmax.f32 %v321, 0.0
  %v509 = vmax.f32 %v324, 0.0
  %v510 = vmax.f32 %v327, 0.0
  %v511 = vmax.f32 %v330, 0.0
  %v512 = vmax.f32 %v333, 0.0
  %v513 = vmax.f32 %v336, 0.0
  %v514 = vmax.f32 %v339, 0.0
  %v515 = vmax.f32 %v342, 0.0
  %v516 = vmax.f32 %v345, 0.0
  %v517 = vmax.f32 %v348, 0.0
  %v518 = vmax.f32 %v351, 0.0
  %v519 = vmax.f32 %v354, 0.0
  %v520 = vmax.f32 %v357, 0.0
  %v521 = vmax.f32 %v360, 0.0
  %v522 = vmax.f32 %v363, 0.0
  %v523 = vmax.f32 %v366, 0.0
  %v524 = vmax.f32 %v369, 0.0
  %v525 = vmax.f32 %v372, 0.0
  %v526 = vmax.f32 %v375, 0.0
  %v527 = vmax.f32 %v378, 0.0
  %v528 = vmax.f32 %v381, 0.0
  %v529 = vmax.f32 %v384, 0.0
  %v530 = vmax.f32 %v387, 0.0
  %v531 = vmax.f32 %v390, 0.0
  %v532 = vmax.f32 %v393, 0.0
  %v533 = vmax.f32 %v396, 0.0
  %v534 = vmax.f32 %v399, 0.0
  %v535 = vmax.f32 %v402, 0.0
  %v536 = vmax.f32 %v405, 0.0
  %v537 = vmax.f32 %v408, 0.0
  %v538 = vmax.f32 %v411, 0.0
  %v539 = vmax.f32 %v414, 0.0
  %v540 = vmax.f32 %v417, 0.0
  %v541 = vmax.f32 %v420, 0.0
  %v542 = vmax.f32 %v423, 0.0
  %v543 = vmax.f32 %v426, 0.0
  %v544 = vmax.f32 %v429, 0.0
  %v545 = vmax.f32 %v432, 0.0
  %v546 = vmax.f32 %v435, 0.0
  %v547 = vmax.f32 %v438, 0.0
  %v548 = vmax.f32 %v441, 0.0
  %v549 = vmax.f32 %v444, 0.0
  %v550 = vmax.f32 %v447, 0.0
  %v551 = vmax.f32 %v450, 0.0
  %v552 = vmax.f32 %v453, 0.0
  %v553 = vmax.f32 %v456, 0.0
  %v554 = vmax.f32 %v459, 0.0
  %v555 = vmax.f32 %v462, 0.0
  %v556 = vmax.f32 %v465, 0.0
  %v557 = vmax.f32 %v468, 0.0
  %v558 = vmax.f32 %v471, 0.0
  %v559 = vmax.f32 %v474, 0.0
  %v560 = vmax.f32 %v477, 0.0
  %v561 = vmax.f32 %v480, 0.0
  %v562 = vmax.f32 %v483, 0.0
  %v563 = vmax.f32 %v486, 0.0
  %v564 = vmax.f32 %v489, 0.0
  %v565 = vmax.f32 %v492, 0.0
  %v566 = vmax.f32 %v495, 0.0
  %v567 = vmax.f32 %v498, 0.0
  %v568 = vmax.f32 %v501, 0.0
  %v569 = vmax.f32 %v504, 0.0
  %vm570 = vcmask 64512
  %v571 = vsel %vm570, %v506, 0.0
  %v572 = vsel %vm570, %v507, 0.0
  %v573 = vadd.f32 %v571, %v572
  %v574 = vsel %vm570, %v508, 0.0
  %v575 = vadd.f32 %v573, %v574
  %v576 = vsel %vm570, %v509, 0.0
  %v577 = vadd.f32 %v575, %v576
  %v578 = vsel %vm570, %v510, 0.0
  %v579 = vadd.f32 %v577, %v578
  %v580 = vsel %vm570, %v511, 0.0
  %v581 = vadd.f32 %v579, %v580
  %v582 = vsel %vm570, %v512, 0.0
  %v583 = vadd.f32 %v581, %v582
  %v584 = vsel %vm570, %v513, 0.0
  %v585 = vadd.f32 %v583, %v584
  %v586 = vsel %vm570, %v514, 0.0
  %v587 = vadd.f32 %v585, %v586
  %v588 = vsel %vm570, %v515, 0.0
  %v589 = vadd.f32 %v587, %v588
  %v590 = vsel %vm570, %v516, 0.0
  %v591 = vadd.f32 %v589, %v590
  %v592 = vsel %vm570, %v517, 0.0
  %v593 = vadd.f32 %v591, %v592
  %v594 = vsel %vm570, %v518, 0.0
  %v595 = vadd.f32 %v593, %v594
  %v596 = vsel %vm570, %v519, 0.0
  %v597 = vadd.f32 %v595, %v596
  %v598 = vsel %vm570, %v520, 0.0
  %v599 = vadd.f32 %v597, %v598
  %v600 = vsel %vm570, %v521, 0.0
  %v601 = vadd.f32 %v599, %v600
  %v602 = vsel %vm570, %v522, 0.0
  %v603 = vadd.f32 %v601, %v602
  %v604 = vsel %vm570, %v523, 0.0
  %v605 = vadd.f32 %v603, %v604
  %v606 = vsel %vm570, %v524, 0.0
  %v607 = vadd.f32 %v605, %v606
  %v608 = vsel %vm570, %v525, 0.0
  %v609 = vadd.f32 %v607, %v608
  %v610 = vsel %vm570, %v526, 0.0
  %v611 = vadd.f32 %v609, %v610
  %v612 = vsel %vm570, %v527, 0.0
  %v613 = vadd.f32 %v611, %v612
  %v614 = vsel %vm570, %v528, 0.0
  %v615 = vadd.f32 %v613, %v614
  %v616 = vsel %vm570, %v529, 0.0
  %v617 = vadd.f32 %v615, %v616
  %v618 = vsel %vm570, %v530, 0.0
  %v619 = vadd.f32 %v617, %v618
  %v620 = vsel %vm570, %v531, 0.0
  %v621 = vadd.f32 %v619, %v620
  %v622 = vsel %vm570, %v532, 0.0
  %v623 = vadd.f32 %v621, %v622
  %v624 = vsel %vm570, %v533, 0.0
  %v625 = vadd.f32 %v623, %v624
  %v626 = vsel %vm570, %v534, 0.0
  %v627 = vadd.f32 %v625, %v626
  %v628 = vsel %vm570, %v535, 0.0
  %v629 = vadd.f32 %v627, %v628
  %v630 = vsel %vm570, %v536, 0.0
  %v631 = vadd.f32 %v629, %v630
  %v632 = vsel %vm570, %v537, 0.0
  %v633 = vadd.f32 %v631, %v632
  %v634 = vsel %vm570, %v538, 0.0
  %v635 = vadd.f32 %v633, %v634
  %v636 = vsel %vm570, %v539, 0.0
  %v637 = vadd.f32 %v635, %v636
  %v638 = vsel %vm570, %v540, 0.0
  %v639 = vadd.f32 %v637, %v638
  %v640 = vsel %vm570, %v541, 0.0
  %v641 = vadd.f32 %v639, %v640
  %v642 = vsel %vm570, %v542, 0.0
  %v643 = vadd.f32 %v641, %v642
  %v644 = vsel %vm570, %v543, 0.0
  %v645 = vadd.f32 %v643, %v644
  %v646 = vsel %vm570, %v544, 0.0
  %v647 = vadd.f32 %v645, %v646
  %v648 = vsel %vm570, %v545, 0.0
  %v649 = vadd.f32 %v647, %v648
  %v650 = vsel %vm570, %v546, 0.0
  %v651 = vadd.f32 %v649, %v650
  %v652 = vsel %vm570, %v547, 0.0
  %v653 = vadd.f32 %v651, %v652
  %v654 = vsel %vm570, %v548, 0.0
  %v655 = vadd.f32 %v653, %v654
  %v656 = vsel %vm570, %v549, 0.0
  %v657 = vadd.f32 %v655, %v656
  %v658 = vsel %vm570, %v550, 0.0
  %v659 = vadd.f32 %v657, %v658
  %v660 = vsel %vm570, %v551, 0.0
  %v661 = vadd.f32 %v659, %v660
  %v662 = vsel %vm570, %v552, 0.0
  %v663 = vadd.f32 %v661, %v662
  %v664 = vsel %vm570, %v553, 0.0
  %v665 = vadd.f32 %v663, %v664
  %v666 = vsel %vm570, %v554, 0.0
  %v667 = vadd.f32 %v665, %v666
  %v668 = vsel %vm570, %v555, 0.0
  %v669 = vadd.f32 %v667, %v668
  %v670 = vsel %vm570, %v556, 0.0
  %v671 = vadd.f32 %v669, %v670
  %v672 = vsel %vm570, %v557, 0.0
  %v673 = vadd.f32 %v671, %v672
  %v674 = vsel %vm570, %v558, 0.0
  %v675 = vadd.f32 %v673, %v674
  %v676 = vsel %vm570, %v559, 0.0
  %v677 = vadd.f32 %v675, %v676
  %v678 = vsel %vm570, %v560, 0.0
  %v679 = vadd.f32 %v677, %v678
  %v680 = vsel %vm570, %v561, 0.0
  %v681 = vadd.f32 %v679, %v680
  %v682 = vsel %vm570, %v562, 0.0
  %v683 = vadd.f32 %v681, %v682
  %v684 = vsel %vm570, %v563, 0.0
  %v685 = vadd.f32 %v683, %v684
  %v686 = vsel %vm570, %v564, 0.0
  %v687 = vadd.f32 %v685, %v686
  %v688 = vsel %vm570, %v565, 0.0
  %v689 = vadd.f32 %v687, %v688
  %v690 = vsel %vm570, %v566, 0.0
  %v691 = vadd.f32 %v689, %v690
  %v692 = vsel %vm570, %v567, 0.0
  %v693 = vadd.f32 %v691, %v692
  %v694 = vsel %vm570, %v568, 0.0
  %v695 = vadd.f32 %v693, %v694
  %v696 = vsel %vm570, %v569, 0.0
  %v697 = vadd.f32 %v695, %v696
  %v698 = vrot.slane %v697, 4
  %v699 = vadd.f32 %v697, %v698
  %v700 = vrot.slane %v699, 2
  %v701 = vadd.f32 %v699, %v700
  %v702 = vrot.slane %v701, 1
  %v703 = vadd.f32 %v701, %v702
  %v704 = vmul.f32 %v703, 0.001953125
  %v705 = vsub.f32 %v506, %v704
  %v706 = vsub.f32 %v507, %v704
  %v707 = vsub.f32 %v508, %v704
  %v708 = vsub.f32 %v509, %v704
  %v709 = vsub.f32 %v510, %v704
  %v710 = vsub.f32 %v511, %v704
  %v711 = vsub.f32 %v512, %v704
  %v712 = vsub.f32 %v513, %v704
  %v713 = vsub.f32 %v514, %v704
  %v714 = vsub.f32 %v515, %v704
  %v715 = vsub.f32 %v516, %v704
  %v716 = vsub.f32 %v517, %v704
  %v717 = vsub.f32 %v518, %v704
  %v718 = vsub.f32 %v519, %v704
  %v719 = vsub.f32 %v520, %v704
  %v720 = vsub.f32 %v521, %v704
  %v721 = vsub.f32 %v522, %v704
  %v722 = vsub.f32 %v523, %v704
  %v723 = vsub.f32 %v524, %v704
  %v724 = vsub.f32 %v525, %v704
  %v725 = vsub.f32 %v526, %v704
  %v726 = vsub.f32 %v527, %v704
  %v727 = vsub.f32 %v528, %v704
  %v728 = vsub.f32 %v529, %v704
  %v729 = vsub.f32 %v530, %v704
  %v730 = vsub.f32 %v531, %v704
  %v731 = vsub.f32 %v532, %v704
  %v732 = vsub.f32 %v533, %v704
  %v733 = vsub.f32 %v534, %v704
  %v734 = vsub.f32 %v535, %v704
  %v735 = vsub.f32 %v536, %v704
  %v736 = vsub.f32 %v537, %v704
  %v737 = vsub.f32 %v538, %v704
  %v738 = vsub.f32 %v539, %v704
  %v739 = vsub.f32 %v540, %v704
  %v740 = vsub.f32 %v541, %v704
  %v741 = vsub.f32 %v542, %v704
  %v742 = vsub.f32 %v543, %v704
  %v743 = vsub.f32 %v544, %v704
  %v744 = vsub.f32 %v545, %v704
  %v745 = vsub.f32 %v546, %v704
  %v746 = vsub.f32 %v547, %v704
  %v747 = vsub.f32 %v548, %v704
  %v748 = vsub.f32 %v549, %v704
  %v749 = vsub.f32 %v550, %v704
  %v750 = vsub.f32 %v551, %v704
  %v751 = vsub.f32 %v552, %v704
  %v752 = vsub.f32 %v553, %v704
  %v753 = vsub.f32 %v554, %v704
  %v754 = vsub.f32 %v555, %v704
  %v755 = vsub.f32 %v556, %v704
  %v756 = vsub.f32 %v557, %v704
  %v757 = vsub.f32 %v558, %v704
  %v758 = vsub.f32 %v559, %v704
  %v759 = vsub.f32 %v560, %v704
  %v760 = vsub.f32 %v561, %v704
  %v761 = vsub.f32 %v562, %v704
  %v762 = vsub.f32 %v563, %v704
  %v763 = vsub.f32 %v564, %v704
  %v764 = vsub.f32 %v565, %v704
  %v765 = vsub.f32 %v566, %v704
  %v766 = vsub.f32 %v567, %v704
  %v767 = vsub.f32 %v568, %v704
  %v768 = vsub.f32 %v569, %v704
  %v769 = vmul.f32 %v705, %v705
  %v770 = vmul.f32 %v706, %v706
  %v771 = vmul.f32 %v707, %v707
  %v772 = vmul.f32 %v708, %v708
  %v773 = vmul.f32 %v709, %v709
  %v774 = vmul.f32 %v710, %v710
  %v775 = vmul.f32 %v711, %v711
  %v776 = vmul.f32 %v712, %v712
  %v777 = vmul.f32 %v713, %v713
  %v778 = vmul.f32 %v714, %v714
  %v779 = vmul.f32 %v715, %v715
  %v780 = vmul.f32 %v716, %v716
  %v781 = vmul.f32 %v717, %v717
  %v782 = vmul.f32 %v718, %v718
  %v783 = vmul.f32 %v719, %v719
  %v784 = vmul.f32 %v720, %v720
  %v785 = vmul.f32 %v721, %v721
  %v786 = vmul.f32 %v722, %v722
  %v787 = vmul.f32 %v723, %v723
  %v788 = vmul.f32 %v724, %v724
  %v789 = vmul.f32 %v725, %v725
  %v790 = vmul.f32 %v726, %v726
  %v791 = vmul.f32 %v727, %v727
  %v792 = vmul.f32 %v728, %v728
  %v793 = vmul.f32 %v729, %v729
  %v794 = vmul.f32 %v730, %v730
  %v795 = vmul.f32 %v731, %v731
  %v796 = vmul.f32 %v732, %v732
  %v797 = vmul.f32 %v733, %v733
  %v798 = vmul.f32 %v734, %v734
  %v799 = vmul.f32 %v735, %v735
  %v800 = vmul.f32 %v736, %v736
  %v801 = vmul.f32 %v737, %v737
  %v802 = vmul.f32 %v738, %v738
  %v803 = vmul.f32 %v739, %v739
  %v804 = vmul.f32 %v740, %v740
  %v805 = vmul.f32 %v741, %v741
  %v806 = vmul.f32 %v742, %v742
  %v807 = vmul.f32 %v743, %v743
  %v808 = vmul.f32 %v744, %v744
  %v809 = vmul.f32 %v745, %v745
  %v810 = vmul.f32 %v746, %v746
  %v811 = vmul.f32 %v747, %v747
  %v812 = vmul.f32 %v748, %v748
  %v813 = vmul.f32 %v749, %v749
  %v814 = vmul.f32 %v750, %v750
  %v815 = vmul.f32 %v751, %v751
  %v816 = vmul.f32 %v752, %v752
  %v817 = vmul.f32 %v753, %v753
  %v818 = vmul.f32 %v754, %v754
  %v819 = vmul.f32 %v755, %v755
  %v820 = vmul.f32 %v756, %v756
  %v821 = vmul.f32 %v757, %v757
  %v822 = vmul.f32 %v758, %v758
  %v823 = vmul.f32 %v759, %v759
  %v824 = vmul.f32 %v760, %v760
  %v825 = vmul.f32 %v761, %v761
  %v826 = vmul.f32 %v762, %v762
  %v827 = vmul.f32 %v763, %v763
  %v828 = vmul.f32 %v764, %v764
  %v829 = vmul.f32 %v765, %v765
  %v830 = vmul.f32 %v766, %v766
  %v831 = vmul.f32 %v767, %v767
  %v832 = vmul.f32 %v768, %v768
  %v833 = vsel %vm570, %v769, 0.0
  %v834 = vsel %vm570, %v770, 0.0
  %v835 = vadd.f32 %v833, %v834
  %v836 = vsel %vm570, %v771, 0.0
  %v837 = vadd.f32 %v835, %v836
  %v838 = vsel %vm570, %v772, 0.0
  %v839 = vadd.f32 %v837, %v838
  %v840 = vsel %vm570, %v773, 0.0
  %v841 = vadd.f32 %v839, %v840
  %v842 = vsel %vm570, %v774, 0.0
  %v843 = vadd.f32 %v841, %v842
  %v844 = vsel %vm570, %v775, 0.0
  %v845 = vadd.f32 %v843, %v844
  %v846 = vsel %vm570, %v776, 0.0
  %v847 = vadd.f32 %v845, %v846
  %v848 = vsel %vm570, %v777, 0.0
  %v849 = vadd.f32 %v847, %v848
  %v850 = vsel %vm570, %v778, 0.0
  %v851 = vadd.f32 %v849, %v850
  %v852 = vsel %vm570, %v779, 0.0
  %v853 = vadd.f32 %v851, %v852
  %v854 = vsel %vm570, %v780, 0.0
  %v855 = vadd.f32 %v853, %v854
  %v856 = vsel %vm570, %v781, 0.0
  %v857 = vadd.f32 %v855, %v856
  %v858 = vsel %vm570, %v782, 0.0
  %v859 = vadd.f32 %v857, %v858
  %v860 = vsel %vm570, %v783, 0.0
  %v861 = vadd.f32 %v859, %v860
  %v862 = vsel %vm570, %v784, 0.0
  %v863 = vadd.f32 %v861, %v862
  %v864 = vsel %vm570, %v785, 0.0
  %v865 = vadd.f32 %v863, %v864
  %v866 = vsel %vm570, %v786, 0.0
  %v867 = vadd.f32 %v865, %v866
  %v868 = vsel %vm570, %v787, 0.0
  %v869 = vadd.f32 %v867, %v868
  %v870 = vsel %vm570, %v788, 0.0
  %v871 = vadd.f32 %v869, %v870
  %v872 = vsel %vm570, %v789, 0.0
  %v873 = vadd.f32 %v871, %v872
  %v874 = vsel %vm570, %v790, 0.0
  %v875 = vadd.f32 %v873, %v874
  %v876 = vsel %vm570, %v791, 0.0
  %v877 = vadd.f32 %v875, %v876
  %v878 = vsel %vm570, %v792, 0.0
  %v879 = vadd.f32 %v877, %v878
  %v880 = vsel %vm570, %v793, 0.0
  %v881 = vadd.f32 %v879, %v880
  %v882 = vsel %vm570, %v794, 0.0
  %v883 = vadd.f32 %v881, %v882
  %v884 = vsel %vm570, %v795, 0.0
  %v885 = vadd.f32 %v883, %v884
  %v886 = vsel %vm570, %v796, 0.0
  %v887 = vadd.f32 %v885, %v886
  %v888 = vsel %vm570, %v797, 0.0
  %v889 = vadd.f32 %v887, %v888
  %v890 = vsel %vm570, %v798, 0.0
  %v891 = vadd.f32 %v889, %v890
  %v892 = vsel %vm570, %v799, 0.0
  %v893 = vadd.f32 %v891, %v892
  %v894 = vsel %vm570, %v800, 0.0
  %v895 = vadd.f32 %v893, %v894
  %v896 = vsel %vm570, %v801, 0.0
  %v897 = vadd.f32 %v895, %v896
  %v898 = vsel %vm570, %v802, 0.0
  %v899 = vadd.f32 %v897, %v898
  %v900 = vsel %vm570, %v803, 0.0
  %v901 = vadd.f32 %v899, %v900
  %v902 = vsel %vm570, %v804, 0.0
  %v903 = vadd.f32 %v901, %v902
  %v904 = vsel %vm570, %v805, 0.0
  %v905 = vadd.f32 %v903, %v904
  %v906 = vsel %vm570, %v806, 0.0
  %v907 = vadd.f32 %v905, %v906
  %v908 = vsel %vm570, %v807, 0.0
  %v909 = vadd.f32 %v907, %v908
  %v910 = vsel %vm570, %v808, 0.0
  %v911 = vadd.f32 %v909, %v910
  %v912 = vsel %vm570, %v809, 0.0
  %v913 = vadd.f32 %v911, %v912
  %v914 = vsel %vm570, %v810, 0.0
  %v915 = vadd.f32 %v913, %v914
  %v916 = vsel %vm570, %v811, 0.0
  %v917 = vadd.f32 %v915, %v916
  %v918 = vsel %vm570, %v812, 0.0
  %v919 = vadd.f32 %v917, %v918
  %v920 = vsel %vm570, %v813, 0.0
  %v921 = vadd.f32 %v919, %v920
  %v922 = vsel %vm570, %v814, 0.0
  %v923 = vadd.f32 %v921, %v922
  %v924 = vsel %vm570, %v815, 0.0
  %v925 = vadd.f32 %v923, %v924
  %v926 = vsel %vm570, %v816, 0.0
  %v927 = vadd.f32 %v925, %v926
  %v928 = vsel %vm570, %v817, 0.0
  %v929 = vadd.f32 %v927, %v928
  %v930 = vsel %vm570, %v818, 0.0
  %v931 = vadd.f32 %v929, %v930
  %v932 = vsel %vm570, %v819, 0.0
  %v933 = vadd.f32 %v931, %v932
  %v934 = vsel %vm570, %v820, 0.0
  %v935 = vadd.f32 %v933, %v934
  %v936 = vsel %vm570, %v821, 0.0
  %v937 = vadd.f32 %v935, %v936
  %v938 = vsel %vm570, %v822, 0.0
  %v939 = vadd.f32 %v937, %v938
  %v940 = vsel %vm570, %v823, 0.0
  %v941 = vadd.f32 %v939, %v940
  %v942 = vsel %vm570, %v824, 0.0
  %v943 = vadd.f32 %v941, %v942
  %v944 = vsel %vm570, %v825, 0.0
  %v945 = vadd.f32 %v943, %v944
  %v946 = vsel %vm570, %v826, 0.0
  %v947 = vadd.f32 %v945, %v946
  %v948 = vsel %vm570, %v827, 0.0
  %v949 = vadd.f32 %v947, %v948
  %v950 = vsel %vm570, %v828, 0.0
  %v951 = vadd.f32 %v949, %v950
  %v952 = vsel %vm570, %v829, 0.0
  %v953 = vadd.f32 %v951, %v952
  %v954 = vsel %vm570, %v830, 0.0
  %v955 = vadd.f32 %v953, %v954
  %v956 = vsel %vm570, %v831, 0.0
  %v957 = vadd.f32 %v955, %v956
  %v958 = vsel %vm570, %v832, 0.0
  %v959 = vadd.f32 %v957, %v958
  %v960 = vrot.slane %v959, 4
  %v961 = vadd.f32 %v959, %v960
  %v962 = vrot.slane %v961, 2
  %v963 = vadd.f32 %v961, %v962
  %v964 = vrot.slane %v963, 1
  %v965 = vadd.f32 %v963, %v964
  %v966 = vmul.f32 %v965, 0.001953125
  %v967 = vadd.f32 %v966, 1e-05
  %v968 = vrsqrt.pop %v967
  %v969 = vmul.f32 %v968, %v967
  %v970 = vmul.f32 %v969, %v968
  %v971 = vmul.f32 0.5, %v970
  %v972 = vsub.f32 1.5, %v971
  %v973 = vmul.f32 %v968, %v972
  %vm974 = vweird.f32 %v967
  %vm975 = vweird.f32 %v968
  %vm976 = vmor %vm974, %vm975
  %v977 = vsel %vm976, %v968, %v973
  %v978 = vmul.f32 %v101, %v977
  %v979 = vperm.slane %v978, 0
  %v980 = vmul.f32 %v705, %v979
  %v981 = vmul.f32 %v706, %v979
  %v982 = vmul.f32 %v707, %v979
  %v983 = vmul.f32 %v708, %v979
  %v984 = vmul.f32 %v709, %v979
  %v985 = vmul.f32 %v710, %v979
  %v986 = vmul.f32 %v711, %v979
  %v987 = vmul.f32 %v712, %v979
  %v988 = vmul.f32 %v713, %v979
  %v989 = vmul.f32 %v714, %v979
  %v990 = vmul.f32 %v715, %v979
  %v991 = vmul.f32 %v716, %v979
  %v992 = vmul.f32 %v717, %v979
  %v993 = vmul.f32 %v718, %v979
  %v994 = vmul.f32 %v719, %v979
  %v995 = vmul.f32 %v720, %v979
  %v996 = vmul.f32 %v721, %v979
  %v997 = vmul.f32 %v722, %v979
  %v998 = vmul.f32 %v723, %v979
  %v999 = vmul.f32 %v724, %v979
  %v1000 = vmul.f32 %v725, %v979
  %v1001 = vmul.f32 %v726, %v979
  %v1002 = vmul.f32 %v727, %v979
  %v1003 = vmul.f32 %v728, %v979
  %v1004 = vmul.f32 %v729, %v979
  %v1005 = vmul.f32 %v730, %v979
  %v1006 = vmul.f32 %v731, %v979
  %v1007 = vmul.f32 %v732, %v979
  %v1008 = vmul.f32 %v733, %v979
  %v1009 = vmul.f32 %v734, %v979
  %v1010 = vmul.f32 %v735, %v979
  %v1011 = vmul.f32 %v736, %v979
  %v1012 = vmul.f32 %v737, %v979
  %v1013 = vmul.f32 %v738, %v979
  %v1014 = vmul.f32 %v739, %v979
  %v1015 = vmul.f32 %v740, %v979
  %v1016 = vmul.f32 %v741, %v979
  %v1017 = vmul.f32 %v742, %v979
  %v1018 = vmul.f32 %v743, %v979
  %v1019 = vmul.f32 %v744, %v979
  %v1020 = vmul.f32 %v745, %v979
  %v1021 = vmul.f32 %v746, %v979
  %v1022 = vmul.f32 %v747, %v979
  %v1023 = vmul.f32 %v748, %v979
  %v1024 = vmul.f32 %v749, %v979
  %v1025 = vmul.f32 %v750, %v979
  %v1026 = vmul.f32 %v751, %v979
  %v1027 = vmul.f32 %v752, %v979
  %v1028 = vmul.f32 %v753, %v979
  %v1029 = vmul.f32 %v754, %v979
  %v1030 = vmul.f32 %v755, %v979
  %v1031 = vmul.f32 %v756, %v979
  %v1032 = vmul.f32 %v757, %v979
  %v1033 = vmul.f32 %v758, %v979
  %v1034 = vmul.f32 %v759, %v979
  %v1035 = vmul.f32 %v760, %v979
  %v1036 = vmul.f32 %v761, %v979
  %v1037 = vmul.f32 %v762, %v979
  %v1038 = vmul.f32 %v763, %v979
  %v1039 = vmul.f32 %v764, %v979
  %v1040 = vmul.f32 %v765, %v979
  %v1041 = vmul.f32 %v766, %v979
  %v1042 = vmul.f32 %v767, %v979
  %v1043 = vmul.f32 %v768, %v979
  %v1044 = vperm.slane %v102, 0
  %v1045 = vadd.f32 %v980, %v1044
  %v1046 = vadd.f32 %v981, %v1044
  %v1047 = vadd.f32 %v982, %v1044
  %v1048 = vadd.f32 %v983, %v1044
  %v1049 = vadd.f32 %v984, %v1044
  %v1050 = vadd.f32 %v985, %v1044
  %v1051 = vadd.f32 %v986, %v1044
  %v1052 = vadd.f32 %v987, %v1044
  %v1053 = vadd.f32 %v988, %v1044
  %v1054 = vadd.f32 %v989, %v1044
  %v1055 = vadd.f32 %v990, %v1044
  %v1056 = vadd.f32 %v991, %v1044
  %v1057 = vadd.f32 %v992, %v1044
  %v1058 = vadd.f32 %v993, %v1044
  %v1059 = vadd.f32 %v994, %v1044
  %v1060 = vadd.f32 %v995, %v1044
  %v1061 = vadd.f32 %v996, %v1044
  %v1062 = vadd.f32 %v997, %v1044
  %v1063 = vadd.f32 %v998, %v1044
  %v1064 = vadd.f32 %v999, %v1044
  %v1065 = vadd.f32 %v1000, %v1044
  %v1066 = vadd.f32 %v1001, %v1044
  %v1067 = vadd.f32 %v1002, %v1044
  %v1068 = vadd.f32 %v1003, %v1044
  %v1069 = vadd.f32 %v1004, %v1044
  %v1070 = vadd.f32 %v1005, %v1044
  %v1071 = vadd.f32 %v1006, %v1044
  %v1072 = vadd.f32 %v1007, %v1044
  %v1073 = vadd.f32 %v1008, %v1044
  %v1074 = vadd.f32 %v1009, %v1044
  %v1075 = vadd.f32 %v1010, %v1044
  %v1076 = vadd.f32 %v1011, %v1044
  %v1077 = vadd.f32 %v1012, %v1044
  %v1078 = vadd.f32 %v1013, %v1044
  %v1079 = vadd.f32 %v1014, %v1044
  %v1080 = vadd.f32 %v1015, %v1044
  %v1081 = vadd.f32 %v1016, %v1044
  %v1082 = vadd.f32 %v1017, %v1044
  %v1083 = vadd.f32 %v1018, %v1044
  %v1084 = vadd.f32 %v1019, %v1044
  %v1085 = vadd.f32 %v1020, %v1044
  %v1086 = vadd.f32 %v1021, %v1044
  %v1087 = vadd.f32 %v1022, %v1044
  %v1088 = vadd.f32 %v1023, %v1044
  %v1089 = vadd.f32 %v1024, %v1044
  %v1090 = vadd.f32 %v1025, %v1044
  %v1091 = vadd.f32 %v1026, %v1044
  %v1092 = vadd.f32 %v1027, %v1044
  %v1093 = vadd.f32 %v1028, %v1044
  %v1094 = vadd.f32 %v1029, %v1044
  %v1095 = vadd.f32 %v1030, %v1044
  %v1096 = vadd.f32 %v1031, %v1044
  %v1097 = vadd.f32 %v1032, %v1044
  %v1098 = vadd.f32 %v1033, %v1044
  %v1099 = vadd.f32 %v1034, %v1044
  %v1100 = vadd.f32 %v1035, %v1044
  %v1101 = vadd.f32 %v1036, %v1044
  %v1102 = vadd.f32 %v1037, %v1044
  %v1103 = vadd.f32 %v1038, %v1044
  %v1104 = vadd.f32 %v1039, %v1044
  %v1105 = vadd.f32 %v1040, %v1044
  %v1106 = vadd.f32 %v1041, %v1044
  %v1107 = vadd.f32 %v1042, %v1044
  %v1108 = vadd.f32 %v1043, %v1044
  %1109 = vst.msk [vmem:[#allocation2] sm:$0xff] %vm570, 0.0
  %vm1110 = vcmask 57344
  %1111 = vst.msk [vmem:[#allocation2 + $0x8] sm:$0x1] %vm1110, 0.0
  %1112 = vst.msk [vmem:[#allocation2 + $0x10] sm:$0xff] %vm570, 0.0
  %1113 = vst.msk [vmem:[#allocation2 + $0x18] sm:$0x1] %vm1110, 0.0
  %1114 = vst.msk [vmem:[#allocation2 + $0x20] sm:$0xff] %vm570, 0.0
  %1115 = vst.msk [vmem:[#allocation2 + $0x28] sm:$0x1] %vm1110, 0.0
  %1116 = vst.msk [vmem:[#allocation2 + $0x30] sm:$0xff] %vm570, 0.0
  %1117 = vst.msk [vmem:[#allocation2 + $0x38] sm:$0x1] %vm1110, 0.0
  %1118 = vst.msk [vmem:[#allocation2 + $0x40] sm:$0xff] %vm570, 0.0
  %1119 = vst.msk [vmem:[#allocation2 + $0x48] sm:$0x1] %vm1110, 0.0
  %1120 = vst.msk [vmem:[#allocation2 + $0x50] sm:$0xff] %vm570, 0.0
  %1121 = vst.msk [vmem:[#allocation2 + $0x58] sm:$0x1] %vm1110, 0.0
  %1122 = vst.msk [vmem:[#allocation2 + $0x60] sm:$0xff] %vm570, 0.0
  %1123 = vst.msk [vmem:[#allocation2 + $0x68] sm:$0x1] %vm1110, 0.0
  %1124 = vst.msk [vmem:[#allocation2 + $0x70] sm:$0xff] %vm570, 0.0
  %1125 = vst.msk [vmem:[#allocation2 + $0x78] sm:$0x1] %vm1110, 0.0
  %1126 = vst.msk [vmem:[#allocation2 + $0x80] sm:$0xff] %vm570, 0.0
  %1127 = vst.msk [vmem:[#allocation2 + $0x88] sm:$0x1] %vm1110, 0.0
  %1128 = vst.msk [vmem:[#allocation2 + $0x90] sm:$0xff] %vm570, 0.0
  %1129 = vst.msk [vmem:[#allocation2 + $0x98] sm:$0x1] %vm1110, 0.0
  %1130 = vst.msk [vmem:[#allocation2 + $0xa0] sm:$0xff] %vm570, 0.0
  %1131 = vst.msk [vmem:[#allocation2 + $0xa8] sm:$0x1] %vm1110, 0.0
  %1132 = vst.msk [vmem:[#allocation2 + $0xb0] sm:$0xff] %vm570, 0.0
  %1133 = vst.msk [vmem:[#allocation2 + $0xb8] sm:$0x1] %vm1110, 0.0
  %1134 = vst.msk [vmem:[#allocation2 + $0xc0] sm:$0xff] %vm570, 0.0
  %1135 = vst.msk [vmem:[#allocation2 + $0xc8] sm:$0x1] %vm1110, 0.0
  %1136 = vst.msk [vmem:[#allocation2 + $0xd0] sm:$0xff] %vm570, 0.0
  %1137 = vst.msk [vmem:[#allocation2 + $0xd8] sm:$0x1] %vm1110, 0.0
  %1138 = vst.msk [vmem:[#allocation2 + $0xe0] sm:$0xff] %vm570, 0.0
  %1139 = vst.msk [vmem:[#allocation2 + $0xe8] sm:$0x1] %vm1110, 0.0
  %1140 = vst.msk [vmem:[#allocation2 + $0xf0] sm:$0xff] %vm570, 0.0
  %1141 = vst.msk [vmem:[#allocation2 + $0xf8] sm:$0x1] %vm1110, 0.0
  %1142 = vst.msk [vmem:[#allocation2 + $0x100] sm:$0xff] %vm570, 0.0
  %1143 = vst.msk [vmem:[#allocation2 + $0x108] sm:$0x1] %vm1110, 0.0
  %1144 = vst.msk [vmem:[#allocation2 + $0x110] sm:$0xff] %vm570, 0.0
  %1145 = vst.msk [vmem:[#allocation2 + $0x118] sm:$0x1] %vm1110, 0.0
  %1146 = vst.msk [vmem:[#allocation2 + $0x120] sm:$0xff] %vm570, 0.0
  %1147 = vst.msk [vmem:[#allocation2 + $0x128] sm:$0x1] %vm1110, 0.0
  %1148 = vst.msk [vmem:[#allocation2 + $0x130] sm:$0xff] %vm570, 0.0
  %1149 = vst.msk [vmem:[#allocation2 + $0x138] sm:$0x1] %vm1110, 0.0
  %1150 = vst.msk [vmem:[#allocation2 + $0x140] sm:$0xff] %vm570, 0.0
  %1151 = vst.msk [vmem:[#allocation2 + $0x148] sm:$0x1] %vm1110, 0.0
  %1152 = vst.msk [vmem:[#allocation2 + $0x150] sm:$0xff] %vm570, 0.0
  %1153 = vst.msk [vmem:[#allocation2 + $0x158] sm:$0x1] %vm1110, 0.0
  %1154 = vst.msk [vmem:[#allocation2 + $0x160] sm:$0xff] %vm570, 0.0
  %1155 = vst.msk [vmem:[#allocation2 + $0x168] sm:$0x1] %vm1110, 0.0
  %1156 = vst.msk [vmem:[#allocation2 + $0x170] sm:$0xff] %vm570, 0.0
  %1157 = vst.msk [vmem:[#allocation2 + $0x178] sm:$0x1] %vm1110, 0.0
  %1158 = vst.msk [vmem:[#allocation2 + $0x180] sm:$0xff] %vm570, 0.0
  %1159 = vst.msk [vmem:[#allocation2 + $0x188] sm:$0x1] %vm1110, 0.0
  %1160 = vst.msk [vmem:[#allocation2 + $0x190] sm:$0xff] %vm570, 0.0
  %1161 = vst.msk [vmem:[#allocation2 + $0x198] sm:$0x1] %vm1110, 0.0
  %1162 = vst.msk [vmem:[#allocation2 + $0x1a0] sm:$0xff] %vm570, 0.0
  %1163 = vst.msk [vmem:[#allocation2 + $0x1a8] sm:$0x1] %vm1110, 0.0
  %1164 = vst.msk [vmem:[#allocation2 + $0x1b0] sm:$0xff] %vm570, 0.0
  %1165 = vst.msk [vmem:[#allocation2 + $0x1b8] sm:$0x1] %vm1110, 0.0
  %1166 = vst.msk [vmem:[#allocation2 + $0x1c0] sm:$0xff] %vm570, 0.0
  %1167 = vst.msk [vmem:[#allocation2 + $0x1c8] sm:$0x1] %vm1110, 0.0
  %1168 = vst.msk [vmem:[#allocation2 + $0x1d0] sm:$0xff] %vm570, 0.0
  %1169 = vst.msk [vmem:[#allocation2 + $0x1d8] sm:$0x1] %vm1110, 0.0
  %1170 = vst.msk [vmem:[#allocation2 + $0x1e0] sm:$0xff] %vm570, 0.0
  %1171 = vst.msk [vmem:[#allocation2 + $0x1e8] sm:$0x1] %vm1110, 0.0
  %1172 = vst.msk [vmem:[#allocation2 + $0x1f0] sm:$0xff] %vm570, 0.0
  %1173 = vst.msk [vmem:[#allocation2 + $0x1f8] sm:$0x1] %vm1110, 0.0
  %1174 = vst.msk [vmem:[#allocation2 + $0x200] sm:$0xff] %vm570, 0.0
  %1175 = vst.msk [vmem:[#allocation2 + $0x208] sm:$0x1] %vm1110, 0.0
  %1176 = vst.msk [vmem:[#allocation2 + $0x210] sm:$0xff] %vm570, 0.0
  %1177 = vst.msk [vmem:[#allocation2 + $0x218] sm:$0x1] %vm1110, 0.0
  %1178 = vst.msk [vmem:[#allocation2 + $0x220] sm:$0xff] %vm570, 0.0
  %1179 = vst.msk [vmem:[#allocation2 + $0x228] sm:$0x1] %vm1110, 0.0
  %1180 = vst.msk [vmem:[#allocation2 + $0x230] sm:$0xff] %vm570, 0.0
  %1181 = vst.msk [vmem:[#allocation2 + $0x238] sm:$0x1] %vm1110, 0.0
  %1182 = vst.msk [vmem:[#allocation3] sm:$0xff] %vm570, 0.0
  %1183 = vst.msk [vmem:[#allocation3 + $0x8] sm:$0x1] %vm1110, 0.0
  %1184 = vst.msk [vmem:[#allocation3 + $0x10] sm:$0xff] %vm570, 0.0
  %1185 = vst.msk [vmem:[#allocation3 + $0x18] sm:$0x1] %vm1110, 0.0
  %1186 = vst.msk [vmem:[#allocation3 + $0x20] sm:$0xff] %vm570, 0.0
  %1187 = vst.msk [vmem:[#allocation3 + $0x28] sm:$0x1] %vm1110, 0.0
  %1188 = vst.msk [vmem:[#allocation3 + $0x30] sm:$0xff] %vm570, 0.0
  %1189 = vst.msk [vmem:[#allocation3 + $0x38] sm:$0x1] %vm1110, 0.0
  %1190 = vst.msk [vmem:[#allocation3 + $0x40] sm:$0xff] %vm570, 0.0
  %1191 = vst.msk [vmem:[#allocation3 + $0x48] sm:$0x1] %vm1110, 0.0
  %1192 = vst.msk [vmem:[#allocation3 + $0x50] sm:$0xff] %vm570, 0.0
  %1193 = vst.msk [vmem:[#allocation3 + $0x58] sm:$0x1] %vm1110, 0.0
  %1194 = vst.msk [vmem:[#allocation3 + $0x60] sm:$0xff] %vm570, 0.0
  %1195 = vst.msk [vmem:[#allocation3 + $0x68] sm:$0x1] %vm1110, 0.0
  %1196 = vst.msk [vmem:[#allocation3 + $0x70] sm:$0xff] %vm570, 0.0
  %1197 = vst.msk [vmem:[#allocation3 + $0x78] sm:$0x1] %vm1110, 0.0
  %1198 = vst.msk [vmem:[#allocation3 + $0x80] sm:$0xff] %vm570, 0.0
  %1199 = vst.msk [vmem:[#allocation3 + $0x88] sm:$0x1] %vm1110, 0.0
  %1200 = vst.msk [vmem:[#allocation3 + $0x90] sm:$0xff] %vm570, 0.0
  %1201 = vst.msk [vmem:[#allocation3 + $0x98] sm:$0x1] %vm1110, 0.0
  %1202 = vst.msk [vmem:[#allocation3 + $0xa0] sm:$0xff] %vm570, 0.0
  %1203 = vst.msk [vmem:[#allocation3 + $0xa8] sm:$0x1] %vm1110, 0.0
  %1204 = vst.msk [vmem:[#allocation3 + $0xb0] sm:$0xff] %vm570, 0.0
  %1205 = vst.msk [vmem:[#allocation3 + $0xb8] sm:$0x1] %vm1110, 0.0
  %1206 = vst.msk [vmem:[#allocation3 + $0xc0] sm:$0xff] %vm570, 0.0
  %1207 = vst.msk [vmem:[#allocation3 + $0xc8] sm:$0x1] %vm1110, 0.0
  %1208 = vst.msk [vmem:[#allocation3 + $0xd0] sm:$0xff] %vm570, 0.0
  %1209 = vst.msk [vmem:[#allocation3 + $0xd8] sm:$0x1] %vm1110, 0.0
  %1210 = vst.msk [vmem:[#allocation3 + $0xe0] sm:$0xff] %vm570, 0.0
  %1211 = vst.msk [vmem:[#allocation3 + $0xe8] sm:$0x1] %vm1110, 0.0
  %1212 = vst.msk [vmem:[#allocation3 + $0xf0] sm:$0xff] %vm570, 0.0
  %1213 = vst.msk [vmem:[#allocation3 + $0xf8] sm:$0x1] %vm1110, 0.0
  %1214 = vst.msk [vmem:[#allocation3 + $0x100] sm:$0xff] %vm570, 0.0
  %1215 = vst.msk [vmem:[#allocation3 + $0x108] sm:$0x1] %vm1110, 0.0
  %1216 = vst.msk [vmem:[#allocation3 + $0x110] sm:$0xff] %vm570, 0.0
  %1217 = vst.msk [vmem:[#allocation3 + $0x118] sm:$0x1] %vm1110, 0.0
  %1218 = vst.msk [vmem:[#allocation3 + $0x120] sm:$0xff] %vm570, 0.0
  %1219 = vst.msk [vmem:[#allocation3 + $0x128] sm:$0x1] %vm1110, 0.0
  %1220 = vst.msk [vmem:[#allocation3 + $0x130] sm:$0xff] %vm570, 0.0
  %1221 = vst.msk [vmem:[#allocation3 + $0x138] sm:$0x1] %vm1110, 0.0
  %1222 = vst.msk [vmem:[#allocation3 + $0x140] sm:$0xff] %vm570, 0.0
  %1223 = vst.msk [vmem:[#allocation3 + $0x148] sm:$0x1] %vm1110, 0.0
  %1224 = vst.msk [vmem:[#allocation3 + $0x150] sm:$0xff] %vm570, 0.0
  %1225 = vst.msk [vmem:[#allocation3 + $0x158] sm:$0x1] %vm1110, 0.0
  %1226 = vst.msk [vmem:[#allocation3 + $0x160] sm:$0xff] %vm570, 0.0
  %1227 = vst.msk [vmem:[#allocation3 + $0x168] sm:$0x1] %vm1110, 0.0
  %1228 = vst.msk [vmem:[#allocation3 + $0x170] sm:$0xff] %vm570, 0.0
  %1229 = vst.msk [vmem:[#allocation3 + $0x178] sm:$0x1] %vm1110, 0.0
  %1230 = vst.msk [vmem:[#allocation3 + $0x180] sm:$0xff] %vm570, 0.0
  %1231 = vst.msk [vmem:[#allocation3 + $0x188] sm:$0x1] %vm1110, 0.0
  %1232 = vst.msk [vmem:[#allocation3 + $0x190] sm:$0xff] %vm570, 0.0
  %1233 = vst.msk [vmem:[#allocation3 + $0x198] sm:$0x1] %vm1110, 0.0
  %1234 = vst.msk [vmem:[#allocation3 + $0x1a0] sm:$0xff] %vm570, 0.0
  %1235 = vst.msk [vmem:[#allocation3 + $0x1a8] sm:$0x1] %vm1110, 0.0
  %1236 = vst.msk [vmem:[#allocation3 + $0x1b0] sm:$0xff] %vm570, 0.0
  %1237 = vst.msk [vmem:[#allocation3 + $0x1b8] sm:$0x1] %vm1110, 0.0
  %1238 = vst.msk [vmem:[#allocation3 + $0x1c0] sm:$0xff] %vm570, 0.0
  %1239 = vst.msk [vmem:[#allocation3 + $0x1c8] sm:$0x1] %vm1110, 0.0
  %1240 = vst.msk [vmem:[#allocation3 + $0x1d0] sm:$0xff] %vm570, 0.0
  %1241 = vst.msk [vmem:[#allocation3 + $0x1d8] sm:$0x1] %vm1110, 0.0
  %1242 = vst.msk [vmem:[#allocation3 + $0x1e0] sm:$0xff] %vm570, 0.0
  %1243 = vst.msk [vmem:[#allocation3 + $0x1e8] sm:$0x1] %vm1110, 0.0
  %1244 = vst.msk [vmem:[#allocation3 + $0x1f0] sm:$0xff] %vm570, 0.0
  %1245 = vst.msk [vmem:[#allocation3 + $0x1f8] sm:$0x1] %vm1110, 0.0
  %1246 = vst.msk [vmem:[#allocation3 + $0x200] sm:$0xff] %vm570, 0.0
  %1247 = vst.msk [vmem:[#allocation3 + $0x208] sm:$0x1] %vm1110, 0.0
  %1248 = vst.msk [vmem:[#allocation3 + $0x210] sm:$0xff] %vm570, 0.0
  %1249 = vst.msk [vmem:[#allocation3 + $0x218] sm:$0x1] %vm1110, 0.0
  %1250 = vst.msk [vmem:[#allocation3 + $0x220] sm:$0xff] %vm570, 0.0
  %1251 = vst.msk [vmem:[#allocation3 + $0x228] sm:$0x1] %vm1110, 0.0
  %1252 = vst.msk [vmem:[#allocation3 + $0x230] sm:$0xff] %vm570, 0.0
  %1253 = vst.msk [vmem:[#allocation3 + $0x238] sm:$0x1] %vm1110, 0.0
  %s1254 = scalar_lea.vmem [#allocation3], 16
  %1255 = vst.msk [vmem:[%s1254] sm:$0xff] %vm570, %v1045
  %1256 = vst.msk [vmem:[%s1254 + $0x10] sm:$0xff] %vm570, %v1047
  %1257 = vst.msk [vmem:[%s1254 + $0x20] sm:$0xff] %vm570, %v1049
  %1258 = vst.msk [vmem:[%s1254 + $0x30] sm:$0xff] %vm570, %v1051
  %1259 = vst.msk [vmem:[%s1254 + $0x40] sm:$0xff] %vm570, %v1053
  %1260 = vst.msk [vmem:[%s1254 + $0x50] sm:$0xff] %vm570, %v1055
  %1261 = vst.msk [vmem:[%s1254 + $0x60] sm:$0xff] %vm570, %v1057
  %1262 = vst.msk [vmem:[%s1254 + $0x70] sm:$0xff] %vm570, %v1059
  %1263 = vst.msk [vmem:[%s1254 + $0x80] sm:$0xff] %vm570, %v1061
  %1264 = vst.msk [vmem:[%s1254 + $0x90] sm:$0xff] %vm570, %v1063
  %1265 = vst.msk [vmem:[%s1254 + $0xa0] sm:$0xff] %vm570, %v1065
  %1266 = vst.msk [vmem:[%s1254 + $0xb0] sm:$0xff] %vm570, %v1067
  %1267 = vst.msk [vmem:[%s1254 + $0xc0] sm:$0xff] %vm570, %v1069
  %1268 = vst.msk [vmem:[%s1254 + $0xd0] sm:$0xff] %vm570, %v1071
  %1269 = vst.msk [vmem:[%s1254 + $0xe0] sm:$0xff] %vm570, %v1073
  %1270 = vst.msk [vmem:[%s1254 + $0xf0] sm:$0xff] %vm570, %v1075
  %1271 = vst.msk [vmem:[%s1254 + $0x120] sm:$0xff] %vm570, %v1077
  %1272 = vst.msk [vmem:[%s1254 + $0x130] sm:$0xff] %vm570, %v1079
  %1273 = vst.msk [vmem:[%s1254 + $0x140] sm:$0xff] %vm570, %v1081
  %1274 = vst.msk [vmem:[%s1254 + $0x150] sm:$0xff] %vm570, %v1083
  %1275 = vst.msk [vmem:[%s1254 + $0x160] sm:$0xff] %vm570, %v1085
  %1276 = vst.msk [vmem:[%s1254 + $0x170] sm:$0xff] %vm570, %v1087
  %1277 = vst.msk [vmem:[%s1254 + $0x180] sm:$0xff] %vm570, %v1089
  %1278 = vst.msk [vmem:[%s1254 + $0x190] sm:$0xff] %vm570, %v1091
  %1279 = vst.msk [vmem:[%s1254 + $0x1a0] sm:$0xff] %vm570, %v1093
  %1280 = vst.msk [vmem:[%s1254 + $0x1b0] sm:$0xff] %vm570, %v1095
  %1281 = vst.msk [vmem:[%s1254 + $0x1c0] sm:$0xff] %vm570, %v1097
  %1282 = vst.msk [vmem:[%s1254 + $0x1d0] sm:$0xff] %vm570, %v1099
  %1283 = vst.msk [vmem:[%s1254 + $0x1e0] sm:$0xff] %vm570, %v1101
  %1284 = vst.msk [vmem:[%s1254 + $0x1f0] sm:$0xff] %vm570, %v1103
  %1285 = vst.msk [vmem:[%s1254 + $0x200] sm:$0xff] %vm570, %v1105
  %1286 = vst.msk [vmem:[%s1254 + $0x210] sm:$0xff] %vm570, %v1107
  %s1287 = scalar_lea.vmem [#allocation2], 16
  %1288 = vst.msk [vmem:[%s1287 + $0x1] sm:$0xff] %vm570, %v1046
  %1289 = vst.msk [vmem:[%s1287 + $0x11] sm:$0xff] %vm570, %v1048
  %1290 = vst.msk [vmem:[%s1287 + $0x21] sm:$0xff] %vm570, %v1050
  %1291 = vst.msk [vmem:[%s1287 + $0x31] sm:$0xff] %vm570, %v1052
  %1292 = vst.msk [vmem:[%s1287 + $0x41] sm:$0xff] %vm570, %v1054
  %1293 = vst.msk [vmem:[%s1287 + $0x51] sm:$0xff] %vm570, %v1056
  %1294 = vst.msk [vmem:[%s1287 + $0x61] sm:$0xff] %vm570, %v1058
  %1295 = vst.msk [vmem:[%s1287 + $0x71] sm:$0xff] %vm570, %v1060
  %1296 = vst.msk [vmem:[%s1287 + $0x81] sm:$0xff] %vm570, %v1062
  %1297 = vst.msk [vmem:[%s1287 + $0x91] sm:$0xff] %vm570, %v1064
  %1298 = vst.msk [vmem:[%s1287 + $0xa1] sm:$0xff] %vm570, %v1066
  %1299 = vst.msk [vmem:[%s1287 + $0xb1] sm:$0xff] %vm570, %v1068
  %1300 = vst.msk [vmem:[%s1287 + $0xc1] sm:$0xff] %vm570, %v1070
  %1301 = vst.msk [vmem:[%s1287 + $0xd1] sm:$0xff] %vm570, %v1072
  %1302 = vst.msk [vmem:[%s1287 + $0xe1] sm:$0xff] %vm570, %v1074
  %1303 = vst.msk [vmem:[%s1287 + $0xf1] sm:$0xff] %vm570, %v1076
  %1304 = vst.msk [vmem:[%s1287 + $0x121] sm:$0xff] %vm570, %v1078
  %1305 = vst.msk [vmem:[%s1287 + $0x131] sm:$0xff] %vm570, %v1080
  %1306 = vst.msk [vmem:[%s1287 + $0x141] sm:$0xff] %vm570, %v1082
  %1307 = vst.msk [vmem:[%s1287 + $0x151] sm:$0xff] %vm570, %v1084
  %1308 = vst.msk [vmem:[%s1287 + $0x161] sm:$0xff] %vm570, %v1086
  %1309 = vst.msk [vmem:[%s1287 + $0x171] sm:$0xff] %vm570, %v1088
  %1310 = vst.msk [vmem:[%s1287 + $0x181] sm:$0xff] %vm570, %v1090
  %1311 = vst.msk [vmem:[%s1287 + $0x191] sm:$0xff] %vm570, %v1092
  %1312 = vst.msk [vmem:[%s1287 + $0x1a1] sm:$0xff] %vm570, %v1094
  %1313 = vst.msk [vmem:[%s1287 + $0x1b1] sm:$0xff] %vm570, %v1096
  %1314 = vst.msk [vmem:[%s1287 + $0x1c1] sm:$0xff] %vm570, %v1098
  %1315 = vst.msk [vmem:[%s1287 + $0x1d1] sm:$0xff] %vm570, %v1100
  %1316 = vst.msk [vmem:[%s1287 + $0x1e1] sm:$0xff] %vm570, %v1102
  %1317 = vst.msk [vmem:[%s1287 + $0x1f1] sm:$0xff] %vm570, %v1104
  %1318 = vst.msk [vmem:[%s1287 + $0x201] sm:$0xff] %vm570, %v1106
  %1319 = vst.msk [vmem:[%s1287 + $0x211] sm:$0xff] %vm570, %v1108
  %v1320 = vld [vmem:[#allocation2] sm:$0xff]
  %v1321 = vld [vmem:[#allocation2 + $0x20] sm:$0xff]
  %v1322 = vld [vmem:[#allocation2 + $0x40] sm:$0xff]
  %v1323 = vld [vmem:[#allocation2 + $0x60] sm:$0xff]
  %v1324 = vld [vmem:[#allocation2 + $0x80] sm:$0xff]
  %v1325 = vld [vmem:[#allocation2 + $0xa0] sm:$0xff]
  %v1326 = vld [vmem:[#allocation2 + $0xc0] sm:$0xff]
  %v1327 = vld [vmem:[#allocation2 + $0xe0] sm:$0xff]
  %v1328 = vld [vmem:[#allocation2 + $0x120] sm:$0xff]
  %v1329 = vld [vmem:[#allocation2 + $0x140] sm:$0xff]
  %v1330 = vld [vmem:[#allocation2 + $0x160] sm:$0xff]
  %v1331 = vld [vmem:[#allocation2 + $0x180] sm:$0xff]
  %v1332 = vld [vmem:[#allocation2 + $0x1a0] sm:$0xff]
  %v1333 = vld [vmem:[#allocation2 + $0x1c0] sm:$0xff]
  %v1334 = vld [vmem:[#allocation2 + $0x1e0] sm:$0xff]
  %v1335 = vld [vmem:[#allocation2 + $0x200] sm:$0xff]
  %1336 = vst.msk [vmem:[#allocation6] sm:$0xff] %vm570, %v1320
  %1337 = vst.msk [vmem:[#allocation6 + $0x10] sm:$0xff] %vm570, %v1321
  %1338 = vst.msk [vmem:[#allocation6 + $0x20] sm:$0xff] %vm570, %v1322
  %1339 = vst.msk [vmem:[#allocation6 + $0x30] sm:$0xff] %vm570, %v1323
  %1340 = vst.msk [vmem:[#allocation6 + $0x40] sm:$0xff] %vm570, %v1324
  %1341 = vst.msk [vmem:[#allocation6 + $0x50] sm:$0xff] %vm570, %v1325
  %1342 = vst.msk [vmem:[#allocation6 + $0x60] sm:$0xff] %vm570, %v1326
  %1343 = vst.msk [vmem:[#allocation6 + $0x70] sm:$0xff] %vm570, %v1327
  %1344 = vst.msk [vmem:[#allocation6 + $0x80] sm:$0xff] %vm570, %v1328
  %1345 = vst.msk [vmem:[#allocation6 + $0x90] sm:$0xff] %vm570, %v1329
  %1346 = vst.msk [vmem:[#allocation6 + $0xa0] sm:$0xff] %vm570, %v1330
  %1347 = vst.msk [vmem:[#allocation6 + $0xb0] sm:$0xff] %vm570, %v1331
  %1348 = vst.msk [vmem:[#allocation6 + $0xc0] sm:$0xff] %vm570, %v1332
  %1349 = vst.msk [vmem:[#allocation6 + $0xd0] sm:$0xff] %vm570, %v1333
  %1350 = vst.msk [vmem:[#allocation6 + $0xe0] sm:$0xff] %vm570, %v1334
  %1351 = vst.msk [vmem:[#allocation6 + $0xf0] sm:$0xff] %vm570, %v1335
  %v1352 = vld [vmem:[#allocation3] sm:$0xff]
  %v1353 = vld [vmem:[#allocation3 + $0x20] sm:$0xff]
  %v1354 = vld [vmem:[#allocation3 + $0x40] sm:$0xff]
  %v1355 = vld [vmem:[#allocation3 + $0x60] sm:$0xff]
  %v1356 = vld [vmem:[#allocation3 + $0x80] sm:$0xff]
  %v1357 = vld [vmem:[#allocation3 + $0xa0] sm:$0xff]
  %v1358 = vld [vmem:[#allocation3 + $0xc0] sm:$0xff]
  %v1359 = vld [vmem:[#allocation3 + $0xe0] sm:$0xff]
  %v1360 = vld [vmem:[#allocation3 + $0x120] sm:$0xff]
  %v1361 = vld [vmem:[#allocation3 + $0x140] sm:$0xff]
  %v1362 = vld [vmem:[#allocation3 + $0x160] sm:$0xff]
  %v1363 = vld [vmem:[#allocation3 + $0x180] sm:$0xff]
  %v1364 = vld [vmem:[#allocation3 + $0x1a0] sm:$0xff]
  %v1365 = vld [vmem:[#allocation3 + $0x1c0] sm:$0xff]
  %v1366 = vld [vmem:[#allocation3 + $0x1e0] sm:$0xff]
  %v1367 = vld [vmem:[#allocation3 + $0x200] sm:$0xff]
  %1384 = vrot.lane.b32.xlu0 %v1352, 8
  %v1385 = vpop.permute.xlu0 %1384
  %1386 = vrot.lane.b32.xlu0 %v1353, 8
  %v1387 = vpop.permute.xlu0 %1386
  %1388 = vrot.lane.b32.xlu0 %v1354, 8
  %v1389 = vpop.permute.xlu0 %1388
  %1390 = vrot.lane.b32.xlu0 %v1355, 8
  %v1391 = vpop.permute.xlu0 %1390
  %1392 = vrot.lane.b32.xlu0 %v1356, 8
  %v1393 = vpop.permute.xlu0 %1392
  %1394 = vrot.lane.b32.xlu0 %v1357, 8
  %v1395 = vpop.permute.xlu0 %1394
  %1396 = vrot.lane.b32.xlu0 %v1358, 8
  %v1397 = vpop.permute.xlu0 %1396
  %1398 = vrot.lane.b32.xlu0 %v1359, 8
  %v1399 = vpop.permute.xlu0 %1398
  %1400 = vrot.lane.b32.xlu0 %v1360, 8
  %v1401 = vpop.permute.xlu0 %1400
  %1402 = vrot.lane.b32.xlu0 %v1361, 8
  %v1403 = vpop.permute.xlu0 %1402
  %1404 = vrot.lane.b32.xlu0 %v1362, 8
  %v1405 = vpop.permute.xlu0 %1404
  %1406 = vrot.lane.b32.xlu0 %v1363, 8
  %v1407 = vpop.permute.xlu0 %1406
  %1408 = vrot.lane.b32.xlu0 %v1364, 8
  %v1409 = vpop.permute.xlu0 %1408
  %1410 = vrot.lane.b32.xlu0 %v1365, 8
  %v1411 = vpop.permute.xlu0 %1410
  %1412 = vrot.lane.b32.xlu0 %v1366, 8
  %v1413 = vpop.permute.xlu0 %1412
  %1414 = vrot.lane.b32.xlu0 %v1367, 8
  %v1415 = vpop.permute.xlu0 %1414
  %vm1432 = vcmask 130112
  %1433 = vst.msk [vmem:[#allocation6] sm:$0xff] %vm1432, %v1385
  %1434 = vst.msk [vmem:[#allocation6 + $0x10] sm:$0xff] %vm1432, %v1387
  %1435 = vst.msk [vmem:[#allocation6 + $0x20] sm:$0xff] %vm1432, %v1389
  %1436 = vst.msk [vmem:[#allocation6 + $0x30] sm:$0xff] %vm1432, %v1391
  %1437 = vst.msk [vmem:[#allocation6 + $0x40] sm:$0xff] %vm1432, %v1393
  %1438 = vst.msk [vmem:[#allocation6 + $0x50] sm:$0xff] %vm1432, %v1395
  %1439 = vst.msk [vmem:[#allocation6 + $0x60] sm:$0xff] %vm1432, %v1397
  %1440 = vst.msk [vmem:[#allocation6 + $0x70] sm:$0xff] %vm1432, %v1399
  %1441 = vst.msk [vmem:[#allocation6 + $0x80] sm:$0xff] %vm1432, %v1401
  %1442 = vst.msk [vmem:[#allocation6 + $0x90] sm:$0xff] %vm1432, %v1403
  %1443 = vst.msk [vmem:[#allocation6 + $0xa0] sm:$0xff] %vm1432, %v1405
  %1444 = vst.msk [vmem:[#allocation6 + $0xb0] sm:$0xff] %vm1432, %v1407
  %1445 = vst.msk [vmem:[#allocation6 + $0xc0] sm:$0xff] %vm1432, %v1409
  %1446 = vst.msk [vmem:[#allocation6 + $0xd0] sm:$0xff] %vm1432, %v1411
  %1447 = vst.msk [vmem:[#allocation6 + $0xe0] sm:$0xff] %vm1432, %v1413
  %1448 = vst.msk [vmem:[#allocation6 + $0xf0] sm:$0xff] %vm1432, %v1415
  %v1449 = vld [vmem:[#allocation2 + $0x1] sm:$0xff]
  %v1450 = vld [vmem:[#allocation2 + $0x21] sm:$0xff]
  %v1451 = vld [vmem:[#allocation2 + $0x41] sm:$0xff]
  %v1452 = vld [vmem:[#allocation2 + $0x61] sm:$0xff]
  %v1453 = vld [vmem:[#allocation2 + $0x81] sm:$0xff]
  %v1454 = vld [vmem:[#allocation2 + $0xa1] sm:$0xff]
  %v1455 = vld [vmem:[#allocation2 + $0xc1] sm:$0xff]
  %v1456 = vld [vmem:[#allocation2 + $0xe1] sm:$0xff]
  %v1457 = vld [vmem:[#allocation2 + $0x121] sm:$0xff]
  %v1458 = vld [vmem:[#allocation2 + $0x141] sm:$0xff]
  %v1459 = vld [vmem:[#allocation2 + $0x161] sm:$0xff]
  %v1460 = vld [vmem:[#allocation2 + $0x181] sm:$0xff]
  %v1461 = vld [vmem:[#allocation2 + $0x1a1] sm:$0xff]
  %v1462 = vld [vmem:[#allocation2 + $0x1c1] sm:$0xff]
  %v1463 = vld [vmem:[#allocation2 + $0x1e1] sm:$0xff]
  %v1464 = vld [vmem:[#allocation2 + $0x201] sm:$0xff]
  %1481 = vrot.lane.b32.xlu0 %v1449, 16
  %v1482 = vpop.permute.xlu0 %1481
  %1483 = vrot.lane.b32.xlu0 %v1450, 16
  %v1484 = vpop.permute.xlu0 %1483
  %1485 = vrot.lane.b32.xlu0 %v1451, 16
  %v1486 = vpop.permute.xlu0 %1485
  %1487 = vrot.lane.b32.xlu0 %v1452, 16
  %v1488 = vpop.permute.xlu0 %1487
  %1489 = vrot.lane.b32.xlu0 %v1453, 16
  %v1490 = vpop.permute.xlu0 %1489
  %1491 = vrot.lane.b32.xlu0 %v1454, 16
  %v1492 = vpop.permute.xlu0 %1491
  %1493 = vrot.lane.b32.xlu0 %v1455, 16
  %v1494 = vpop.permute.xlu0 %1493
  %1495 = vrot.lane.b32.xlu0 %v1456, 16
  %v1496 = vpop.permute.xlu0 %1495
  %1497 = vrot.lane.b32.xlu0 %v1457, 16
  %v1498 = vpop.permute.xlu0 %1497
  %1499 = vrot.lane.b32.xlu0 %v1458, 16
  %v1500 = vpop.permute.xlu0 %1499
  %1501 = vrot.lane.b32.xlu0 %v1459, 16
  %v1502 = vpop.permute.xlu0 %1501
  %1503 = vrot.lane.b32.xlu0 %v1460, 16
  %v1504 = vpop.permute.xlu0 %1503
  %1505 = vrot.lane.b32.xlu0 %v1461, 16
  %v1506 = vpop.permute.xlu0 %1505
  %1507 = vrot.lane.b32.xlu0 %v1462, 16
  %v1508 = vpop.permute.xlu0 %1507
  %1509 = vrot.lane.b32.xlu0 %v1463, 16
  %v1510 = vpop.permute.xlu0 %1509
  %1511 = vrot.lane.b32.xlu0 %v1464, 16
  %v1512 = vpop.permute.xlu0 %1511
  %vm1529 = vcmask 195712
  %1530 = vst.msk [vmem:[#allocation6] sm:$0xff] %vm1529, %v1482
  %1531 = vst.msk [vmem:[#allocation6 + $0x10] sm:$0xff] %vm1529, %v1484
  %1532 = vst.msk [vmem:[#allocation6 + $0x20] sm:$0xff] %vm1529, %v1486
  %1533 = vst.msk [vmem:[#allocation6 + $0x30] sm:$0xff] %vm1529, %v1488
  %1534 = vst.msk [vmem:[#allocation6 + $0x40] sm:$0xff] %vm1529, %v1490
  %1535 = vst.msk [vmem:[#allocation6 + $0x50] sm:$0xff] %vm1529, %v1492
  %1536 = vst.msk [vmem:[#allocation6 + $0x60] sm:$0xff] %vm1529, %v1494
  %1537 = vst.msk [vmem:[#allocation6 + $0x70] sm:$0xff] %vm1529, %v1496
  %1538 = vst.msk [vmem:[#allocation6 + $0x80] sm:$0xff] %vm1529, %v1498
  %1539 = vst.msk [vmem:[#allocation6 + $0x90] sm:$0xff] %vm1529, %v1500
  %1540 = vst.msk [vmem:[#allocation6 + $0xa0] sm:$0xff] %vm1529, %v1502
  %1541 = vst.msk [vmem:[#allocation6 + $0xb0] sm:$0xff] %vm1529, %v1504
  %1542 = vst.msk [vmem:[#allocation6 + $0xc0] sm:$0xff] %vm1529, %v1506
  %1543 = vst.msk [vmem:[#allocation6 + $0xd0] sm:$0xff] %vm1529, %v1508
  %1544 = vst.msk [vmem:[#allocation6 + $0xe0] sm:$0xff] %vm1529, %v1510
  %1545 = vst.msk [vmem:[#allocation6 + $0xf0] sm:$0xff] %vm1529, %v1512
  %v1546 = vld [vmem:[%s1287] sm:$0xff]
  %v1547 = vld [vmem:[%s1287 + $0x20] sm:$0xff]
  %v1548 = vld [vmem:[%s1287 + $0x40] sm:$0xff]
  %v1549 = vld [vmem:[%s1287 + $0x60] sm:$0xff]
  %v1550 = vld [vmem:[%s1287 + $0x80] sm:$0xff]
  %v1551 = vld [vmem:[%s1287 + $0xa0] sm:$0xff]
  %v1552 = vld [vmem:[%s1287 + $0xc0] sm:$0xff]
  %v1553 = vld [vmem:[%s1287 + $0xe0] sm:$0xff]
  %v1554 = vld [vmem:[%s1287 + $0x120] sm:$0xff]
  %v1555 = vld [vmem:[%s1287 + $0x140] sm:$0xff]
  %v1556 = vld [vmem:[%s1287 + $0x160] sm:$0xff]
  %v1557 = vld [vmem:[%s1287 + $0x180] sm:$0xff]
  %v1558 = vld [vmem:[%s1287 + $0x1a0] sm:$0xff]
  %v1559 = vld [vmem:[%s1287 + $0x1c0] sm:$0xff]
  %v1560 = vld [vmem:[%s1287 + $0x1e0] sm:$0xff]
  %v1561 = vld [vmem:[%s1287 + $0x200] sm:$0xff]
  %1578 = vrot.lane.b32.xlu0 %v1546, 24
  %v1579 = vpop.permute.xlu0 %1578
  %1580 = vrot.lane.b32.xlu0 %v1547, 24
  %v1581 = vpop.permute.xlu0 %1580
  %1582 = vrot.lane.b32.xlu0 %v1548, 24
  %v1583 = vpop.permute.xlu0 %1582
  %1584 = vrot.lane.b32.xlu0 %v1549, 24
  %v1585 = vpop.permute.xlu0 %1584
  %1586 = vrot.lane.b32.xlu0 %v1550, 24
  %v1587 = vpop.permute.xlu0 %1586
  %1588 = vrot.lane.b32.xlu0 %v1551, 24
  %v1589 = vpop.permute.xlu0 %1588
  %1590 = vrot.lane.b32.xlu0 %v1552, 24
  %v1591 = vpop.permute.xlu0 %1590
  %1592 = vrot.lane.b32.xlu0 %v1553, 24
  %v1593 = vpop.permute.xlu0 %1592
  %1594 = vrot.lane.b32.xlu0 %v1554, 24
  %v1595 = vpop.permute.xlu0 %1594
  %1596 = vrot.lane.b32.xlu0 %v1555, 24
  %v1597 = vpop.permute.xlu0 %1596
  %1598 = vrot.lane.b32.xlu0 %v1556, 24
  %v1599 = vpop.permute.xlu0 %1598
  %1600 = vrot.lane.b32.xlu0 %v1557, 24
  %v1601 = vpop.permute.xlu0 %1600
  %1602 = vrot.lane.b32.xlu0 %v1558, 24
  %v1603 = vpop.permute.xlu0 %1602
  %1604 = vrot.lane.b32.xlu0 %v1559, 24
  %v1605 = vpop.permute.xlu0 %1604
  %1606 = vrot.lane.b32.xlu0 %v1560, 24
  %v1607 = vpop.permute.xlu0 %1606
  %1608 = vrot.lane.b32.xlu0 %v1561, 24
  %v1609 = vpop.permute.xlu0 %1608
  %vm1626 = vcmask 261312
  %1627 = vst.msk [vmem:[#allocation6] sm:$0xff] %vm1626, %v1579
  %1628 = vst.msk [vmem:[#allocation6 + $0x10] sm:$0xff] %vm1626, %v1581
  %1629 = vst.msk [vmem:[#allocation6 + $0x20] sm:$0xff] %vm1626, %v1583
  %1630 = vst.msk [vmem:[#allocation6 + $0x30] sm:$0xff] %vm1626, %v1585
  %1631 = vst.msk [vmem:[#allocation6 + $0x40] sm:$0xff] %vm1626, %v1587
  %1632 = vst.msk [vmem:[#allocation6 + $0x50] sm:$0xff] %vm1626, %v1589
  %1633 = vst.msk [vmem:[#allocation6 + $0x60] sm:$0xff] %vm1626, %v1591
  %1634 = vst.msk [vmem:[#allocation6 + $0x70] sm:$0xff] %vm1626, %v1593
  %1635 = vst.msk [vmem:[#allocation6 + $0x80] sm:$0xff] %vm1626, %v1595
  %1636 = vst.msk [vmem:[#allocation6 + $0x90] sm:$0xff] %vm1626, %v1597
  %1637 = vst.msk [vmem:[#allocation6 + $0xa0] sm:$0xff] %vm1626, %v1599
  %1638 = vst.msk [vmem:[#allocation6 + $0xb0] sm:$0xff] %vm1626, %v1601
  %1639 = vst.msk [vmem:[#allocation6 + $0xc0] sm:$0xff] %vm1626, %v1603
  %1640 = vst.msk [vmem:[#allocation6 + $0xd0] sm:$0xff] %vm1626, %v1605
  %1641 = vst.msk [vmem:[#allocation6 + $0xe0] sm:$0xff] %vm1626, %v1607
  %1642 = vst.msk [vmem:[#allocation6 + $0xf0] sm:$0xff] %vm1626, %v1609
  %v1643 = vld [vmem:[%s1254] sm:$0xff]
  %v1644 = vld [vmem:[%s1254 + $0x20] sm:$0xff]
  %v1645 = vld [vmem:[%s1254 + $0x40] sm:$0xff]
  %v1646 = vld [vmem:[%s1254 + $0x60] sm:$0xff]
  %v1647 = vld [vmem:[%s1254 + $0x80] sm:$0xff]
  %v1648 = vld [vmem:[%s1254 + $0xa0] sm:$0xff]
  %v1649 = vld [vmem:[%s1254 + $0xc0] sm:$0xff]
  %v1650 = vld [vmem:[%s1254 + $0xe0] sm:$0xff]
  %v1651 = vld [vmem:[%s1254 + $0x120] sm:$0xff]
  %v1652 = vld [vmem:[%s1254 + $0x140] sm:$0xff]
  %v1653 = vld [vmem:[%s1254 + $0x160] sm:$0xff]
  %v1654 = vld [vmem:[%s1254 + $0x180] sm:$0xff]
  %v1655 = vld [vmem:[%s1254 + $0x1a0] sm:$0xff]
  %v1656 = vld [vmem:[%s1254 + $0x1c0] sm:$0xff]
  %v1657 = vld [vmem:[%s1254 + $0x1e0] sm:$0xff]
  %v1658 = vld [vmem:[%s1254 + $0x200] sm:$0xff]
  %1675 = vrot.lane.b32.xlu0 %v1643, 32
  %v1676 = vpop.permute.xlu0 %1675
  %1677 = vrot.lane.b32.xlu0 %v1644, 32
  %v1678 = vpop.permute.xlu0 %1677
  %1679 = vrot.lane.b32.xlu0 %v1645, 32
  %v1680 = vpop.permute.xlu0 %1679
  %1681 = vrot.lane.b32.xlu0 %v1646, 32
  %v1682 = vpop.permute.xlu0 %1681
  %1683 = vrot.lane.b32.xlu0 %v1647, 32
  %v1684 = vpop.permute.xlu0 %1683
  %1685 = vrot.lane.b32.xlu0 %v1648, 32
  %v1686 = vpop.permute.xlu0 %1685
  %1687 = vrot.lane.b32.xlu0 %v1649, 32
  %v1688 = vpop.permute.xlu0 %1687
  %1689 = vrot.lane.b32.xlu0 %v1650, 32
  %v1690 = vpop.permute.xlu0 %1689
  %1691 = vrot.lane.b32.xlu0 %v1651, 32
  %v1692 = vpop.permute.xlu0 %1691
  %1693 = vrot.lane.b32.xlu0 %v1652, 32
  %v1694 = vpop.permute.xlu0 %1693
  %1695 = vrot.lane.b32.xlu0 %v1653, 32
  %v1696 = vpop.permute.xlu0 %1695
  %1697 = vrot.lane.b32.xlu0 %v1654, 32
  %v1698 = vpop.permute.xlu0 %1697
  %1699 = vrot.lane.b32.xlu0 %v1655, 32
  %v1700 = vpop.permute.xlu0 %1699
  %1701 = vrot.lane.b32.xlu0 %v1656, 32
  %v1702 = vpop.permute.xlu0 %1701
  %1703 = vrot.lane.b32.xlu0 %v1657, 32
  %v1704 = vpop.permute.xlu0 %1703
  %1705 = vrot.lane.b32.xlu0 %v1658, 32
  %v1706 = vpop.permute.xlu0 %1705
  %vm1723 = vcmask 326912
  %1724 = vst.msk [vmem:[#allocation6] sm:$0xff] %vm1723, %v1676
  %1725 = vst.msk [vmem:[#allocation6 + $0x10] sm:$0xff] %vm1723, %v1678
  %1726 = vst.msk [vmem:[#allocation6 + $0x20] sm:$0xff] %vm1723, %v1680
  %1727 = vst.msk [vmem:[#allocation6 + $0x30] sm:$0xff] %vm1723, %v1682
  %1728 = vst.msk [vmem:[#allocation6 + $0x40] sm:$0xff] %vm1723, %v1684
  %1729 = vst.msk [vmem:[#allocation6 + $0x50] sm:$0xff] %vm1723, %v1686
  %1730 = vst.msk [vmem:[#allocation6 + $0x60] sm:$0xff] %vm1723, %v1688
  %1731 = vst.msk [vmem:[#allocation6 + $0x70] sm:$0xff] %vm1723, %v1690
  %1732 = vst.msk [vmem:[#allocation6 + $0x80] sm:$0xff] %vm1723, %v1692
  %1733 = vst.msk [vmem:[#allocation6 + $0x90] sm:$0xff] %vm1723, %v1694
  %1734 = vst.msk [vmem:[#allocation6 + $0xa0] sm:$0xff] %vm1723, %v1696
  %1735 = vst.msk [vmem:[#allocation6 + $0xb0] sm:$0xff] %vm1723, %v1698
  %1736 = vst.msk [vmem:[#allocation6 + $0xc0] sm:$0xff] %vm1723, %v1700
  %1737 = vst.msk [vmem:[#allocation6 + $0xd0] sm:$0xff] %vm1723, %v1702
  %1738 = vst.msk [vmem:[#allocation6 + $0xe0] sm:$0xff] %vm1723, %v1704
  %1739 = vst.msk [vmem:[#allocation6 + $0xf0] sm:$0xff] %vm1723, %v1706
  %v1740 = vld [vmem:[%s1287 + $0x1] sm:$0xff]
  %v1741 = vld [vmem:[%s1287 + $0x21] sm:$0xff]
  %v1742 = vld [vmem:[%s1287 + $0x41] sm:$0xff]
  %v1743 = vld [vmem:[%s1287 + $0x61] sm:$0xff]
  %v1744 = vld [vmem:[%s1287 + $0x81] sm:$0xff]
  %v1745 = vld [vmem:[%s1287 + $0xa1] sm:$0xff]
  %v1746 = vld [vmem:[%s1287 + $0xc1] sm:$0xff]
  %v1747 = vld [vmem:[%s1287 + $0xe1] sm:$0xff]
  %v1748 = vld [vmem:[%s1287 + $0x121] sm:$0xff]
  %v1749 = vld [vmem:[%s1287 + $0x141] sm:$0xff]
  %v1750 = vld [vmem:[%s1287 + $0x161] sm:$0xff]
  %v1751 = vld [vmem:[%s1287 + $0x181] sm:$0xff]
  %v1752 = vld [vmem:[%s1287 + $0x1a1] sm:$0xff]
  %v1753 = vld [vmem:[%s1287 + $0x1c1] sm:$0xff]
  %v1754 = vld [vmem:[%s1287 + $0x1e1] sm:$0xff]
  %v1755 = vld [vmem:[%s1287 + $0x201] sm:$0xff]
  %1772 = vrot.lane.b32.xlu0 %v1740, 40
  %v1773 = vpop.permute.xlu0 %1772
  %1774 = vrot.lane.b32.xlu0 %v1741, 40
  %v1775 = vpop.permute.xlu0 %1774
  %1776 = vrot.lane.b32.xlu0 %v1742, 40
  %v1777 = vpop.permute.xlu0 %1776
  %1778 = vrot.lane.b32.xlu0 %v1743, 40
  %v1779 = vpop.permute.xlu0 %1778
  %1780 = vrot.lane.b32.xlu0 %v1744, 40
  %v1781 = vpop.permute.xlu0 %1780
  %1782 = vrot.lane.b32.xlu0 %v1745, 40
  %v1783 = vpop.permute.xlu0 %1782
  %1784 = vrot.lane.b32.xlu0 %v1746, 40
  %v1785 = vpop.permute.xlu0 %1784
  %1786 = vrot.lane.b32.xlu0 %v1747, 40
  %v1787 = vpop.permute.xlu0 %1786
  %1788 = vrot.lane.b32.xlu0 %v1748, 40
  %v1789 = vpop.permute.xlu0 %1788
  %1790 = vrot.lane.b32.xlu0 %v1749, 40
  %v1791 = vpop.permute.xlu0 %1790
  %1792 = vrot.lane.b32.xlu0 %v1750, 40
  %v1793 = vpop.permute.xlu0 %1792
  %1794 = vrot.lane.b32.xlu0 %v1751, 40
  %v1795 = vpop.permute.xlu0 %1794
  %1796 = vrot.lane.b32.xlu0 %v1752, 40
  %v1797 = vpop.permute.xlu0 %1796
  %1798 = vrot.lane.b32.xlu0 %v1753, 40
  %v1799 = vpop.permute.xlu0 %1798
  %1800 = vrot.lane.b32.xlu0 %v1754, 40
  %v1801 = vpop.permute.xlu0 %1800
  %1802 = vrot.lane.b32.xlu0 %v1755, 40
  %v1803 = vpop.permute.xlu0 %1802
  %vm1820 = vcmask 392512
  %1821 = vst.msk [vmem:[#allocation6] sm:$0xff] %vm1820, %v1773
  %1822 = vst.msk [vmem:[#allocation6 + $0x10] sm:$0xff] %vm1820, %v1775
  %1823 = vst.msk [vmem:[#allocation6 + $0x20] sm:$0xff] %vm1820, %v1777
  %1824 = vst.msk [vmem:[#allocation6 + $0x30] sm:$0xff] %vm1820, %v1779
  %1825 = vst.msk [vmem:[#allocation6 + $0x40] sm:$0xff] %vm1820, %v1781
  %1826 = vst.msk [vmem:[#allocation6 + $0x50] sm:$0xff] %vm1820, %v1783
  %1827 = vst.msk [vmem:[#allocation6 + $0x60] sm:$0xff] %vm1820, %v1785
  %1828 = vst.msk [vmem:[#allocation6 + $0x70] sm:$0xff] %vm1820, %v1787
  %1829 = vst.msk [vmem:[#allocation6 + $0x80] sm:$0xff] %vm1820, %v1789
  %1830 = vst.msk [vmem:[#allocation6 + $0x90] sm:$0xff] %vm1820, %v1791
  %1831 = vst.msk [vmem:[#allocation6 + $0xa0] sm:$0xff] %vm1820, %v1793
  %1832 = vst.msk [vmem:[#allocation6 + $0xb0] sm:$0xff] %vm1820, %v1795
  %1833 = vst.msk [vmem:[#allocation6 + $0xc0] sm:$0xff] %vm1820, %v1797
  %1834 = vst.msk [vmem:[#allocation6 + $0xd0] sm:$0xff] %vm1820, %v1799
  %1835 = vst.msk [vmem:[#allocation6 + $0xe0] sm:$0xff] %vm1820, %v1801
  %1836 = vst.msk [vmem:[#allocation6 + $0xf0] sm:$0xff] %vm1820, %v1803
  %s1837 = scalar_lea.vmem [#allocation2], 32
  %v1838 = vld [vmem:[%s1837] sm:$0xff]
  %v1839 = vld [vmem:[%s1837 + $0x20] sm:$0xff]
  %v1840 = vld [vmem:[%s1837 + $0x40] sm:$0xff]
  %v1841 = vld [vmem:[%s1837 + $0x60] sm:$0xff]
  %v1842 = vld [vmem:[%s1837 + $0x80] sm:$0xff]
  %v1843 = vld [vmem:[%s1837 + $0xa0] sm:$0xff]
  %v1844 = vld [vmem:[%s1837 + $0xc0] sm:$0xff]
  %v1845 = vld [vmem:[%s1837 + $0xe0] sm:$0xff]
  %v1846 = vld [vmem:[%s1837 + $0x120] sm:$0xff]
  %v1847 = vld [vmem:[%s1837 + $0x140] sm:$0xff]
  %v1848 = vld [vmem:[%s1837 + $0x160] sm:$0xff]
  %v1849 = vld [vmem:[%s1837 + $0x180] sm:$0xff]
  %v1850 = vld [vmem:[%s1837 + $0x1a0] sm:$0xff]
  %v1851 = vld [vmem:[%s1837 + $0x1c0] sm:$0xff]
  %v1852 = vld [vmem:[%s1837 + $0x1e0] sm:$0xff]
  %v1853 = vld [vmem:[%s1837 + $0x200] sm:$0xff]
  %1870 = vrot.lane.b32.xlu0 %v1838, 48
  %v1871 = vpop.permute.xlu0 %1870
  %1872 = vrot.lane.b32.xlu0 %v1839, 48
  %v1873 = vpop.permute.xlu0 %1872
  %1874 = vrot.lane.b32.xlu0 %v1840, 48
  %v1875 = vpop.permute.xlu0 %1874
  %1876 = vrot.lane.b32.xlu0 %v1841, 48
  %v1877 = vpop.permute.xlu0 %1876
  %1878 = vrot.lane.b32.xlu0 %v1842, 48
  %v1879 = vpop.permute.xlu0 %1878
  %1880 = vrot.lane.b32.xlu0 %v1843, 48
  %v1881 = vpop.permute.xlu0 %1880
  %1882 = vrot.lane.b32.xlu0 %v1844, 48
  %v1883 = vpop.permute.xlu0 %1882
  %1884 = vrot.lane.b32.xlu0 %v1845, 48
  %v1885 = vpop.permute.xlu0 %1884
  %1886 = vrot.lane.b32.xlu0 %v1846, 48
  %v1887 = vpop.permute.xlu0 %1886
  %1888 = vrot.lane.b32.xlu0 %v1847, 48
  %v1889 = vpop.permute.xlu0 %1888
  %1890 = vrot.lane.b32.xlu0 %v1848, 48
  %v1891 = vpop.permute.xlu0 %1890
  %1892 = vrot.lane.b32.xlu0 %v1849, 48
  %v1893 = vpop.permute.xlu0 %1892
  %1894 = vrot.lane.b32.xlu0 %v1850, 48
  %v1895 = vpop.permute.xlu0 %1894
  %1896 = vrot.lane.b32.xlu0 %v1851, 48
  %v1897 = vpop.permute.xlu0 %1896
  %1898 = vrot.lane.b32.xlu0 %v1852, 48
  %v1899 = vpop.permute.xlu0 %1898
  %1900 = vrot.lane.b32.xlu0 %v1853, 48
  %v1901 = vpop.permute.xlu0 %1900
  %vm1918 = vcmask 458112
  %1919 = vst.msk [vmem:[#allocation6] sm:$0xff] %vm1918, %v1871
  %1920 = vst.msk [vmem:[#allocation6 + $0x10] sm:$0xff] %vm1918, %v1873
  %1921 = vst.msk [vmem:[#allocation6 + $0x20] sm:$0xff] %vm1918, %v1875
  %1922 = vst.msk [vmem:[#allocation6 + $0x30] sm:$0xff] %vm1918, %v1877
  %1923 = vst.msk [vmem:[#allocation6 + $0x40] sm:$0xff] %vm1918, %v1879
  %1924 = vst.msk [vmem:[#allocation6 + $0x50] sm:$0xff] %vm1918, %v1881
  %1925 = vst.msk [vmem:[#allocation6 + $0x60] sm:$0xff] %vm1918, %v1883
  %1926 = vst.msk [vmem:[#allocation6 + $0x70] sm:$0xff] %vm1918, %v1885
  %1927 = vst.msk [vmem:[#allocation6 + $0x80] sm:$0xff] %vm1918, %v1887
  %1928 = vst.msk [vmem:[#allocation6 + $0x90] sm:$0xff] %vm1918, %v1889
  %1929 = vst.msk [vmem:[#allocation6 + $0xa0] sm:$0xff] %vm1918, %v1891
  %1930 = vst.msk [vmem:[#allocation6 + $0xb0] sm:$0xff] %vm1918, %v1893
  %1931 = vst.msk [vmem:[#allocation6 + $0xc0] sm:$0xff] %vm1918, %v1895
  %1932 = vst.msk [vmem:[#allocation6 + $0xd0] sm:$0xff] %vm1918, %v1897
  %1933 = vst.msk [vmem:[#allocation6 + $0xe0] sm:$0xff] %vm1918, %v1899
  %1934 = vst.msk [vmem:[#allocation6 + $0xf0] sm:$0xff] %vm1918, %v1901
  %s1935 = scalar_lea.vmem [#allocation3], 32
  %v1936 = vld [vmem:[%s1935] sm:$0xff]
  %v1937 = vld [vmem:[%s1935 + $0x20] sm:$0xff]
  %v1938 = vld [vmem:[%s1935 + $0x40] sm:$0xff]
  %v1939 = vld [vmem:[%s1935 + $0x60] sm:$0xff]
  %v1940 = vld [vmem:[%s1935 + $0x80] sm:$0xff]
  %v1941 = vld [vmem:[%s1935 + $0xa0] sm:$0xff]
  %v1942 = vld [vmem:[%s1935 + $0xc0] sm:$0xff]
  %v1943 = vld [vmem:[%s1935 + $0xe0] sm:$0xff]
  %v1944 = vld [vmem:[%s1935 + $0x120] sm:$0xff]
  %v1945 = vld [vmem:[%s1935 + $0x140] sm:$0xff]
  %v1946 = vld [vmem:[%s1935 + $0x160] sm:$0xff]
  %v1947 = vld [vmem:[%s1935 + $0x180] sm:$0xff]
  %v1948 = vld [vmem:[%s1935 + $0x1a0] sm:$0xff]
  %v1949 = vld [vmem:[%s1935 + $0x1c0] sm:$0xff]
  %v1950 = vld [vmem:[%s1935 + $0x1e0] sm:$0xff]
  %v1951 = vld [vmem:[%s1935 + $0x200] sm:$0xff]
  %1968 = vrot.lane.b32.xlu0 %v1936, 56
  %v1969 = vpop.permute.xlu0 %1968
  %1970 = vrot.lane.b32.xlu0 %v1937, 56
  %v1971 = vpop.permute.xlu0 %1970
  %1972 = vrot.lane.b32.xlu0 %v1938, 56
  %v1973 = vpop.permute.xlu0 %1972
  %1974 = vrot.lane.b32.xlu0 %v1939, 56
  %v1975 = vpop.permute.xlu0 %1974
  %1976 = vrot.lane.b32.xlu0 %v1940, 56
  %v1977 = vpop.permute.xlu0 %1976
  %1978 = vrot.lane.b32.xlu0 %v1941, 56
  %v1979 = vpop.permute.xlu0 %1978
  %1980 = vrot.lane.b32.xlu0 %v1942, 56
  %v1981 = vpop.permute.xlu0 %1980
  %1982 = vrot.lane.b32.xlu0 %v1943, 56
  %v1983 = vpop.permute.xlu0 %1982
  %1984 = vrot.lane.b32.xlu0 %v1944, 56
  %v1985 = vpop.permute.xlu0 %1984
  %1986 = vrot.lane.b32.xlu0 %v1945, 56
  %v1987 = vpop.permute.xlu0 %1986
  %1988 = vrot.lane.b32.xlu0 %v1946, 56
  %v1989 = vpop.permute.xlu0 %1988
  %1990 = vrot.lane.b32.xlu0 %v1947, 56
  %v1991 = vpop.permute.xlu0 %1990
  %1992 = vrot.lane.b32.xlu0 %v1948, 56
  %v1993 = vpop.permute.xlu0 %1992
  %1994 = vrot.lane.b32.xlu0 %v1949, 56
  %v1995 = vpop.permute.xlu0 %1994
  %1996 = vrot.lane.b32.xlu0 %v1950, 56
  %v1997 = vpop.permute.xlu0 %1996
  %1998 = vrot.lane.b32.xlu0 %v1951, 56
  %v1999 = vpop.permute.xlu0 %1998
  %vm2016 = vcmask 523712
  %2017 = vst.msk [vmem:[#allocation6] sm:$0xff] %vm2016, %v1969
  %2018 = vst.msk [vmem:[#allocation6 + $0x10] sm:$0xff] %vm2016, %v1971
  %2019 = vst.msk [vmem:[#allocation6 + $0x20] sm:$0xff] %vm2016, %v1973
  %2020 = vst.msk [vmem:[#allocation6 + $0x30] sm:$0xff] %vm2016, %v1975
  %2021 = vst.msk [vmem:[#allocation6 + $0x40] sm:$0xff] %vm2016, %v1977
  %2022 = vst.msk [vmem:[#allocation6 + $0x50] sm:$0xff] %vm2016, %v1979
  %2023 = vst.msk [vmem:[#allocation6 + $0x60] sm:$0xff] %vm2016, %v1981
  %2024 = vst.msk [vmem:[#allocation6 + $0x70] sm:$0xff] %vm2016, %v1983
  %2025 = vst.msk [vmem:[#allocation6 + $0x80] sm:$0xff] %vm2016, %v1985
  %2026 = vst.msk [vmem:[#allocation6 + $0x90] sm:$0xff] %vm2016, %v1987
  %2027 = vst.msk [vmem:[#allocation6 + $0xa0] sm:$0xff] %vm2016, %v1989
  %2028 = vst.msk [vmem:[#allocation6 + $0xb0] sm:$0xff] %vm2016, %v1991
  %2029 = vst.msk [vmem:[#allocation6 + $0xc0] sm:$0xff] %vm2016, %v1993
  %2030 = vst.msk [vmem:[#allocation6 + $0xd0] sm:$0xff] %vm2016, %v1995
  %2031 = vst.msk [vmem:[#allocation6 + $0xe0] sm:$0xff] %vm2016, %v1997
  %2032 = vst.msk [vmem:[#allocation6 + $0xf0] sm:$0xff] %vm2016, %v1999
  %v2033 = vld [vmem:[%s1837 + $0x1] sm:$0xff]
  %v2034 = vld [vmem:[%s1837 + $0x21] sm:$0xff]
  %v2035 = vld [vmem:[%s1837 + $0x41] sm:$0xff]
  %v2036 = vld [vmem:[%s1837 + $0x61] sm:$0xff]
  %v2037 = vld [vmem:[%s1837 + $0x81] sm:$0xff]
  %v2038 = vld [vmem:[%s1837 + $0xa1] sm:$0xff]
  %v2039 = vld [vmem:[%s1837 + $0xc1] sm:$0xff]
  %v2040 = vld [vmem:[%s1837 + $0xe1] sm:$0xff]
  %v2041 = vld [vmem:[%s1837 + $0x121] sm:$0xff]
  %v2042 = vld [vmem:[%s1837 + $0x141] sm:$0xff]
  %v2043 = vld [vmem:[%s1837 + $0x161] sm:$0xff]
  %v2044 = vld [vmem:[%s1837 + $0x181] sm:$0xff]
  %v2045 = vld [vmem:[%s1837 + $0x1a1] sm:$0xff]
  %v2046 = vld [vmem:[%s1837 + $0x1c1] sm:$0xff]
  %v2047 = vld [vmem:[%s1837 + $0x1e1] sm:$0xff]
  %v2048 = vld [vmem:[%s1837 + $0x201] sm:$0xff]
  %2065 = vrot.lane.b32.xlu0 %v2033, 64
  %v2066 = vpop.permute.xlu0 %2065
  %2067 = vrot.lane.b32.xlu0 %v2034, 64
  %v2068 = vpop.permute.xlu0 %2067
  %2069 = vrot.lane.b32.xlu0 %v2035, 64
  %v2070 = vpop.permute.xlu0 %2069
  %2071 = vrot.lane.b32.xlu0 %v2036, 64
  %v2072 = vpop.permute.xlu0 %2071
  %2073 = vrot.lane.b32.xlu0 %v2037, 64
  %v2074 = vpop.permute.xlu0 %2073
  %2075 = vrot.lane.b32.xlu0 %v2038, 64
  %v2076 = vpop.permute.xlu0 %2075
  %2077 = vrot.lane.b32.xlu0 %v2039, 64
  %v2078 = vpop.permute.xlu0 %2077
  %2079 = vrot.lane.b32.xlu0 %v2040, 64
  %v2080 = vpop.permute.xlu0 %2079
  %2081 = vrot.lane.b32.xlu0 %v2041, 64
  %v2082 = vpop.permute.xlu0 %2081
  %2083 = vrot.lane.b32.xlu0 %v2042, 64
  %v2084 = vpop.permute.xlu0 %2083
  %2085 = vrot.lane.b32.xlu0 %v2043, 64
  %v2086 = vpop.permute.xlu0 %2085
  %2087 = vrot.lane.b32.xlu0 %v2044, 64
  %v2088 = vpop.permute.xlu0 %2087
  %2089 = vrot.lane.b32.xlu0 %v2045, 64
  %v2090 = vpop.permute.xlu0 %2089
  %2091 = vrot.lane.b32.xlu0 %v2046, 64
  %v2092 = vpop.permute.xlu0 %2091
  %2093 = vrot.lane.b32.xlu0 %v2047, 64
  %v2094 = vpop.permute.xlu0 %2093
  %2095 = vrot.lane.b32.xlu0 %v2048, 64
  %v2096 = vpop.permute.xlu0 %2095
  %vm2113 = vcmask 589312
  %2114 = vst.msk [vmem:[#allocation6] sm:$0xff] %vm2113, %v2066
  %2115 = vst.msk [vmem:[#allocation6 + $0x10] sm:$0xff] %vm2113, %v2068
  %2116 = vst.msk [vmem:[#allocation6 + $0x20] sm:$0xff] %vm2113, %v2070
  %2117 = vst.msk [vmem:[#allocation6 + $0x30] sm:$0xff] %vm2113, %v2072
  %2118 = vst.msk [vmem:[#allocation6 + $0x40] sm:$0xff] %vm2113, %v2074
  %2119 = vst.msk [vmem:[#allocation6 + $0x50] sm:$0xff] %vm2113, %v2076
  %2120 = vst.msk [vmem:[#allocation6 + $0x60] sm:$0xff] %vm2113, %v2078
  %2121 = vst.msk [vmem:[#allocation6 + $0x70] sm:$0xff] %vm2113, %v2080
  %2122 = vst.msk [vmem:[#allocation6 + $0x80] sm:$0xff] %vm2113, %v2082
  %2123 = vst.msk [vmem:[#allocation6 + $0x90] sm:$0xff] %vm2113, %v2084
  %2124 = vst.msk [vmem:[#allocation6 + $0xa0] sm:$0xff] %vm2113, %v2086
  %2125 = vst.msk [vmem:[#allocation6 + $0xb0] sm:$0xff] %vm2113, %v2088
  %2126 = vst.msk [vmem:[#allocation6 + $0xc0] sm:$0xff] %vm2113, %v2090
  %2127 = vst.msk [vmem:[#allocation6 + $0xd0] sm:$0xff] %vm2113, %v2092
  %2128 = vst.msk [vmem:[#allocation6 + $0xe0] sm:$0xff] %vm2113, %v2094
  %2129 = vst.msk [vmem:[#allocation6 + $0xf0] sm:$0xff] %vm2113, %v2096
  %v2130 = vld [vmem:[#allocation6] sm:$0xff]
  %v2131 = vld [vmem:[#allocation6 + $0x10] sm:$0xff]
  %v2132 = vld [vmem:[#allocation6 + $0x20] sm:$0xff]
  %v2133 = vld [vmem:[#allocation6 + $0x30] sm:$0xff]
  %v2134 = vld [vmem:[#allocation6 + $0x40] sm:$0xff]
  %v2135 = vld [vmem:[#allocation6 + $0x50] sm:$0xff]
  %v2136 = vld [vmem:[#allocation6 + $0x60] sm:$0xff]
  %v2137 = vld [vmem:[#allocation6 + $0x70] sm:$0xff]
  %v2138 = vld [vmem:[#allocation6 + $0x80] sm:$0xff]
  %v2139 = vld [vmem:[#allocation6 + $0x90] sm:$0xff]
  %v2140 = vld [vmem:[#allocation6 + $0xa0] sm:$0xff]
  %v2141 = vld [vmem:[#allocation6 + $0xb0] sm:$0xff]
  %v2142 = vld [vmem:[#allocation6 + $0xc0] sm:$0xff]
  %v2143 = vld [vmem:[#allocation6 + $0xd0] sm:$0xff]
  %v2144 = vld [vmem:[#allocation6 + $0xe0] sm:$0xff]
  %v2145 = vld [vmem:[#allocation6 + $0xf0] sm:$0xff]
  %v2146 = vld [vmem:[%s3] sm:$0xff]
  %v2147 = vld [vmem:[%s3 + $0x8] sm:$0xff]
  %v2148 = vld [vmem:[%s3 + $0x10] sm:$0xff]
  %v2149 = vld [vmem:[%s3 + $0x18] sm:$0xff]
  %v2150 = vld [vmem:[%s3 + $0x20] sm:$0xff]
  %v2151 = vld [vmem:[%s3 + $0x28] sm:$0xff]
  %v2152 = vld [vmem:[%s3 + $0x30] sm:$0xff]
  %v2153 = vld [vmem:[%s3 + $0x38] sm:$0xff]
  %v2154 = vld [vmem:[%s3 + $0x40] sm:$0xff]
  %v2155 = vld [vmem:[%s4] sm:$0x1]
  %v2156 = vld [vmem:[%s4 + $0x1] sm:$0x1]
  %v2157 = vld [vmem:[%s4 + $0x2] sm:$0x1]
  %v2158 = vperm.slane %v2155, 0
  %vm2159 = vcmask 588800
  %v2161 = vsel %vm2159, %v2130, 0
  %v2164 = vsel %vm2159, %v2131, 0
  %v2167 = vsel %vm2159, %v2132, 0
  %v2170 = vsel %vm2159, %v2133, 0
  %v2173 = vsel %vm2159, %v2134, 0
  %v2176 = vsel %vm2159, %v2135, 0
  %v2179 = vsel %vm2159, %v2136, 0
  %v2182 = vsel %vm2159, %v2137, 0
  %v2185 = vsel %vm2159, %v2138, 0
  %v2188 = vsel %vm2159, %v2139, 0
  %v2191 = vsel %vm2159, %v2140, 0
  %v2194 = vsel %vm2159, %v2141, 0
  %v2197 = vsel %vm2159, %v2142, 0
  %v2200 = vsel %vm2159, %v2143, 0
  %v2203 = vsel %vm2159, %v2144, 0
  %v2206 = vsel %vm2159, %v2145, 0
  %2208 = vmatpush.msra.mxu0 0.0
  %2209 = vmatpush.msra.mxu0 0.0
  %2210 = vmatpush.msra.mxu0 0.0
  %2211 = vmatpush.msra.mxu0 0.0
  %2212 = vmatpush.msra.mxu0 0.0
  %2213 = vmatpush.msra.mxu0 0.0
  %2214 = vmatpush.msra.mxu0 0.0
  %2215 = vmatpush.msra.mxu0 %v2154
  %2216 = vmatpush.msra.mxu0 %v2153
  %2217 = vmatpush.msra.mxu0 %v2152
  %2218 = vmatpush.msra.mxu0 %v2151
  %2219 = vmatpush.msra.mxu0 %v2150
  %2220 = vmatpush.msra.mxu0 %v2149
  %2221 = vmatpush.msra.mxu0 %v2148
  %2222 = vmatpush.msra.mxu0 %v2147
  %2223 = vmatpush.msra.mxu0 %v2146
  %2224 = vmatmul.f32.gmra.mxu0 %v2161
  %v2225 = vpop.f32.mrf.mxu0
  %v2226 = vadd.f32 %v2158, %v2225
  %2227 = vmatmul.f32.gmra.mxu0 %v2164
  %v2228 = vpop.f32.mrf.mxu0
  %v2229 = vadd.f32 %v2158, %v2228
  %2230 = vmatmul.f32.gmra.mxu0 %v2167
  %v2231 = vpop.f32.mrf.mxu0
  %v2232 = vadd.f32 %v2158, %v2231
  %2233 = vmatmul.f32.gmra.mxu0 %v2170
  %v2234 = vpop.f32.mrf.mxu0
  %v2235 = vadd.f32 %v2158, %v2234
  %2236 = vmatmul.f32.gmra.mxu0 %v2173
  %v2237 = vpop.f32.mrf.mxu0
  %v2238 = vadd.f32 %v2158, %v2237
  %2239 = vmatmul.f32.gmra.mxu0 %v2176
  %v2240 = vpop.f32.mrf.mxu0
  %v2241 = vadd.f32 %v2158, %v2240
  %2242 = vmatmul.f32.gmra.mxu0 %v2179
  %v2243 = vpop.f32.mrf.mxu0
  %v2244 = vadd.f32 %v2158, %v2243
  %2245 = vmatmul.f32.gmra.mxu0 %v2182
  %v2246 = vpop.f32.mrf.mxu0
  %v2247 = vadd.f32 %v2158, %v2246
  %2248 = vmatmul.f32.gmra.mxu0 %v2185
  %v2249 = vpop.f32.mrf.mxu0
  %v2250 = vadd.f32 %v2158, %v2249
  %2251 = vmatmul.f32.gmra.mxu0 %v2188
  %v2252 = vpop.f32.mrf.mxu0
  %v2253 = vadd.f32 %v2158, %v2252
  %2254 = vmatmul.f32.gmra.mxu0 %v2191
  %v2255 = vpop.f32.mrf.mxu0
  %v2256 = vadd.f32 %v2158, %v2255
  %2257 = vmatmul.f32.gmra.mxu0 %v2194
  %v2258 = vpop.f32.mrf.mxu0
  %v2259 = vadd.f32 %v2158, %v2258
  %2260 = vmatmul.f32.gmra.mxu0 %v2197
  %v2261 = vpop.f32.mrf.mxu0
  %v2262 = vadd.f32 %v2158, %v2261
  %2263 = vmatmul.f32.gmra.mxu0 %v2200
  %v2264 = vpop.f32.mrf.mxu0
  %v2265 = vadd.f32 %v2158, %v2264
  %2266 = vmatmul.f32.gmra.mxu0 %v2203
  %v2267 = vpop.f32.mrf.mxu0
  %v2268 = vadd.f32 %v2158, %v2267
  %2269 = vmatmul.f32.gmra.mxu0 %v2206
  %v2270 = vpop.f32.mrf.mxu0
  %v2271 = vadd.f32 %v2158, %v2270
  %2272 = vdwg.mxu0
  %v2273 = vmax.f32 %v2226, 0.0
  %v2274 = vmax.f32 %v2229, 0.0
  %v2275 = vmax.f32 %v2232, 0.0
  %v2276 = vmax.f32 %v2235, 0.0
  %v2277 = vmax.f32 %v2238, 0.0
  %v2278 = vmax.f32 %v2241, 0.0
  %v2279 = vmax.f32 %v2244, 0.0
  %v2280 = vmax.f32 %v2247, 0.0
  %v2281 = vmax.f32 %v2250, 0.0
  %v2282 = vmax.f32 %v2253, 0.0
  %v2283 = vmax.f32 %v2256, 0.0
  %v2284 = vmax.f32 %v2259, 0.0
  %v2285 = vmax.f32 %v2262, 0.0
  %v2286 = vmax.f32 %v2265, 0.0
  %v2287 = vmax.f32 %v2268, 0.0
  %v2288 = vmax.f32 %v2271, 0.0
  %vm2289 = vcmask 130048
  %v2290 = vsel %vm2289, %v2273, 0.0
  %v2291 = vsel %vm2289, %v2274, 0.0
  %v2292 = vadd.f32 %v2290, %v2291
  %v2293 = vsel %vm2289, %v2275, 0.0
  %v2294 = vadd.f32 %v2292, %v2293
  %v2295 = vsel %vm2289, %v2276, 0.0
  %v2296 = vadd.f32 %v2294, %v2295
  %v2297 = vsel %vm2289, %v2277, 0.0
  %v2298 = vadd.f32 %v2296, %v2297
  %v2299 = vsel %vm2289, %v2278, 0.0
  %v2300 = vadd.f32 %v2298, %v2299
  %v2301 = vsel %vm2289, %v2279, 0.0
  %v2302 = vadd.f32 %v2300, %v2301
  %v2303 = vsel %vm2289, %v2280, 0.0
  %v2304 = vadd.f32 %v2302, %v2303
  %v2305 = vsel %vm2289, %v2281, 0.0
  %v2306 = vadd.f32 %v2304, %v2305
  %v2307 = vsel %vm2289, %v2282, 0.0
  %v2308 = vadd.f32 %v2306, %v2307
  %v2309 = vsel %vm2289, %v2283, 0.0
  %v2310 = vadd.f32 %v2308, %v2309
  %v2311 = vsel %vm2289, %v2284, 0.0
  %v2312 = vadd.f32 %v2310, %v2311
  %v2313 = vsel %vm2289, %v2285, 0.0
  %v2314 = vadd.f32 %v2312, %v2313
  %v2315 = vsel %vm2289, %v2286, 0.0
  %v2316 = vadd.f32 %v2314, %v2315
  %v2317 = vsel %vm2289, %v2287, 0.0
  %v2318 = vadd.f32 %v2316, %v2317
  %v2319 = vsel %vm2289, %v2288, 0.0
  %v2320 = vadd.f32 %v2318, %v2319
  %v2321 = vrot.slane %v2320, 4
  %v2322 = vadd.f32 %v2320, %v2321
  %v2323 = vrot.slane %v2322, 2
  %v2324 = vadd.f32 %v2322, %v2323
  %v2325 = vrot.slane %v2324, 1
  %v2326 = vadd.f32 %v2324, %v2325
  %v2327 = vmul.f32 %v2326, 0.0078125
  %v2328 = vsub.f32 %v2273, %v2327
  %v2329 = vsub.f32 %v2274, %v2327
  %v2330 = vsub.f32 %v2275, %v2327
  %v2331 = vsub.f32 %v2276, %v2327
  %v2332 = vsub.f32 %v2277, %v2327
  %v2333 = vsub.f32 %v2278, %v2327
  %v2334 = vsub.f32 %v2279, %v2327
  %v2335 = vsub.f32 %v2280, %v2327
  %v2336 = vsub.f32 %v2281, %v2327
  %v2337 = vsub.f32 %v2282, %v2327
  %v2338 = vsub.f32 %v2283, %v2327
  %v2339 = vsub.f32 %v2284, %v2327
  %v2340 = vsub.f32 %v2285, %v2327
  %v2341 = vsub.f32 %v2286, %v2327
  %v2342 = vsub.f32 %v2287, %v2327
  %v2343 = vsub.f32 %v2288, %v2327
  %v2344 = vmul.f32 %v2328, %v2328
  %v2345 = vmul.f32 %v2329, %v2329
  %v2346 = vmul.f32 %v2330, %v2330
  %v2347 = vmul.f32 %v2331, %v2331
  %v2348 = vmul.f32 %v2332, %v2332
  %v2349 = vmul.f32 %v2333, %v2333
  %v2350 = vmul.f32 %v2334, %v2334
  %v2351 = vmul.f32 %v2335, %v2335
  %v2352 = vmul.f32 %v2336, %v2336
  %v2353 = vmul.f32 %v2337, %v2337
  %v2354 = vmul.f32 %v2338, %v2338
  %v2355 = vmul.f32 %v2339, %v2339
  %v2356 = vmul.f32 %v2340, %v2340
  %v2357 = vmul.f32 %v2341, %v2341
  %v2358 = vmul.f32 %v2342, %v2342
  %v2359 = vmul.f32 %v2343, %v2343
  %v2360 = vsel %vm2289, %v2344, 0.0
  %v2361 = vsel %vm2289, %v2345, 0.0
  %v2362 = vadd.f32 %v2360, %v2361
  %v2363 = vsel %vm2289, %v2346, 0.0
  %v2364 = vadd.f32 %v2362, %v2363
  %v2365 = vsel %vm2289, %v2347, 0.0
  %v2366 = vadd.f32 %v2364, %v2365
  %v2367 = vsel %vm2289, %v2348, 0.0
  %v2368 = vadd.f32 %v2366, %v2367
  %v2369 = vsel %vm2289, %v2349, 0.0
  %v2370 = vadd.f32 %v2368, %v2369
  %v2371 = vsel %vm2289, %v2350, 0.0
  %v2372 = vadd.f32 %v2370, %v2371
  %v2373 = vsel %vm2289, %v2351, 0.0
  %v2374 = vadd.f32 %v2372, %v2373
  %v2375 = vsel %vm2289, %v2352, 0.0
  %v2376 = vadd.f32 %v2374, %v2375
  %v2377 = vsel %vm2289, %v2353, 0.0
  %v2378 = vadd.f32 %v2376, %v2377
  %v2379 = vsel %vm2289, %v2354, 0.0
  %v2380 = vadd.f32 %v2378, %v2379
  %v2381 = vsel %vm2289, %v2355, 0.0
  %v2382 = vadd.f32 %v2380, %v2381
  %v2383 = vsel %vm2289, %v2356, 0.0
  %v2384 = vadd.f32 %v2382, %v2383
  %v2385 = vsel %vm2289, %v2357, 0.0
  %v2386 = vadd.f32 %v2384, %v2385
  %v2387 = vsel %vm2289, %v2358, 0.0
  %v2388 = vadd.f32 %v2386, %v2387
  %v2389 = vsel %vm2289, %v2359, 0.0
  %v2390 = vadd.f32 %v2388, %v2389
  %v2391 = vrot.slane %v2390, 4
  %v2392 = vadd.f32 %v2390, %v2391
  %v2393 = vrot.slane %v2392, 2
  %v2394 = vadd.f32 %v2392, %v2393
  %v2395 = vrot.slane %v2394, 1
  %v2396 = vadd.f32 %v2394, %v2395
  %v2397 = vmul.f32 %v2396, 0.0078125
  %v2398 = vadd.f32 %v2397, 1e-05
  %v2399 = vrsqrt.pop %v2398
  %v2400 = vmul.f32 %v2399, %v2398
  %v2401 = vmul.f32 %v2400, %v2399
  %v2402 = vmul.f32 0.5, %v2401
  %v2403 = vsub.f32 1.5, %v2402
  %v2404 = vmul.f32 %v2399, %v2403
  %vm2405 = vweird.f32 %v2398
  %vm2406 = vweird.f32 %v2399
  %vm2407 = vmor %vm2405, %vm2406
  %v2408 = vsel %vm2407, %v2399, %v2404
  %v2409 = vmul.f32 %v2156, %v2408
  %v2410 = vperm.slane %v2409, 0
  %v2411 = vmul.f32 %v2328, %v2410
  %v2412 = vmul.f32 %v2329, %v2410
  %v2413 = vmul.f32 %v2330, %v2410
  %v2414 = vmul.f32 %v2331, %v2410
  %v2415 = vmul.f32 %v2332, %v2410
  %v2416 = vmul.f32 %v2333, %v2410
  %v2417 = vmul.f32 %v2334, %v2410
  %v2418 = vmul.f32 %v2335, %v2410
  %v2419 = vmul.f32 %v2336, %v2410
  %v2420 = vmul.f32 %v2337, %v2410
  %v2421 = vmul.f32 %v2338, %v2410
  %v2422 = vmul.f32 %v2339, %v2410
  %v2423 = vmul.f32 %v2340, %v2410
  %v2424 = vmul.f32 %v2341, %v2410
  %v2425 = vmul.f32 %v2342, %v2410
  %v2426 = vmul.f32 %v2343, %v2410
  %v2427 = vperm.slane %v2157, 0
  %v2428 = vadd.f32 %v2411, %v2427
  %v2429 = vadd.f32 %v2412, %v2427
  %v2430 = vadd.f32 %v2413, %v2427
  %v2431 = vadd.f32 %v2414, %v2427
  %v2432 = vadd.f32 %v2415, %v2427
  %v2433 = vadd.f32 %v2416, %v2427
  %v2434 = vadd.f32 %v2417, %v2427
  %v2435 = vadd.f32 %v2418, %v2427
  %v2436 = vadd.f32 %v2419, %v2427
  %v2437 = vadd.f32 %v2420, %v2427
  %v2438 = vadd.f32 %v2421, %v2427
  %v2439 = vadd.f32 %v2422, %v2427
  %v2440 = vadd.f32 %v2423, %v2427
  %v2441 = vadd.f32 %v2424, %v2427
  %v2442 = vadd.f32 %v2425, %v2427
  %v2443 = vadd.f32 %v2426, %v2427
  %2444 = vst.msk [vmem:[#allocation4] sm:$0xff] %vm2289, 0.0
  %vm2445 = vcmask 123904
  %2446 = vst.msk [vmem:[#allocation4 + $0x8] sm:$0x3] %vm2445, 0.0
  %2447 = vst.msk [vmem:[#allocation4 + $0x10] sm:$0xff] %vm2289, 0.0
  %2448 = vst.msk [vmem:[#allocation4 + $0x18] sm:$0x3] %vm2445, 0.0
  %2449 = vst.msk [vmem:[#allocation4 + $0x20] sm:$0xff] %vm2289, 0.0
  %2450 = vst.msk [vmem:[#allocation4 + $0x28] sm:$0x3] %vm2445, 0.0
  %2451 = vst.msk [vmem:[#allocation4 + $0x30] sm:$0xff] %vm2289, 0.0
  %2452 = vst.msk [vmem:[#allocation4 + $0x38] sm:$0x3] %vm2445, 0.0
  %2453 = vst.msk [vmem:[#allocation4 + $0x40] sm:$0xff] %vm2289, 0.0
  %2454 = vst.msk [vmem:[#allocation4 + $0x48] sm:$0x3] %vm2445, 0.0
  %2455 = vst.msk [vmem:[#allocation4 + $0x50] sm:$0xff] %vm2289, 0.0
  %2456 = vst.msk [vmem:[#allocation4 + $0x58] sm:$0x3] %vm2445, 0.0
  %2457 = vst.msk [vmem:[#allocation4 + $0x60] sm:$0xff] %vm2289, 0.0
  %2458 = vst.msk [vmem:[#allocation4 + $0x68] sm:$0x3] %vm2445, 0.0
  %2459 = vst.msk [vmem:[#allocation4 + $0x70] sm:$0xff] %vm2289, 0.0
  %2460 = vst.msk [vmem:[#allocation4 + $0x78] sm:$0x3] %vm2445, 0.0
  %2461 = vst.msk [vmem:[#allocation4 + $0x80] sm:$0xff] %vm2289, 0.0
  %2462 = vst.msk [vmem:[#allocation4 + $0x88] sm:$0x3] %vm2445, 0.0
  %2463 = vst.msk [vmem:[#allocation4 + $0x90] sm:$0xff] %vm2289, 0.0
  %2464 = vst.msk [vmem:[#allocation4 + $0x98] sm:$0x3] %vm2445, 0.0
  %2465 = vst.msk [vmem:[#allocation4 + $0xa0] sm:$0xff] %vm2289, 0.0
  %2466 = vst.msk [vmem:[#allocation4 + $0xa8] sm:$0x3] %vm2445, 0.0
  %2467 = vst.msk [vmem:[#allocation4 + $0xb0] sm:$0xff] %vm2289, 0.0
  %2468 = vst.msk [vmem:[#allocation4 + $0xb8] sm:$0x3] %vm2445, 0.0
  %2469 = vst.msk [vmem:[#allocation4 + $0xc0] sm:$0xff] %vm2289, 0.0
  %2470 = vst.msk [vmem:[#allocation4 + $0xc8] sm:$0x3] %vm2445, 0.0
  %2471 = vst.msk [vmem:[#allocation4 + $0xd0] sm:$0xff] %vm2289, 0.0
  %2472 = vst.msk [vmem:[#allocation4 + $0xd8] sm:$0x3] %vm2445, 0.0
  %2473 = vst.msk [vmem:[#allocation4 + $0xe0] sm:$0xff] %vm2289, 0.0
  %2474 = vst.msk [vmem:[#allocation4 + $0xe8] sm:$0x3] %vm2445, 0.0
  %2475 = vst.msk [vmem:[#allocation4 + $0xf0] sm:$0xff] %vm2289, 0.0
  %2476 = vst.msk [vmem:[#allocation4 + $0xf8] sm:$0x3] %vm2445, 0.0
  %2477 = vst.msk [vmem:[#allocation4 + $0x100] sm:$0xff] %vm2289, 0.0
  %2478 = vst.msk [vmem:[#allocation4 + $0x108] sm:$0x3] %vm2445, 0.0
  %2479 = vst.msk [vmem:[#allocation4 + $0x110] sm:$0xff] %vm2289, 0.0
  %2480 = vst.msk [vmem:[#allocation4 + $0x118] sm:$0x3] %vm2445, 0.0
  %2481 = vst.msk [vmem:[#allocation4 + $0x120] sm:$0xff] %vm2289, 0.0
  %2482 = vst.msk [vmem:[#allocation4 + $0x128] sm:$0x3] %vm2445, 0.0
  %2483 = vst.msk [vmem:[#allocation4 + $0x130] sm:$0xff] %vm2289, 0.0
  %2484 = vst.msk [vmem:[#allocation4 + $0x138] sm:$0x3] %vm2445, 0.0
  %s2485 = scalar_lea.vmem [#allocation4], 16
  %2486 = vst.msk [vmem:[%s2485 + $0x1] sm:$0xff] %vm2289, %v2428
  %2487 = vst.msk [vmem:[%s2485 + $0x11] sm:$0xff] %vm2289, %v2429
  %2488 = vst.msk [vmem:[%s2485 + $0x21] sm:$0xff] %vm2289, %v2430
  %2489 = vst.msk [vmem:[%s2485 + $0x31] sm:$0xff] %vm2289, %v2431
  %2490 = vst.msk [vmem:[%s2485 + $0x41] sm:$0xff] %vm2289, %v2432
  %2491 = vst.msk [vmem:[%s2485 + $0x51] sm:$0xff] %vm2289, %v2433
  %2492 = vst.msk [vmem:[%s2485 + $0x61] sm:$0xff] %vm2289, %v2434
  %2493 = vst.msk [vmem:[%s2485 + $0x71] sm:$0xff] %vm2289, %v2435
  %2494 = vst.msk [vmem:[%s2485 + $0xa1] sm:$0xff] %vm2289, %v2436
  %2495 = vst.msk [vmem:[%s2485 + $0xb1] sm:$0xff] %vm2289, %v2437
  %2496 = vst.msk [vmem:[%s2485 + $0xc1] sm:$0xff] %vm2289, %v2438
  %2497 = vst.msk [vmem:[%s2485 + $0xd1] sm:$0xff] %vm2289, %v2439
  %2498 = vst.msk [vmem:[%s2485 + $0xe1] sm:$0xff] %vm2289, %v2440
  %2499 = vst.msk [vmem:[%s2485 + $0xf1] sm:$0xff] %vm2289, %v2441
  %2500 = vst.msk [vmem:[%s2485 + $0x101] sm:$0xff] %vm2289, %v2442
  %2501 = vst.msk [vmem:[%s2485 + $0x111] sm:$0xff] %vm2289, %v2443
  %v2502 = vld [vmem:[#allocation4] sm:$0xff]
  %v2503 = vld [vmem:[#allocation4 + $0x10] sm:$0xff]
  %v2504 = vld [vmem:[#allocation4 + $0x20] sm:$0xff]
  %v2505 = vld [vmem:[#allocation4 + $0x30] sm:$0xff]
  %v2506 = vld [vmem:[#allocation4 + $0x40] sm:$0xff]
  %v2507 = vld [vmem:[#allocation4 + $0x50] sm:$0xff]
  %v2508 = vld [vmem:[#allocation4 + $0x60] sm:$0xff]
  %v2509 = vld [vmem:[#allocation4 + $0x70] sm:$0xff]
  %v2510 = vld [vmem:[#allocation4 + $0xa0] sm:$0xff]
  %v2511 = vld [vmem:[#allocation4 + $0xb0] sm:$0xff]
  %v2512 = vld [vmem:[#allocation4 + $0xc0] sm:$0xff]
  %v2513 = vld [vmem:[#allocation4 + $0xd0] sm:$0xff]
  %v2514 = vld [vmem:[#allocation4 + $0xe0] sm:$0xff]
  %v2515 = vld [vmem:[#allocation4 + $0xf0] sm:$0xff]
  %v2516 = vld [vmem:[#allocation4 + $0x100] sm:$0xff]
  %v2517 = vld [vmem:[#allocation4 + $0x110] sm:$0xff]
  %2518 = vst.msk [vmem:[#allocation6] sm:$0xff] %vm2289, %v2502
  %2519 = vst.msk [vmem:[#allocation6 + $0x10] sm:$0xff] %vm2289, %v2503
  %2520 = vst.msk [vmem:[#allocation6 + $0x20] sm:$0xff] %vm2289, %v2504
  %2521 = vst.msk [vmem:[#allocation6 + $0x30] sm:$0xff] %vm2289, %v2505
  %2522 = vst.msk [vmem:[#allocation6 + $0x40] sm:$0xff] %vm2289, %v2506
  %2523 = vst.msk [vmem:[#allocation6 + $0x50] sm:$0xff] %vm2289, %v2507
  %2524 = vst.msk [vmem:[#allocation6 + $0x60] sm:$0xff] %vm2289, %v2508
  %2525 = vst.msk [vmem:[#allocation6 + $0x70] sm:$0xff] %vm2289, %v2509
  %2526 = vst.msk [vmem:[#allocation6 + $0x80] sm:$0xff] %vm2289, %v2510
  %2527 = vst.msk [vmem:[#allocation6 + $0x90] sm:$0xff] %vm2289, %v2511
  %2528 = vst.msk [vmem:[#allocation6 + $0xa0] sm:$0xff] %vm2289, %v2512
  %2529 = vst.msk [vmem:[#allocation6 + $0xb0] sm:$0xff] %vm2289, %v2513
  %2530 = vst.msk [vmem:[#allocation6 + $0xc0] sm:$0xff] %vm2289, %v2514
  %2531 = vst.msk [vmem:[#allocation6 + $0xd0] sm:$0xff] %vm2289, %v2515
  %2532 = vst.msk [vmem:[#allocation6 + $0xe0] sm:$0xff] %vm2289, %v2516
  %2533 = vst.msk [vmem:[#allocation6 + $0xf0] sm:$0xff] %vm2289, %v2517
  %v2534 = vld [vmem:[#allocation4 + $0x1] sm:$0xff]
  %v2535 = vld [vmem:[#allocation4 + $0x11] sm:$0xff]
  %v2536 = vld [vmem:[#allocation4 + $0x21] sm:$0xff]
  %v2537 = vld [vmem:[#allocation4 + $0x31] sm:$0xff]
  %v2538 = vld [vmem:[#allocation4 + $0x41] sm:$0xff]
  %v2539 = vld [vmem:[#allocation4 + $0x51] sm:$0xff]
  %v2540 = vld [vmem:[#allocation4 + $0x61] sm:$0xff]
  %v2541 = vld [vmem:[#allocation4 + $0x71] sm:$0xff]
  %v2542 = vld [vmem:[#allocation4 + $0xa1] sm:$0xff]
  %v2543 = vld [vmem:[#allocation4 + $0xb1] sm:$0xff]
  %v2544 = vld [vmem:[#allocation4 + $0xc1] sm:$0xff]
  %v2545 = vld [vmem:[#allocation4 + $0xd1] sm:$0xff]
  %v2546 = vld [vmem:[#allocation4 + $0xe1] sm:$0xff]
  %v2547 = vld [vmem:[#allocation4 + $0xf1] sm:$0xff]
  %v2548 = vld [vmem:[#allocation4 + $0x101] sm:$0xff]
  %v2549 = vld [vmem:[#allocation4 + $0x111] sm:$0xff]
  %2566 = vrot.lane.b32.xlu0 %v2534, 16
  %v2567 = vpop.permute.xlu0 %2566
  %2568 = vrot.lane.b32.xlu0 %v2535, 16
  %v2569 = vpop.permute.xlu0 %2568
  %2570 = vrot.lane.b32.xlu0 %v2536, 16
  %v2571 = vpop.permute.xlu0 %2570
  %2572 = vrot.lane.b32.xlu0 %v2537, 16
  %v2573 = vpop.permute.xlu0 %2572
  %2574 = vrot.lane.b32.xlu0 %v2538, 16
  %v2575 = vpop.permute.xlu0 %2574
  %2576 = vrot.lane.b32.xlu0 %v2539, 16
  %v2577 = vpop.permute.xlu0 %2576
  %2578 = vrot.lane.b32.xlu0 %v2540, 16
  %v2579 = vpop.permute.xlu0 %2578
  %2580 = vrot.lane.b32.xlu0 %v2541, 16
  %v2581 = vpop.permute.xlu0 %2580
  %2582 = vrot.lane.b32.xlu0 %v2542, 16
  %v2583 = vpop.permute.xlu0 %2582
  %2584 = vrot.lane.b32.xlu0 %v2543, 16
  %v2585 = vpop.permute.xlu0 %2584
  %2586 = vrot.lane.b32.xlu0 %v2544, 16
  %v2587 = vpop.permute.xlu0 %2586
  %2588 = vrot.lane.b32.xlu0 %v2545, 16
  %v2589 = vpop.permute.xlu0 %2588
  %2590 = vrot.lane.b32.xlu0 %v2546, 16
  %v2591 = vpop.permute.xlu0 %2590
  %2592 = vrot.lane.b32.xlu0 %v2547, 16
  %v2593 = vpop.permute.xlu0 %2592
  %2594 = vrot.lane.b32.xlu0 %v2548, 16
  %v2595 = vpop.permute.xlu0 %2594
  %2596 = vrot.lane.b32.xlu0 %v2549, 16
  %v2597 = vpop.permute.xlu0 %2596
  %vm2614 = vcmask 261248
  %2615 = vst.msk [vmem:[#allocation6] sm:$0xff] %vm2614, %v2567
  %2616 = vst.msk [vmem:[#allocation6 + $0x10] sm:$0xff] %vm2614, %v2569
  %2617 = vst.msk [vmem:[#allocation6 + $0x20] sm:$0xff] %vm2614, %v2571
  %2618 = vst.msk [vmem:[#allocation6 + $0x30] sm:$0xff] %vm2614, %v2573
  %2619 = vst.msk [vmem:[#allocation6 + $0x40] sm:$0xff] %vm2614, %v2575
  %2620 = vst.msk [vmem:[#allocation6 + $0x50] sm:$0xff] %vm2614, %v2577
  %2621 = vst.msk [vmem:[#allocation6 + $0x60] sm:$0xff] %vm2614, %v2579
  %2622 = vst.msk [vmem:[#allocation6 + $0x70] sm:$0xff] %vm2614, %v2581
  %2623 = vst.msk [vmem:[#allocation6 + $0x80] sm:$0xff] %vm2614, %v2583
  %2624 = vst.msk [vmem:[#allocation6 + $0x90] sm:$0xff] %vm2614, %v2585
  %2625 = vst.msk [vmem:[#allocation6 + $0xa0] sm:$0xff] %vm2614, %v2587
  %2626 = vst.msk [vmem:[#allocation6 + $0xb0] sm:$0xff] %vm2614, %v2589
  %2627 = vst.msk [vmem:[#allocation6 + $0xc0] sm:$0xff] %vm2614, %v2591
  %2628 = vst.msk [vmem:[#allocation6 + $0xd0] sm:$0xff] %vm2614, %v2593
  %2629 = vst.msk [vmem:[#allocation6 + $0xe0] sm:$0xff] %vm2614, %v2595
  %2630 = vst.msk [vmem:[#allocation6 + $0xf0] sm:$0xff] %vm2614, %v2597
  %v2631 = vld [vmem:[#allocation4 + $0x2] sm:$0xff]
  %v2632 = vld [vmem:[#allocation4 + $0x12] sm:$0xff]
  %v2633 = vld [vmem:[#allocation4 + $0x22] sm:$0xff]
  %v2634 = vld [vmem:[#allocation4 + $0x32] sm:$0xff]
  %v2635 = vld [vmem:[#allocation4 + $0x42] sm:$0xff]
  %v2636 = vld [vmem:[#allocation4 + $0x52] sm:$0xff]
  %v2637 = vld [vmem:[#allocation4 + $0x62] sm:$0xff]
  %v2638 = vld [vmem:[#allocation4 + $0x72] sm:$0xff]
  %v2639 = vld [vmem:[#allocation4 + $0xa2] sm:$0xff]
  %v2640 = vld [vmem:[#allocation4 + $0xb2] sm:$0xff]
  %v2641 = vld [vmem:[#allocation4 + $0xc2] sm:$0xff]
  %v2642 = vld [vmem:[#allocation4 + $0xd2] sm:$0xff]
  %v2643 = vld [vmem:[#allocation4 + $0xe2] sm:$0xff]
  %v2644 = vld [vmem:[#allocation4 + $0xf2] sm:$0xff]
  %v2645 = vld [vmem:[#allocation4 + $0x102] sm:$0xff]
  %v2646 = vld [vmem:[#allocation4 + $0x112] sm:$0xff]
  %2663 = vrot.lane.b32.xlu0 %v2631, 32
  %v2664 = vpop.permute.xlu0 %2663
  %2665 = vrot.lane.b32.xlu0 %v2632, 32
  %v2666 = vpop.permute.xlu0 %2665
  %2667 = vrot.lane.b32.xlu0 %v2633, 32
  %v2668 = vpop.permute.xlu0 %2667
  %2669 = vrot.lane.b32.xlu0 %v2634, 32
  %v2670 = vpop.permute.xlu0 %2669
  %2671 = vrot.lane.b32.xlu0 %v2635, 32
  %v2672 = vpop.permute.xlu0 %2671
  %2673 = vrot.lane.b32.xlu0 %v2636, 32
  %v2674 = vpop.permute.xlu0 %2673
  %2675 = vrot.lane.b32.xlu0 %v2637, 32
  %v2676 = vpop.permute.xlu0 %2675
  %2677 = vrot.lane.b32.xlu0 %v2638, 32
  %v2678 = vpop.permute.xlu0 %2677
  %2679 = vrot.lane.b32.xlu0 %v2639, 32
  %v2680 = vpop.permute.xlu0 %2679
  %2681 = vrot.lane.b32.xlu0 %v2640, 32
  %v2682 = vpop.permute.xlu0 %2681
  %2683 = vrot.lane.b32.xlu0 %v2641, 32
  %v2684 = vpop.permute.xlu0 %2683
  %2685 = vrot.lane.b32.xlu0 %v2642, 32
  %v2686 = vpop.permute.xlu0 %2685
  %2687 = vrot.lane.b32.xlu0 %v2643, 32
  %v2688 = vpop.permute.xlu0 %2687
  %2689 = vrot.lane.b32.xlu0 %v2644, 32
  %v2690 = vpop.permute.xlu0 %2689
  %2691 = vrot.lane.b32.xlu0 %v2645, 32
  %v2692 = vpop.permute.xlu0 %2691
  %2693 = vrot.lane.b32.xlu0 %v2646, 32
  %v2694 = vpop.permute.xlu0 %2693
  %vm2711 = vcmask 392448
  %2712 = vst.msk [vmem:[#allocation6] sm:$0xff] %vm2711, %v2664
  %2713 = vst.msk [vmem:[#allocation6 + $0x10] sm:$0xff] %vm2711, %v2666
  %2714 = vst.msk [vmem:[#allocation6 + $0x20] sm:$0xff] %vm2711, %v2668
  %2715 = vst.msk [vmem:[#allocation6 + $0x30] sm:$0xff] %vm2711, %v2670
  %2716 = vst.msk [vmem:[#allocation6 + $0x40] sm:$0xff] %vm2711, %v2672
  %2717 = vst.msk [vmem:[#allocation6 + $0x50] sm:$0xff] %vm2711, %v2674
  %2718 = vst.msk [vmem:[#allocation6 + $0x60] sm:$0xff] %vm2711, %v2676
  %2719 = vst.msk [vmem:[#allocation6 + $0x70] sm:$0xff] %vm2711, %v2678
  %2720 = vst.msk [vmem:[#allocation6 + $0x80] sm:$0xff] %vm2711, %v2680
  %2721 = vst.msk [vmem:[#allocation6 + $0x90] sm:$0xff] %vm2711, %v2682
  %2722 = vst.msk [vmem:[#allocation6 + $0xa0] sm:$0xff] %vm2711, %v2684
  %2723 = vst.msk [vmem:[#allocation6 + $0xb0] sm:$0xff] %vm2711, %v2686
  %2724 = vst.msk [vmem:[#allocation6 + $0xc0] sm:$0xff] %vm2711, %v2688
  %2725 = vst.msk [vmem:[#allocation6 + $0xd0] sm:$0xff] %vm2711, %v2690
  %2726 = vst.msk [vmem:[#allocation6 + $0xe0] sm:$0xff] %vm2711, %v2692
  %2727 = vst.msk [vmem:[#allocation6 + $0xf0] sm:$0xff] %vm2711, %v2694
  %v2728 = vld [vmem:[%s2485] sm:$0xff]
  %v2729 = vld [vmem:[%s2485 + $0x10] sm:$0xff]
  %v2730 = vld [vmem:[%s2485 + $0x20] sm:$0xff]
  %v2731 = vld [vmem:[%s2485 + $0x30] sm:$0xff]
  %v2732 = vld [vmem:[%s2485 + $0x40] sm:$0xff]
  %v2733 = vld [vmem:[%s2485 + $0x50] sm:$0xff]
  %v2734 = vld [vmem:[%s2485 + $0x60] sm:$0xff]
  %v2735 = vld [vmem:[%s2485 + $0x70] sm:$0xff]
  %v2736 = vld [vmem:[%s2485 + $0xa0] sm:$0xff]
  %v2737 = vld [vmem:[%s2485 + $0xb0] sm:$0xff]
  %v2738 = vld [vmem:[%s2485 + $0xc0] sm:$0xff]
  %v2739 = vld [vmem:[%s2485 + $0xd0] sm:$0xff]
  %v2740 = vld [vmem:[%s2485 + $0xe0] sm:$0xff]
  %v2741 = vld [vmem:[%s2485 + $0xf0] sm:$0xff]
  %v2742 = vld [vmem:[%s2485 + $0x100] sm:$0xff]
  %v2743 = vld [vmem:[%s2485 + $0x110] sm:$0xff]
  %2760 = vrot.lane.b32.xlu0 %v2728, 48
  %v2761 = vpop.permute.xlu0 %2760
  %2762 = vrot.lane.b32.xlu0 %v2729, 48
  %v2763 = vpop.permute.xlu0 %2762
  %2764 = vrot.lane.b32.xlu0 %v2730, 48
  %v2765 = vpop.permute.xlu0 %2764
  %2766 = vrot.lane.b32.xlu0 %v2731, 48
  %v2767 = vpop.permute.xlu0 %2766
  %2768 = vrot.lane.b32.xlu0 %v2732, 48
  %v2769 = vpop.permute.xlu0 %2768
  %2770 = vrot.lane.b32.xlu0 %v2733, 48
  %v2771 = vpop.permute.xlu0 %2770
  %2772 = vrot.lane.b32.xlu0 %v2734, 48
  %v2773 = vpop.permute.xlu0 %2772
  %2774 = vrot.lane.b32.xlu0 %v2735, 48
  %v2775 = vpop.permute.xlu0 %2774
  %2776 = vrot.lane.b32.xlu0 %v2736, 48
  %v2777 = vpop.permute.xlu0 %2776
  %2778 = vrot.lane.b32.xlu0 %v2737, 48
  %v2779 = vpop.permute.xlu0 %2778
  %2780 = vrot.lane.b32.xlu0 %v2738, 48
  %v2781 = vpop.permute.xlu0 %2780
  %2782 = vrot.lane.b32.xlu0 %v2739, 48
  %v2783 = vpop.permute.xlu0 %2782
  %2784 = vrot.lane.b32.xlu0 %v2740, 48
  %v2785 = vpop.permute.xlu0 %2784
  %2786 = vrot.lane.b32.xlu0 %v2741, 48
  %v2787 = vpop.permute.xlu0 %2786
  %2788 = vrot.lane.b32.xlu0 %v2742, 48
  %v2789 = vpop.permute.xlu0 %2788
  %2790 = vrot.lane.b32.xlu0 %v2743, 48
  %v2791 = vpop.permute.xlu0 %2790
  %vm2808 = vcmask 523648
  %2809 = vst.msk [vmem:[#allocation6] sm:$0xff] %vm2808, %v2761
  %2810 = vst.msk [vmem:[#allocation6 + $0x10] sm:$0xff] %vm2808, %v2763
  %2811 = vst.msk [vmem:[#allocation6 + $0x20] sm:$0xff] %vm2808, %v2765
  %2812 = vst.msk [vmem:[#allocation6 + $0x30] sm:$0xff] %vm2808, %v2767
  %2813 = vst.msk [vmem:[#allocation6 + $0x40] sm:$0xff] %vm2808, %v2769
  %2814 = vst.msk [vmem:[#allocation6 + $0x50] sm:$0xff] %vm2808, %v2771
  %2815 = vst.msk [vmem:[#allocation6 + $0x60] sm:$0xff] %vm2808, %v2773
  %2816 = vst.msk [vmem:[#allocation6 + $0x70] sm:$0xff] %vm2808, %v2775
  %2817 = vst.msk [vmem:[#allocation6 + $0x80] sm:$0xff] %vm2808, %v2777
  %2818 = vst.msk [vmem:[#allocation6 + $0x90] sm:$0xff] %vm2808, %v2779
  %2819 = vst.msk [vmem:[#allocation6 + $0xa0] sm:$0xff] %vm2808, %v2781
  %2820 = vst.msk [vmem:[#allocation6 + $0xb0] sm:$0xff] %vm2808, %v2783
  %2821 = vst.msk [vmem:[#allocation6 + $0xc0] sm:$0xff] %vm2808, %v2785
  %2822 = vst.msk [vmem:[#allocation6 + $0xd0] sm:$0xff] %vm2808, %v2787
  %2823 = vst.msk [vmem:[#allocation6 + $0xe0] sm:$0xff] %vm2808, %v2789
  %2824 = vst.msk [vmem:[#allocation6 + $0xf0] sm:$0xff] %vm2808, %v2791
  %v2825 = vld [vmem:[%s2485 + $0x1] sm:$0xff]
  %v2826 = vld [vmem:[%s2485 + $0x11] sm:$0xff]
  %v2827 = vld [vmem:[%s2485 + $0x21] sm:$0xff]
  %v2828 = vld [vmem:[%s2485 + $0x31] sm:$0xff]
  %v2829 = vld [vmem:[%s2485 + $0x41] sm:$0xff]
  %v2830 = vld [vmem:[%s2485 + $0x51] sm:$0xff]
  %v2831 = vld [vmem:[%s2485 + $0x61] sm:$0xff]
  %v2832 = vld [vmem:[%s2485 + $0x71] sm:$0xff]
  %v2833 = vld [vmem:[%s2485 + $0xa1] sm:$0xff]
  %v2834 = vld [vmem:[%s2485 + $0xb1] sm:$0xff]
  %v2835 = vld [vmem:[%s2485 + $0xc1] sm:$0xff]
  %v2836 = vld [vmem:[%s2485 + $0xd1] sm:$0xff]
  %v2837 = vld [vmem:[%s2485 + $0xe1] sm:$0xff]
  %v2838 = vld [vmem:[%s2485 + $0xf1] sm:$0xff]
  %v2839 = vld [vmem:[%s2485 + $0x101] sm:$0xff]
  %v2840 = vld [vmem:[%s2485 + $0x111] sm:$0xff]
  %2857 = vrot.lane.b32.xlu0 %v2825, 64
  %v2858 = vpop.permute.xlu0 %2857
  %2859 = vrot.lane.b32.xlu0 %v2826, 64
  %v2860 = vpop.permute.xlu0 %2859
  %2861 = vrot.lane.b32.xlu0 %v2827, 64
  %v2862 = vpop.permute.xlu0 %2861
  %2863 = vrot.lane.b32.xlu0 %v2828, 64
  %v2864 = vpop.permute.xlu0 %2863
  %2865 = vrot.lane.b32.xlu0 %v2829, 64
  %v2866 = vpop.permute.xlu0 %2865
  %2867 = vrot.lane.b32.xlu0 %v2830, 64
  %v2868 = vpop.permute.xlu0 %2867
  %2869 = vrot.lane.b32.xlu0 %v2831, 64
  %v2870 = vpop.permute.xlu0 %2869
  %2871 = vrot.lane.b32.xlu0 %v2832, 64
  %v2872 = vpop.permute.xlu0 %2871
  %2873 = vrot.lane.b32.xlu0 %v2833, 64
  %v2874 = vpop.permute.xlu0 %2873
  %2875 = vrot.lane.b32.xlu0 %v2834, 64
  %v2876 = vpop.permute.xlu0 %2875
  %2877 = vrot.lane.b32.xlu0 %v2835, 64
  %v2878 = vpop.permute.xlu0 %2877
  %2879 = vrot.lane.b32.xlu0 %v2836, 64
  %v2880 = vpop.permute.xlu0 %2879
  %2881 = vrot.lane.b32.xlu0 %v2837, 64
  %v2882 = vpop.permute.xlu0 %2881
  %2883 = vrot.lane.b32.xlu0 %v2838, 64
  %v2884 = vpop.permute.xlu0 %2883
  %2885 = vrot.lane.b32.xlu0 %v2839, 64
  %v2886 = vpop.permute.xlu0 %2885
  %2887 = vrot.lane.b32.xlu0 %v2840, 64
  %v2888 = vpop.permute.xlu0 %2887
  %vm2905 = vcmask 654848
  %2906 = vst.msk [vmem:[#allocation6] sm:$0xff] %vm2905, %v2858
  %2907 = vst.msk [vmem:[#allocation6 + $0x10] sm:$0xff] %vm2905, %v2860
  %2908 = vst.msk [vmem:[#allocation6 + $0x20] sm:$0xff] %vm2905, %v2862
  %2909 = vst.msk [vmem:[#allocation6 + $0x30] sm:$0xff] %vm2905, %v2864
  %2910 = vst.msk [vmem:[#allocation6 + $0x40] sm:$0xff] %vm2905, %v2866
  %2911 = vst.msk [vmem:[#allocation6 + $0x50] sm:$0xff] %vm2905, %v2868
  %2912 = vst.msk [vmem:[#allocation6 + $0x60] sm:$0xff] %vm2905, %v2870
  %2913 = vst.msk [vmem:[#allocation6 + $0x70] sm:$0xff] %vm2905, %v2872
  %2914 = vst.msk [vmem:[#allocation6 + $0x80] sm:$0xff] %vm2905, %v2874
  %2915 = vst.msk [vmem:[#allocation6 + $0x90] sm:$0xff] %vm2905, %v2876
  %2916 = vst.msk [vmem:[#allocation6 + $0xa0] sm:$0xff] %vm2905, %v2878
  %2917 = vst.msk [vmem:[#allocation6 + $0xb0] sm:$0xff] %vm2905, %v2880
  %2918 = vst.msk [vmem:[#allocation6 + $0xc0] sm:$0xff] %vm2905, %v2882
  %2919 = vst.msk [vmem:[#allocation6 + $0xd0] sm:$0xff] %vm2905, %v2884
  %2920 = vst.msk [vmem:[#allocation6 + $0xe0] sm:$0xff] %vm2905, %v2886
  %2921 = vst.msk [vmem:[#allocation6 + $0xf0] sm:$0xff] %vm2905, %v2888
  %v2922 = vld [vmem:[%s2485 + $0x2] sm:$0xff]
  %v2923 = vld [vmem:[%s2485 + $0x12] sm:$0xff]
  %v2924 = vld [vmem:[%s2485 + $0x22] sm:$0xff]
  %v2925 = vld [vmem:[%s2485 + $0x32] sm:$0xff]
  %v2926 = vld [vmem:[%s2485 + $0x42] sm:$0xff]
  %v2927 = vld [vmem:[%s2485 + $0x52] sm:$0xff]
  %v2928 = vld [vmem:[%s2485 + $0x62] sm:$0xff]
  %v2929 = vld [vmem:[%s2485 + $0x72] sm:$0xff]
  %v2930 = vld [vmem:[%s2485 + $0xa2] sm:$0xff]
  %v2931 = vld [vmem:[%s2485 + $0xb2] sm:$0xff]
  %v2932 = vld [vmem:[%s2485 + $0xc2] sm:$0xff]
  %v2933 = vld [vmem:[%s2485 + $0xd2] sm:$0xff]
  %v2934 = vld [vmem:[%s2485 + $0xe2] sm:$0xff]
  %v2935 = vld [vmem:[%s2485 + $0xf2] sm:$0xff]
  %v2936 = vld [vmem:[%s2485 + $0x102] sm:$0xff]
  %v2937 = vld [vmem:[%s2485 + $0x112] sm:$0xff]
  %2954 = vrot.lane.b32.xlu0 %v2922, 80
  %v2955 = vpop.permute.xlu0 %2954
  %2956 = vrot.lane.b32.xlu0 %v2923, 80
  %v2957 = vpop.permute.xlu0 %2956
  %2958 = vrot.lane.b32.xlu0 %v2924, 80
  %v2959 = vpop.permute.xlu0 %2958
  %2960 = vrot.lane.b32.xlu0 %v2925, 80
  %v2961 = vpop.permute.xlu0 %2960
  %2962 = vrot.lane.b32.xlu0 %v2926, 80
  %v2963 = vpop.permute.xlu0 %2962
  %2964 = vrot.lane.b32.xlu0 %v2927, 80
  %v2965 = vpop.permute.xlu0 %2964
  %2966 = vrot.lane.b32.xlu0 %v2928, 80
  %v2967 = vpop.permute.xlu0 %2966
  %2968 = vrot.lane.b32.xlu0 %v2929, 80
  %v2969 = vpop.permute.xlu0 %2968
  %2970 = vrot.lane.b32.xlu0 %v2930, 80
  %v2971 = vpop.permute.xlu0 %2970
  %2972 = vrot.lane.b32.xlu0 %v2931, 80
  %v2973 = vpop.permute.xlu0 %2972
  %2974 = vrot.lane.b32.xlu0 %v2932, 80
  %v2975 = vpop.permute.xlu0 %2974
  %2976 = vrot.lane.b32.xlu0 %v2933, 80
  %v2977 = vpop.permute.xlu0 %2976
  %2978 = vrot.lane.b32.xlu0 %v2934, 80
  %v2979 = vpop.permute.xlu0 %2978
  %2980 = vrot.lane.b32.xlu0 %v2935, 80
  %v2981 = vpop.permute.xlu0 %2980
  %2982 = vrot.lane.b32.xlu0 %v2936, 80
  %v2983 = vpop.permute.xlu0 %2982
  %2984 = vrot.lane.b32.xlu0 %v2937, 80
  %v2985 = vpop.permute.xlu0 %2984
  %vm3002 = vcmask 786048
  %3003 = vst.msk [vmem:[#allocation6] sm:$0xff] %vm3002, %v2955
  %3004 = vst.msk [vmem:[#allocation6 + $0x10] sm:$0xff] %vm3002, %v2957
  %3005 = vst.msk [vmem:[#allocation6 + $0x20] sm:$0xff] %vm3002, %v2959
  %3006 = vst.msk [vmem:[#allocation6 + $0x30] sm:$0xff] %vm3002, %v2961
  %3007 = vst.msk [vmem:[#allocation6 + $0x40] sm:$0xff] %vm3002, %v2963
  %3008 = vst.msk [vmem:[#allocation6 + $0x50] sm:$0xff] %vm3002, %v2965
  %3009 = vst.msk [vmem:[#allocation6 + $0x60] sm:$0xff] %vm3002, %v2967
  %3010 = vst.msk [vmem:[#allocation6 + $0x70] sm:$0xff] %vm3002, %v2969
  %3011 = vst.msk [vmem:[#allocation6 + $0x80] sm:$0xff] %vm3002, %v2971
  %3012 = vst.msk [vmem:[#allocation6 + $0x90] sm:$0xff] %vm3002, %v2973
  %3013 = vst.msk [vmem:[#allocation6 + $0xa0] sm:$0xff] %vm3002, %v2975
  %3014 = vst.msk [vmem:[#allocation6 + $0xb0] sm:$0xff] %vm3002, %v2977
  %3015 = vst.msk [vmem:[#allocation6 + $0xc0] sm:$0xff] %vm3002, %v2979
  %3016 = vst.msk [vmem:[#allocation6 + $0xd0] sm:$0xff] %vm3002, %v2981
  %3017 = vst.msk [vmem:[#allocation6 + $0xe0] sm:$0xff] %vm3002, %v2983
  %3018 = vst.msk [vmem:[#allocation6 + $0xf0] sm:$0xff] %vm3002, %v2985
  %s3019 = scalar_lea.vmem [#allocation4], 32
  %v3020 = vld [vmem:[%s3019] sm:$0xff]
  %v3021 = vld [vmem:[%s3019 + $0x10] sm:$0xff]
  %v3022 = vld [vmem:[%s3019 + $0x20] sm:$0xff]
  %v3023 = vld [vmem:[%s3019 + $0x30] sm:$0xff]
  %v3024 = vld [vmem:[%s3019 + $0x40] sm:$0xff]
  %v3025 = vld [vmem:[%s3019 + $0x50] sm:$0xff]
  %v3026 = vld [vmem:[%s3019 + $0x60] sm:$0xff]
  %v3027 = vld [vmem:[%s3019 + $0x70] sm:$0xff]
  %v3028 = vld [vmem:[%s3019 + $0xa0] sm:$0xff]
  %v3029 = vld [vmem:[%s3019 + $0xb0] sm:$0xff]
  %v3030 = vld [vmem:[%s3019 + $0xc0] sm:$0xff]
  %v3031 = vld [vmem:[%s3019 + $0xd0] sm:$0xff]
  %v3032 = vld [vmem:[%s3019 + $0xe0] sm:$0xff]
  %v3033 = vld [vmem:[%s3019 + $0xf0] sm:$0xff]
  %v3034 = vld [vmem:[%s3019 + $0x100] sm:$0xff]
  %v3035 = vld [vmem:[%s3019 + $0x110] sm:$0xff]
  %3052 = vrot.lane.b32.xlu0 %v3020, 96
  %v3053 = vpop.permute.xlu0 %3052
  %3054 = vrot.lane.b32.xlu0 %v3021, 96
  %v3055 = vpop.permute.xlu0 %3054
  %3056 = vrot.lane.b32.xlu0 %v3022, 96
  %v3057 = vpop.permute.xlu0 %3056
  %3058 = vrot.lane.b32.xlu0 %v3023, 96
  %v3059 = vpop.permute.xlu0 %3058
  %3060 = vrot.lane.b32.xlu0 %v3024, 96
  %v3061 = vpop.permute.xlu0 %3060
  %3062 = vrot.lane.b32.xlu0 %v3025, 96
  %v3063 = vpop.permute.xlu0 %3062
  %3064 = vrot.lane.b32.xlu0 %v3026, 96
  %v3065 = vpop.permute.xlu0 %3064
  %3066 = vrot.lane.b32.xlu0 %v3027, 96
  %v3067 = vpop.permute.xlu0 %3066
  %3068 = vrot.lane.b32.xlu0 %v3028, 96
  %v3069 = vpop.permute.xlu0 %3068
  %3070 = vrot.lane.b32.xlu0 %v3029, 96
  %v3071 = vpop.permute.xlu0 %3070
  %3072 = vrot.lane.b32.xlu0 %v3030, 96
  %v3073 = vpop.permute.xlu0 %3072
  %3074 = vrot.lane.b32.xlu0 %v3031, 96
  %v3075 = vpop.permute.xlu0 %3074
  %3076 = vrot.lane.b32.xlu0 %v3032, 96
  %v3077 = vpop.permute.xlu0 %3076
  %3078 = vrot.lane.b32.xlu0 %v3033, 96
  %v3079 = vpop.permute.xlu0 %3078
  %3080 = vrot.lane.b32.xlu0 %v3034, 96
  %v3081 = vpop.permute.xlu0 %3080
  %3082 = vrot.lane.b32.xlu0 %v3035, 96
  %v3083 = vpop.permute.xlu0 %3082
  %vm3100 = vcmask 917248
  %3101 = vst.msk [vmem:[#allocation6] sm:$0xff] %vm3100, %v3053
  %3102 = vst.msk [vmem:[#allocation6 + $0x10] sm:$0xff] %vm3100, %v3055
  %3103 = vst.msk [vmem:[#allocation6 + $0x20] sm:$0xff] %vm3100, %v3057
  %3104 = vst.msk [vmem:[#allocation6 + $0x30] sm:$0xff] %vm3100, %v3059
  %3105 = vst.msk [vmem:[#allocation6 + $0x40] sm:$0xff] %vm3100, %v3061
  %3106 = vst.msk [vmem:[#allocation6 + $0x50] sm:$0xff] %vm3100, %v3063
  %3107 = vst.msk [vmem:[#allocation6 + $0x60] sm:$0xff] %vm3100, %v3065
  %3108 = vst.msk [vmem:[#allocation6 + $0x70] sm:$0xff] %vm3100, %v3067
  %3109 = vst.msk [vmem:[#allocation6 + $0x80] sm:$0xff] %vm3100, %v3069
  %3110 = vst.msk [vmem:[#allocation6 + $0x90] sm:$0xff] %vm3100, %v3071
  %3111 = vst.msk [vmem:[#allocation6 + $0xa0] sm:$0xff] %vm3100, %v3073
  %3112 = vst.msk [vmem:[#allocation6 + $0xb0] sm:$0xff] %vm3100, %v3075
  %3113 = vst.msk [vmem:[#allocation6 + $0xc0] sm:$0xff] %vm3100, %v3077
  %3114 = vst.msk [vmem:[#allocation6 + $0xd0] sm:$0xff] %vm3100, %v3079
  %3115 = vst.msk [vmem:[#allocation6 + $0xe0] sm:$0xff] %vm3100, %v3081
  %3116 = vst.msk [vmem:[#allocation6 + $0xf0] sm:$0xff] %vm3100, %v3083
  %v3117 = vld [vmem:[%s3019 + $0x1] sm:$0xff]
  %v3118 = vld [vmem:[%s3019 + $0x11] sm:$0xff]
  %v3119 = vld [vmem:[%s3019 + $0x21] sm:$0xff]
  %v3120 = vld [vmem:[%s3019 + $0x31] sm:$0xff]
  %v3121 = vld [vmem:[%s3019 + $0x41] sm:$0xff]
  %v3122 = vld [vmem:[%s3019 + $0x51] sm:$0xff]
  %v3123 = vld [vmem:[%s3019 + $0x61] sm:$0xff]
  %v3124 = vld [vmem:[%s3019 + $0x71] sm:$0xff]
  %v3125 = vld [vmem:[%s3019 + $0xa1] sm:$0xff]
  %v3126 = vld [vmem:[%s3019 + $0xb1] sm:$0xff]
  %v3127 = vld [vmem:[%s3019 + $0xc1] sm:$0xff]
  %v3128 = vld [vmem:[%s3019 + $0xd1] sm:$0xff]
  %v3129 = vld [vmem:[%s3019 + $0xe1] sm:$0xff]
  %v3130 = vld [vmem:[%s3019 + $0xf1] sm:$0xff]
  %v3131 = vld [vmem:[%s3019 + $0x101] sm:$0xff]
  %v3132 = vld [vmem:[%s3019 + $0x111] sm:$0xff]
  %3149 = vrot.lane.b32.xlu0 %v3117, 112
  %v3150 = vpop.permute.xlu0 %3149
  %3151 = vrot.lane.b32.xlu0 %v3118, 112
  %v3152 = vpop.permute.xlu0 %3151
  %3153 = vrot.lane.b32.xlu0 %v3119, 112
  %v3154 = vpop.permute.xlu0 %3153
  %3155 = vrot.lane.b32.xlu0 %v3120, 112
  %v3156 = vpop.permute.xlu0 %3155
  %3157 = vrot.lane.b32.xlu0 %v3121, 112
  %v3158 = vpop.permute.xlu0 %3157
  %3159 = vrot.lane.b32.xlu0 %v3122, 112
  %v3160 = vpop.permute.xlu0 %3159
  %3161 = vrot.lane.b32.xlu0 %v3123, 112
  %v3162 = vpop.permute.xlu0 %3161
  %3163 = vrot.lane.b32.xlu0 %v3124, 112
  %v3164 = vpop.permute.xlu0 %3163
  %3165 = vrot.lane.b32.xlu0 %v3125, 112
  %v3166 = vpop.permute.xlu0 %3165
  %3167 = vrot.lane.b32.xlu0 %v3126, 112
  %v3168 = vpop.permute.xlu0 %3167
  %3169 = vrot.lane.b32.xlu0 %v3127, 112
  %v3170 = vpop.permute.xlu0 %3169
  %3171 = vrot.lane.b32.xlu0 %v3128, 112
  %v3172 = vpop.permute.xlu0 %3171
  %3173 = vrot.lane.b32.xlu0 %v3129, 112
  %v3174 = vpop.permute.xlu0 %3173
  %3175 = vrot.lane.b32.xlu0 %v3130, 112
  %v3176 = vpop.permute.xlu0 %3175
  %3177 = vrot.lane.b32.xlu0 %v3131, 112
  %v3178 = vpop.permute.xlu0 %3177
  %3179 = vrot.lane.b32.xlu0 %v3132, 112
  %v3180 = vpop.permute.xlu0 %3179
  %vm3197 = vcmask 1048448
  %3198 = vst.msk [vmem:[#allocation6] sm:$0xff] %vm3197, %v3150
  %3199 = vst.msk [vmem:[#allocation6 + $0x10] sm:$0xff] %vm3197, %v3152
  %3200 = vst.msk [vmem:[#allocation6 + $0x20] sm:$0xff] %vm3197, %v3154
  %3201 = vst.msk [vmem:[#allocation6 + $0x30] sm:$0xff] %vm3197, %v3156
  %3202 = vst.msk [vmem:[#allocation6 + $0x40] sm:$0xff] %vm3197, %v3158
  %3203 = vst.msk [vmem:[#allocation6 + $0x50] sm:$0xff] %vm3197, %v3160
  %3204 = vst.msk [vmem:[#allocation6 + $0x60] sm:$0xff] %vm3197, %v3162
  %3205 = vst.msk [vmem:[#allocation6 + $0x70] sm:$0xff] %vm3197, %v3164
  %3206 = vst.msk [vmem:[#allocation6 + $0x80] sm:$0xff] %vm3197, %v3166
  %3207 = vst.msk [vmem:[#allocation6 + $0x90] sm:$0xff] %vm3197, %v3168
  %3208 = vst.msk [vmem:[#allocation6 + $0xa0] sm:$0xff] %vm3197, %v3170
  %3209 = vst.msk [vmem:[#allocation6 + $0xb0] sm:$0xff] %vm3197, %v3172
  %3210 = vst.msk [vmem:[#allocation6 + $0xc0] sm:$0xff] %vm3197, %v3174
  %3211 = vst.msk [vmem:[#allocation6 + $0xd0] sm:$0xff] %vm3197, %v3176
  %3212 = vst.msk [vmem:[#allocation6 + $0xe0] sm:$0xff] %vm3197, %v3178
  %3213 = vst.msk [vmem:[#allocation6 + $0xf0] sm:$0xff] %vm3197, %v3180
  %v3214 = vld [vmem:[%s3019 + $0x2] sm:$0xff]
  %v3215 = vld [vmem:[%s3019 + $0x12] sm:$0xff]
  %v3216 = vld [vmem:[%s3019 + $0x22] sm:$0xff]
  %v3217 = vld [vmem:[%s3019 + $0x32] sm:$0xff]
  %v3218 = vld [vmem:[%s3019 + $0x42] sm:$0xff]
  %v3219 = vld [vmem:[%s3019 + $0x52] sm:$0xff]
  %v3220 = vld [vmem:[%s3019 + $0x62] sm:$0xff]
  %v3221 = vld [vmem:[%s3019 + $0x72] sm:$0xff]
  %v3222 = vld [vmem:[%s3019 + $0xa2] sm:$0xff]
  %v3223 = vld [vmem:[%s3019 + $0xb2] sm:$0xff]
  %v3224 = vld [vmem:[%s3019 + $0xc2] sm:$0xff]
  %v3225 = vld [vmem:[%s3019 + $0xd2] sm:$0xff]
  %v3226 = vld [vmem:[%s3019 + $0xe2] sm:$0xff]
  %v3227 = vld [vmem:[%s3019 + $0xf2] sm:$0xff]
  %v3228 = vld [vmem:[%s3019 + $0x102] sm:$0xff]
  %v3229 = vld [vmem:[%s3019 + $0x112] sm:$0xff]
  %3230 = vst.msk [vmem:[#allocation6 + $0x8] sm:$0xff] %vm2289, %v3214
  %3231 = vst.msk [vmem:[#allocation6 + $0x18] sm:$0xff] %vm2289, %v3215
  %3232 = vst.msk [vmem:[#allocation6 + $0x28] sm:$0xff] %vm2289, %v3216
  %3233 = vst.msk [vmem:[#allocation6 + $0x38] sm:$0xff] %vm2289, %v3217
  %3234 = vst.msk [vmem:[#allocation6 + $0x48] sm:$0xff] %vm2289, %v3218
  %3235 = vst.msk [vmem:[#allocation6 + $0x58] sm:$0xff] %vm2289, %v3219
  %3236 = vst.msk [vmem:[#allocation6 + $0x68] sm:$0xff] %vm2289, %v3220
  %3237 = vst.msk [vmem:[#allocation6 + $0x78] sm:$0xff] %vm2289, %v3221
  %3238 = vst.msk [vmem:[#allocation6 + $0x88] sm:$0xff] %vm2289, %v3222
  %3239 = vst.msk [vmem:[#allocation6 + $0x98] sm:$0xff] %vm2289, %v3223
  %3240 = vst.msk [vmem:[#allocation6 + $0xa8] sm:$0xff] %vm2289, %v3224
  %3241 = vst.msk [vmem:[#allocation6 + $0xb8] sm:$0xff] %vm2289, %v3225
  %3242 = vst.msk [vmem:[#allocation6 + $0xc8] sm:$0xff] %vm2289, %v3226
  %3243 = vst.msk [vmem:[#allocation6 + $0xd8] sm:$0xff] %vm2289, %v3227
  %3244 = vst.msk [vmem:[#allocation6 + $0xe8] sm:$0xff] %vm2289, %v3228
  %3245 = vst.msk [vmem:[#allocation6 + $0xf8] sm:$0xff] %vm2289, %v3229
  %v3246 = vld [vmem:[#allocation6] sm:$0xff]
  %v3247 = vld [vmem:[#allocation6 + $0x8] sm:$0xff]
  %v3248 = vld [vmem:[#allocation6 + $0x10] sm:$0xff]
  %v3249 = vld [vmem:[#allocation6 + $0x18] sm:$0xff]
  %v3250 = vld [vmem:[#allocation6 + $0x20] sm:$0xff]
  %v3251 = vld [vmem:[#allocation6 + $0x28] sm:$0xff]
  %v3252 = vld [vmem:[#allocation6 + $0x30] sm:$0xff]
  %v3253 = vld [vmem:[#allocation6 + $0x38] sm:$0xff]
  %v3254 = vld [vmem:[#allocation6 + $0x40] sm:$0xff]
  %v3255 = vld [vmem:[#allocation6 + $0x48] sm:$0xff]
  %v3256 = vld [vmem:[#allocation6 + $0x50] sm:$0xff]
  %v3257 = vld [vmem:[#allocation6 + $0x58] sm:$0xff]
  %v3258 = vld [vmem:[#allocation6 + $0x60] sm:$0xff]
  %v3259 = vld [vmem:[#allocation6 + $0x68] sm:$0xff]
  %v3260 = vld [vmem:[#allocation6 + $0x70] sm:$0xff]
  %v3261 = vld [vmem:[#allocation6 + $0x78] sm:$0xff]
  %v3262 = vld [vmem:[#allocation6 + $0x80] sm:$0xff]
  %v3263 = vld [vmem:[#allocation6 + $0x88] sm:$0xff]
  %v3264 = vld [vmem:[#allocation6 + $0x90] sm:$0xff]
  %v3265 = vld [vmem:[#allocation6 + $0x98] sm:$0xff]
  %v3266 = vld [vmem:[#allocation6 + $0xa0] sm:$0xff]
  %v3267 = vld [vmem:[#allocation6 + $0xa8] sm:$0xff]
  %v3268 = vld [vmem:[#allocation6 + $0xb0] sm:$0xff]
  %v3269 = vld [vmem:[#allocation6 + $0xb8] sm:$0xff]
  %v3270 = vld [vmem:[#allocation6 + $0xc0] sm:$0xff]
  %v3271 = vld [vmem:[#allocation6 + $0xc8] sm:$0xff]
  %v3272 = vld [vmem:[#allocation6 + $0xd0] sm:$0xff]
  %v3273 = vld [vmem:[#allocation6 + $0xd8] sm:$0xff]
  %v3274 = vld [vmem:[#allocation6 + $0xe0] sm:$0xff]
  %v3275 = vld [vmem:[#allocation6 + $0xe8] sm:$0xff]
  %v3276 = vld [vmem:[#allocation6 + $0xf0] sm:$0xff]
  %v3277 = vld [vmem:[#allocation6 + $0xf8] sm:$0xff]
  %v3278 = vld [vmem:[%s5] sm:$0xff]
  %v3279 = vld [vmem:[%s5 + $0x8] sm:$0xff]
  %v3280 = vld [vmem:[%s5 + $0x10] sm:$0xff]
  %v3281 = vld [vmem:[%s5 + $0x18] sm:$0xff]
  %v3282 = vld [vmem:[%s5 + $0x20] sm:$0xff]
  %v3283 = vld [vmem:[%s5 + $0x28] sm:$0xff]
  %v3284 = vld [vmem:[%s5 + $0x30] sm:$0xff]
  %v3285 = vld [vmem:[%s5 + $0x38] sm:$0xff]
  %v3286 = vld [vmem:[%s5 + $0x40] sm:$0xff]
  %v3287 = vld [vmem:[%s5 + $0x48] sm:$0xff]
  %v3288 = vld [vmem:[%s5 + $0x50] sm:$0xff]
  %v3289 = vld [vmem:[%s5 + $0x58] sm:$0xff]
  %v3290 = vld [vmem:[%s5 + $0x60] sm:$0xff]
  %v3291 = vld [vmem:[%s5 + $0x68] sm:$0xff]
  %v3292 = vld [vmem:[%s5 + $0x70] sm:$0xff]
  %v3293 = vld [vmem:[%s5 + $0x78] sm:$0xff]
  %v3294 = vld [vmem:[%s5 + $0x80] sm:$0xff]
  %v3295 = vld [vmem:[%s5 + $0x88] sm:$0xff]
  %v3296 = vld [vmem:[%s6] sm:$0x1]
  %v3297 = vld [vmem:[%s6 + $0x1] sm:$0x1]
  %v3298 = vld [vmem:[%s6 + $0x2] sm:$0x1]
  %v3299 = vperm.slane %v3296, 0
  %v3301 = vsel %vm2289, %v3247, 0
  %v3304 = vsel %vm2289, %v3249, 0
  %v3307 = vsel %vm2289, %v3251, 0
  %v3310 = vsel %vm2289, %v3253, 0
  %v3313 = vsel %vm2289, %v3255, 0
  %v3316 = vsel %vm2289, %v3257, 0
  %v3319 = vsel %vm2289, %v3259, 0
  %v3322 = vsel %vm2289, %v3261, 0
  %v3325 = vsel %vm2289, %v3263, 0
  %v3328 = vsel %vm2289, %v3265, 0
  %v3331 = vsel %vm2289, %v3267, 0
  %v3334 = vsel %vm2289, %v3269, 0
  %v3337 = vsel %vm2289, %v3271, 0
  %v3340 = vsel %vm2289, %v3273, 0
  %v3343 = vsel %vm2289, %v3275, 0
  %v3346 = vsel %vm2289, %v3277, 0
  %3348 = vmatpush.msra.mxu0 %v3293
  %3349 = vmatpush.msra.mxu0 %v3292
  %3350 = vmatpush.msra.mxu0 %v3291
  %3351 = vmatpush.msra.mxu0 %v3290
  %3352 = vmatpush.msra.mxu0 %v3289
  %3353 = vmatpush.msra.mxu0 %v3288
  %3354 = vmatpush.msra.mxu0 %v3287
  %3355 = vmatpush.msra.mxu0 %v3286
  %3356 = vmatpush.msra.mxu0 %v3285
  %3357 = vmatpush.msra.mxu0 %v3284
  %3358 = vmatpush.msra.mxu0 %v3283
  %3359 = vmatpush.msra.mxu0 %v3282
  %3360 = vmatpush.msra.mxu0 %v3281
  %3361 = vmatpush.msra.mxu0 %v3280
  %3362 = vmatpush.msra.mxu0 %v3279
  %3363 = vmatpush.msra.mxu0 %v3278
  %3364 = vmatmul.f32.gmra.mxu0 %v3246
  %v3365 = vpop.f32.mrf.mxu0
  %v3366 = vadd.f32 %v3299, %v3365
  %3367 = vmatmul.f32.gmra.mxu0 %v3248
  %v3368 = vpop.f32.mrf.mxu0
  %v3369 = vadd.f32 %v3299, %v3368
  %3370 = vmatmul.f32.gmra.mxu0 %v3250
  %v3371 = vpop.f32.mrf.mxu0
  %v3372 = vadd.f32 %v3299, %v3371
  %3373 = vmatmul.f32.gmra.mxu0 %v3252
  %v3374 = vpop.f32.mrf.mxu0
  %v3375 = vadd.f32 %v3299, %v3374
  %3376 = vmatmul.f32.gmra.mxu0 %v3254
  %v3377 = vpop.f32.mrf.mxu0
  %v3378 = vadd.f32 %v3299, %v3377
  %3379 = vmatmul.f32.gmra.mxu0 %v3256
  %v3380 = vpop.f32.mrf.mxu0
  %v3381 = vadd.f32 %v3299, %v3380
  %3382 = vmatmul.f32.gmra.mxu0 %v3258
  %v3383 = vpop.f32.mrf.mxu0
  %v3384 = vadd.f32 %v3299, %v3383
  %3385 = vmatmul.f32.gmra.mxu0 %v3260
  %v3386 = vpop.f32.mrf.mxu0
  %v3387 = vadd.f32 %v3299, %v3386
  %3388 = vmatmul.f32.gmra.mxu0 %v3262
  %v3389 = vpop.f32.mrf.mxu0
  %v3390 = vadd.f32 %v3299, %v3389
  %3391 = vmatmul.f32.gmra.mxu0 %v3264
  %v3392 = vpop.f32.mrf.mxu0
  %v3393 = vadd.f32 %v3299, %v3392
  %3394 = vmatmul.f32.gmra.mxu0 %v3266
  %v3395 = vpop.f32.mrf.mxu0
  %v3396 = vadd.f32 %v3299, %v3395
  %3397 = vmatmul.f32.gmra.mxu0 %v3268
  %v3398 = vpop.f32.mrf.mxu0
  %v3399 = vadd.f32 %v3299, %v3398
  %3400 = vmatmul.f32.gmra.mxu0 %v3270
  %v3401 = vpop.f32.mrf.mxu0
  %v3402 = vadd.f32 %v3299, %v3401
  %3403 = vmatmul.f32.gmra.mxu0 %v3272
  %v3404 = vpop.f32.mrf.mxu0
  %v3405 = vadd.f32 %v3299, %v3404
  %3406 = vmatmul.f32.gmra.mxu0 %v3274
  %v3407 = vpop.f32.mrf.mxu0
  %v3408 = vadd.f32 %v3299, %v3407
  %3409 = vmatmul.f32.gmra.mxu0 %v3276
  %v3410 = vpop.f32.mrf.mxu0
  %v3411 = vadd.f32 %v3299, %v3410
  %3412 = vdwg.mxu0
  %3413 = vmatpush.msra.mxu0 0.0
  %3414 = vmatpush.msra.mxu0 0.0
  %3415 = vmatpush.msra.mxu0 0.0
  %3416 = vmatpush.msra.mxu0 0.0
  %3417 = vmatpush.msra.mxu0 0.0
  %3418 = vmatpush.msra.mxu0 0.0
  %3419 = vmatpush.msra.mxu0 0.0
  %3420 = vmatpush.msra.mxu0 0.0
  %3421 = vmatpush.msra.mxu0 0.0
  %3422 = vmatpush.msra.mxu0 0.0
  %3423 = vmatpush.msra.mxu0 0.0
  %3424 = vmatpush.msra.mxu0 0.0
  %3425 = vmatpush.msra.mxu0 0.0
  %3426 = vmatpush.msra.mxu0 0.0
  %3427 = vmatpush.msra.mxu0 %v3295
  %3428 = vmatpush.msra.mxu0 %v3294
  %3429 = vmatmul.f32.gmra.mxu0 %v3301
  %v3430 = vpop.f32.mrf.mxu0
  %v3431 = vadd.f32 %v3366, %v3430
  %3432 = vmatmul.f32.gmra.mxu0 %v3304
  %v3433 = vpop.f32.mrf.mxu0
  %v3434 = vadd.f32 %v3369, %v3433
  %3435 = vmatmul.f32.gmra.mxu0 %v3307
  %v3436 = vpop.f32.mrf.mxu0
  %v3437 = vadd.f32 %v3372, %v3436
  %3438 = vmatmul.f32.gmra.mxu0 %v3310
  %v3439 = vpop.f32.mrf.mxu0
  %v3440 = vadd.f32 %v3375, %v3439
  %3441 = vmatmul.f32.gmra.mxu0 %v3313
  %v3442 = vpop.f32.mrf.mxu0
  %v3443 = vadd.f32 %v3378, %v3442
  %3444 = vmatmul.f32.gmra.mxu0 %v3316
  %v3445 = vpop.f32.mrf.mxu0
  %v3446 = vadd.f32 %v3381, %v3445
  %3447 = vmatmul.f32.gmra.mxu0 %v3319
  %v3448 = vpop.f32.mrf.mxu0
  %v3449 = vadd.f32 %v3384, %v3448
  %3450 = vmatmul.f32.gmra.mxu0 %v3322
  %v3451 = vpop.f32.mrf.mxu0
  %v3452 = vadd.f32 %v3387, %v3451
  %3453 = vmatmul.f32.gmra.mxu0 %v3325
  %v3454 = vpop.f32.mrf.mxu0
  %v3455 = vadd.f32 %v3390, %v3454
  %3456 = vmatmul.f32.gmra.mxu0 %v3328
  %v3457 = vpop.f32.mrf.mxu0
  %v3458 = vadd.f32 %v3393, %v3457
  %3459 = vmatmul.f32.gmra.mxu0 %v3331
  %v3460 = vpop.f32.mrf.mxu0
  %v3461 = vadd.f32 %v3396, %v3460
  %3462 = vmatmul.f32.gmra.mxu0 %v3334
  %v3463 = vpop.f32.mrf.mxu0
  %v3464 = vadd.f32 %v3399, %v3463
  %3465 = vmatmul.f32.gmra.mxu0 %v3337
  %v3466 = vpop.f32.mrf.mxu0
  %v3467 = vadd.f32 %v3402, %v3466
  %3468 = vmatmul.f32.gmra.mxu0 %v3340
  %v3469 = vpop.f32.mrf.mxu0
  %v3470 = vadd.f32 %v3405, %v3469
  %3471 = vmatmul.f32.gmra.mxu0 %v3343
  %v3472 = vpop.f32.mrf.mxu0
  %v3473 = vadd.f32 %v3408, %v3472
  %3474 = vmatmul.f32.gmra.mxu0 %v3346
  %v3475 = vpop.f32.mrf.mxu0
  %v3476 = vadd.f32 %v3411, %v3475
  %3477 = vdwg.mxu0
  %v3478 = vmax.f32 %v3431, 0.0
  %v3479 = vmax.f32 %v3434, 0.0
  %v3480 = vmax.f32 %v3437, 0.0
  %v3481 = vmax.f32 %v3440, 0.0
  %v3482 = vmax.f32 %v3443, 0.0
  %v3483 = vmax.f32 %v3446, 0.0
  %v3484 = vmax.f32 %v3449, 0.0
  %v3485 = vmax.f32 %v3452, 0.0
  %v3486 = vmax.f32 %v3455, 0.0
  %v3487 = vmax.f32 %v3458, 0.0
  %v3488 = vmax.f32 %v3461, 0.0
  %v3489 = vmax.f32 %v3464, 0.0
  %v3490 = vmax.f32 %v3467, 0.0
  %v3491 = vmax.f32 %v3470, 0.0
  %v3492 = vmax.f32 %v3473, 0.0
  %v3493 = vmax.f32 %v3476, 0.0
  %v3494 = vsel %vm2289, %v3478, 0.0
  %v3495 = vsel %vm2289, %v3479, 0.0
  %v3496 = vadd.f32 %v3494, %v3495
  %v3497 = vsel %vm2289, %v3480, 0.0
  %v3498 = vadd.f32 %v3496, %v3497
  %v3499 = vsel %vm2289, %v3481, 0.0
  %v3500 = vadd.f32 %v3498, %v3499
  %v3501 = vsel %vm2289, %v3482, 0.0
  %v3502 = vadd.f32 %v3500, %v3501
  %v3503 = vsel %vm2289, %v3483, 0.0
  %v3504 = vadd.f32 %v3502, %v3503
  %v3505 = vsel %vm2289, %v3484, 0.0
  %v3506 = vadd.f32 %v3504, %v3505
  %v3507 = vsel %vm2289, %v3485, 0.0
  %v3508 = vadd.f32 %v3506, %v3507
  %v3509 = vsel %vm2289, %v3486, 0.0
  %v3510 = vadd.f32 %v3508, %v3509
  %v3511 = vsel %vm2289, %v3487, 0.0
  %v3512 = vadd.f32 %v3510, %v3511
  %v3513 = vsel %vm2289, %v3488, 0.0
  %v3514 = vadd.f32 %v3512, %v3513
  %v3515 = vsel %vm2289, %v3489, 0.0
  %v3516 = vadd.f32 %v3514, %v3515
  %v3517 = vsel %vm2289, %v3490, 0.0
  %v3518 = vadd.f32 %v3516, %v3517
  %v3519 = vsel %vm2289, %v3491, 0.0
  %v3520 = vadd.f32 %v3518, %v3519
  %v3521 = vsel %vm2289, %v3492, 0.0
  %v3522 = vadd.f32 %v3520, %v3521
  %v3523 = vsel %vm2289, %v3493, 0.0
  %v3524 = vadd.f32 %v3522, %v3523
  %v3525 = vrot.slane %v3524, 4
  %v3526 = vadd.f32 %v3524, %v3525
  %v3527 = vrot.slane %v3526, 2
  %v3528 = vadd.f32 %v3526, %v3527
  %v3529 = vrot.slane %v3528, 1
  %v3530 = vadd.f32 %v3528, %v3529
  %v3531 = vmul.f32 %v3530, 0.0078125
  %v3532 = vsub.f32 %v3478, %v3531
  %v3533 = vsub.f32 %v3479, %v3531
  %v3534 = vsub.f32 %v3480, %v3531
  %v3535 = vsub.f32 %v3481, %v3531
  %v3536 = vsub.f32 %v3482, %v3531
  %v3537 = vsub.f32 %v3483, %v3531
  %v3538 = vsub.f32 %v3484, %v3531
  %v3539 = vsub.f32 %v3485, %v3531
  %v3540 = vsub.f32 %v3486, %v3531
  %v3541 = vsub.f32 %v3487, %v3531
  %v3542 = vsub.f32 %v3488, %v3531
  %v3543 = vsub.f32 %v3489, %v3531
  %v3544 = vsub.f32 %v3490, %v3531
  %v3545 = vsub.f32 %v3491, %v3531
  %v3546 = vsub.f32 %v3492, %v3531
  %v3547 = vsub.f32 %v3493, %v3531
  %v3548 = vmul.f32 %v3532, %v3532
  %v3549 = vmul.f32 %v3533, %v3533
  %v3550 = vmul.f32 %v3534, %v3534
  %v3551 = vmul.f32 %v3535, %v3535
  %v3552 = vmul.f32 %v3536, %v3536
  %v3553 = vmul.f32 %v3537, %v3537
  %v3554 = vmul.f32 %v3538, %v3538
  %v3555 = vmul.f32 %v3539, %v3539
  %v3556 = vmul.f32 %v3540, %v3540
  %v3557 = vmul.f32 %v3541, %v3541
  %v3558 = vmul.f32 %v3542, %v3542
  %v3559 = vmul.f32 %v3543, %v3543
  %v3560 = vmul.f32 %v3544, %v3544
  %v3561 = vmul.f32 %v3545, %v3545
  %v3562 = vmul.f32 %v3546, %v3546
  %v3563 = vmul.f32 %v3547, %v3547
  %v3564 = vsel %vm2289, %v3548, 0.0
  %v3565 = vsel %vm2289, %v3549, 0.0
  %v3566 = vadd.f32 %v3564, %v3565
  %v3567 = vsel %vm2289, %v3550, 0.0
  %v3568 = vadd.f32 %v3566, %v3567
  %v3569 = vsel %vm2289, %v3551, 0.0
  %v3570 = vadd.f32 %v3568, %v3569
  %v3571 = vsel %vm2289, %v3552, 0.0
  %v3572 = vadd.f32 %v3570, %v3571
  %v3573 = vsel %vm2289, %v3553, 0.0
  %v3574 = vadd.f32 %v3572, %v3573
  %v3575 = vsel %vm2289, %v3554, 0.0
  %v3576 = vadd.f32 %v3574, %v3575
  %v3577 = vsel %vm2289, %v3555, 0.0
  %v3578 = vadd.f32 %v3576, %v3577
  %v3579 = vsel %vm2289, %v3556, 0.0
  %v3580 = vadd.f32 %v3578, %v3579
  %v3581 = vsel %vm2289, %v3557, 0.0
  %v3582 = vadd.f32 %v3580, %v3581
  %v3583 = vsel %vm2289, %v3558, 0.0
  %v3584 = vadd.f32 %v3582, %v3583
  %v3585 = vsel %vm2289, %v3559, 0.0
  %v3586 = vadd.f32 %v3584, %v3585
  %v3587 = vsel %vm2289, %v3560, 0.0
  %v3588 = vadd.f32 %v3586, %v3587
  %v3589 = vsel %vm2289, %v3561, 0.0
  %v3590 = vadd.f32 %v3588, %v3589
  %v3591 = vsel %vm2289, %v3562, 0.0
  %v3592 = vadd.f32 %v3590, %v3591
  %v3593 = vsel %vm2289, %v3563, 0.0
  %v3594 = vadd.f32 %v3592, %v3593
  %v3595 = vrot.slane %v3594, 4
  %v3596 = vadd.f32 %v3594, %v3595
  %v3597 = vrot.slane %v3596, 2
  %v3598 = vadd.f32 %v3596, %v3597
  %v3599 = vrot.slane %v3598, 1
  %v3600 = vadd.f32 %v3598, %v3599
  %v3601 = vmul.f32 %v3600, 0.0078125
  %v3602 = vadd.f32 %v3601, 1e-05
  %v3603 = vrsqrt.pop %v3602
  %v3604 = vmul.f32 %v3603, %v3602
  %v3605 = vmul.f32 %v3604, %v3603
  %v3606 = vmul.f32 0.5, %v3605
  %v3607 = vsub.f32 1.5, %v3606
  %v3608 = vmul.f32 %v3603, %v3607
  %vm3609 = vweird.f32 %v3602
  %vm3610 = vweird.f32 %v3603
  %vm3611 = vmor %vm3609, %vm3610
  %v3612 = vsel %vm3611, %v3603, %v3608
  %v3613 = vmul.f32 %v3297, %v3612
  %v3614 = vperm.slane %v3613, 0
  %v3615 = vmul.f32 %v3532, %v3614
  %v3616 = vmul.f32 %v3533, %v3614
  %v3617 = vmul.f32 %v3534, %v3614
  %v3618 = vmul.f32 %v3535, %v3614
  %v3619 = vmul.f32 %v3536, %v3614
  %v3620 = vmul.f32 %v3537, %v3614
  %v3621 = vmul.f32 %v3538, %v3614
  %v3622 = vmul.f32 %v3539, %v3614
  %v3623 = vmul.f32 %v3540, %v3614
  %v3624 = vmul.f32 %v3541, %v3614
  %v3625 = vmul.f32 %v3542, %v3614
  %v3626 = vmul.f32 %v3543, %v3614
  %v3627 = vmul.f32 %v3544, %v3614
  %v3628 = vmul.f32 %v3545, %v3614
  %v3629 = vmul.f32 %v3546, %v3614
  %v3630 = vmul.f32 %v3547, %v3614
  %v3631 = vperm.slane %v3298, 0
  %v3632 = vadd.f32 %v3615, %v3631
  %v3633 = vadd.f32 %v3616, %v3631
  %v3634 = vadd.f32 %v3617, %v3631
  %v3635 = vadd.f32 %v3618, %v3631
  %v3636 = vadd.f32 %v3619, %v3631
  %v3637 = vadd.f32 %v3620, %v3631
  %v3638 = vadd.f32 %v3621, %v3631
  %v3639 = vadd.f32 %v3622, %v3631
  %v3640 = vadd.f32 %v3623, %v3631
  %v3641 = vadd.f32 %v3624, %v3631
  %v3642 = vadd.f32 %v3625, %v3631
  %v3643 = vadd.f32 %v3626, %v3631
  %v3644 = vadd.f32 %v3627, %v3631
  %v3645 = vadd.f32 %v3628, %v3631
  %v3646 = vadd.f32 %v3629, %v3631
  %v3647 = vadd.f32 %v3630, %v3631
  %3648 = vst.msk [vmem:[#allocation5] sm:$0xff] %vm2289, 0.0
  %3649 = vst.msk [vmem:[#allocation5 + $0x8] sm:$0x3] %vm2445, 0.0
  %3650 = vst.msk [vmem:[#allocation5 + $0x10] sm:$0xff] %vm2289, 0.0
  %3651 = vst.msk [vmem:[#allocation5 + $0x18] sm:$0x3] %vm2445, 0.0
  %3652 = vst.msk [vmem:[#allocation5 + $0x20] sm:$0xff] %vm2289, 0.0
  %3653 = vst.msk [vmem:[#allocation5 + $0x28] sm:$0x3] %vm2445, 0.0
  %3654 = vst.msk [vmem:[#allocation5 + $0x30] sm:$0xff] %vm2289, 0.0
  %3655 = vst.msk [vmem:[#allocation5 + $0x38] sm:$0x3] %vm2445, 0.0
  %3656 = vst.msk [vmem:[#allocation5 + $0x40] sm:$0xff] %vm2289, 0.0
  %3657 = vst.msk [vmem:[#allocation5 + $0x48] sm:$0x3] %vm2445, 0.0
  %3658 = vst.msk [vmem:[#allocation5 + $0x50] sm:$0xff] %vm2289, 0.0
  %3659 = vst.msk [vmem:[#allocation5 + $0x58] sm:$0x3] %vm2445, 0.0
  %3660 = vst.msk [vmem:[#allocation5 + $0x60] sm:$0xff] %vm2289, 0.0
  %3661 = vst.msk [vmem:[#allocation5 + $0x68] sm:$0x3] %vm2445, 0.0
  %3662 = vst.msk [vmem:[#allocation5 + $0x70] sm:$0xff] %vm2289, 0.0
  %3663 = vst.msk [vmem:[#allocation5 + $0x78] sm:$0x3] %vm2445, 0.0
  %3664 = vst.msk [vmem:[#allocation5 + $0x80] sm:$0xff] %vm2289, 0.0
  %3665 = vst.msk [vmem:[#allocation5 + $0x88] sm:$0x3] %vm2445, 0.0
  %3666 = vst.msk [vmem:[#allocation5 + $0x90] sm:$0xff] %vm2289, 0.0
  %3667 = vst.msk [vmem:[#allocation5 + $0x98] sm:$0x3] %vm2445, 0.0
  %3668 = vst.msk [vmem:[#allocation5 + $0xa0] sm:$0xff] %vm2289, 0.0
  %3669 = vst.msk [vmem:[#allocation5 + $0xa8] sm:$0x3] %vm2445, 0.0
  %3670 = vst.msk [vmem:[#allocation5 + $0xb0] sm:$0xff] %vm2289, 0.0
  %3671 = vst.msk [vmem:[#allocation5 + $0xb8] sm:$0x3] %vm2445, 0.0
  %3672 = vst.msk [vmem:[#allocation5 + $0xc0] sm:$0xff] %vm2289, 0.0
  %3673 = vst.msk [vmem:[#allocation5 + $0xc8] sm:$0x3] %vm2445, 0.0
  %3674 = vst.msk [vmem:[#allocation5 + $0xd0] sm:$0xff] %vm2289, 0.0
  %3675 = vst.msk [vmem:[#allocation5 + $0xd8] sm:$0x3] %vm2445, 0.0
  %3676 = vst.msk [vmem:[#allocation5 + $0xe0] sm:$0xff] %vm2289, 0.0
  %3677 = vst.msk [vmem:[#allocation5 + $0xe8] sm:$0x3] %vm2445, 0.0
  %3678 = vst.msk [vmem:[#allocation5 + $0xf0] sm:$0xff] %vm2289, 0.0
  %3679 = vst.msk [vmem:[#allocation5 + $0xf8] sm:$0x3] %vm2445, 0.0
  %3680 = vst.msk [vmem:[#allocation5 + $0x100] sm:$0xff] %vm2289, 0.0
  %3681 = vst.msk [vmem:[#allocation5 + $0x108] sm:$0x3] %vm2445, 0.0
  %3682 = vst.msk [vmem:[#allocation5 + $0x110] sm:$0xff] %vm2289, 0.0
  %3683 = vst.msk [vmem:[#allocation5 + $0x118] sm:$0x3] %vm2445, 0.0
  %3684 = vst.msk [vmem:[#allocation5 + $0x120] sm:$0xff] %vm2289, 0.0
  %3685 = vst.msk [vmem:[#allocation5 + $0x128] sm:$0x3] %vm2445, 0.0
  %3686 = vst.msk [vmem:[#allocation5 + $0x130] sm:$0xff] %vm2289, 0.0
  %3687 = vst.msk [vmem:[#allocation5 + $0x138] sm:$0x3] %vm2445, 0.0
  %s3688 = scalar_lea.vmem [#allocation5], 16
  %3689 = vst.msk [vmem:[%s3688 + $0x1] sm:$0xff] %vm2289, %v3632
  %3690 = vst.msk [vmem:[%s3688 + $0x11] sm:$0xff] %vm2289, %v3633
  %3691 = vst.msk [vmem:[%s3688 + $0x21] sm:$0xff] %vm2289, %v3634
  %3692 = vst.msk [vmem:[%s3688 + $0x31] sm:$0xff] %vm2289, %v3635
  %3693 = vst.msk [vmem:[%s3688 + $0x41] sm:$0xff] %vm2289, %v3636
  %3694 = vst.msk [vmem:[%s3688 + $0x51] sm:$0xff] %vm2289, %v3637
  %3695 = vst.msk [vmem:[%s3688 + $0x61] sm:$0xff] %vm2289, %v3638
  %3696 = vst.msk [vmem:[%s3688 + $0x71] sm:$0xff] %vm2289, %v3639
  %3697 = vst.msk [vmem:[%s3688 + $0xa1] sm:$0xff] %vm2289, %v3640
  %3698 = vst.msk [vmem:[%s3688 + $0xb1] sm:$0xff] %vm2289, %v3641
  %3699 = vst.msk [vmem:[%s3688 + $0xc1] sm:$0xff] %vm2289, %v3642
  %3700 = vst.msk [vmem:[%s3688 + $0xd1] sm:$0xff] %vm2289, %v3643
  %3701 = vst.msk [vmem:[%s3688 + $0xe1] sm:$0xff] %vm2289, %v3644
  %3702 = vst.msk [vmem:[%s3688 + $0xf1] sm:$0xff] %vm2289, %v3645
  %3703 = vst.msk [vmem:[%s3688 + $0x101] sm:$0xff] %vm2289, %v3646
  %3704 = vst.msk [vmem:[%s3688 + $0x111] sm:$0xff] %vm2289, %v3647
  %v3705 = vld [vmem:[#allocation5] sm:$0xff]
  %v3706 = vld [vmem:[#allocation5 + $0x20] sm:$0xff]
  %v3707 = vld [vmem:[#allocation5 + $0x40] sm:$0xff]
  %v3708 = vld [vmem:[#allocation5 + $0x60] sm:$0xff]
  %v3709 = vld [vmem:[#allocation5 + $0xa0] sm:$0xff]
  %v3710 = vld [vmem:[#allocation5 + $0xc0] sm:$0xff]
  %v3711 = vld [vmem:[#allocation5 + $0xe0] sm:$0xff]
  %v3712 = vld [vmem:[#allocation5 + $0x100] sm:$0xff]
  %3713 = vst.msk [vmem:[#allocation6] sm:$0xff] %vm2289, %v3705
  %3714 = vst.msk [vmem:[#allocation6 + $0x10] sm:$0xff] %vm2289, %v3706
  %3715 = vst.msk [vmem:[#allocation6 + $0x20] sm:$0xff] %vm2289, %v3707
  %3716 = vst.msk [vmem:[#allocation6 + $0x30] sm:$0xff] %vm2289, %v3708
  %3717 = vst.msk [vmem:[#allocation6 + $0x40] sm:$0xff] %vm2289, %v3709
  %3718 = vst.msk [vmem:[#allocation6 + $0x50] sm:$0xff] %vm2289, %v3710
  %3719 = vst.msk [vmem:[#allocation6 + $0x60] sm:$0xff] %vm2289, %v3711
  %3720 = vst.msk [vmem:[#allocation6 + $0x70] sm:$0xff] %vm2289, %v3712
  %v3721 = vld [vmem:[#allocation5 + $0x1] sm:$0xff]
  %v3722 = vld [vmem:[#allocation5 + $0x21] sm:$0xff]
  %v3723 = vld [vmem:[#allocation5 + $0x41] sm:$0xff]
  %v3724 = vld [vmem:[#allocation5 + $0x61] sm:$0xff]
  %v3725 = vld [vmem:[#allocation5 + $0xa1] sm:$0xff]
  %v3726 = vld [vmem:[#allocation5 + $0xc1] sm:$0xff]
  %v3727 = vld [vmem:[#allocation5 + $0xe1] sm:$0xff]
  %v3728 = vld [vmem:[#allocation5 + $0x101] sm:$0xff]
  %3737 = vrot.lane.b32.xlu0 %v3721, 16
  %v3738 = vpop.permute.xlu0 %3737
  %3739 = vrot.lane.b32.xlu0 %v3722, 16
  %v3740 = vpop.permute.xlu0 %3739
  %3741 = vrot.lane.b32.xlu0 %v3723, 16
  %v3742 = vpop.permute.xlu0 %3741
  %3743 = vrot.lane.b32.xlu0 %v3724, 16
  %v3744 = vpop.permute.xlu0 %3743
  %3745 = vrot.lane.b32.xlu0 %v3725, 16
  %v3746 = vpop.permute.xlu0 %3745
  %3747 = vrot.lane.b32.xlu0 %v3726, 16
  %v3748 = vpop.permute.xlu0 %3747
  %3749 = vrot.lane.b32.xlu0 %v3727, 16
  %v3750 = vpop.permute.xlu0 %3749
  %3751 = vrot.lane.b32.xlu0 %v3728, 16
  %v3752 = vpop.permute.xlu0 %3751
  %3761 = vst.msk [vmem:[#allocation6] sm:$0xff] %vm2614, %v3738
  %3762 = vst.msk [vmem:[#allocation6 + $0x10] sm:$0xff] %vm2614, %v3740
  %3763 = vst.msk [vmem:[#allocation6 + $0x20] sm:$0xff] %vm2614, %v3742
  %3764 = vst.msk [vmem:[#allocation6 + $0x30] sm:$0xff] %vm2614, %v3744
  %3765 = vst.msk [vmem:[#allocation6 + $0x40] sm:$0xff] %vm2614, %v3746
  %3766 = vst.msk [vmem:[#allocation6 + $0x50] sm:$0xff] %vm2614, %v3748
  %3767 = vst.msk [vmem:[#allocation6 + $0x60] sm:$0xff] %vm2614, %v3750
  %3768 = vst.msk [vmem:[#allocation6 + $0x70] sm:$0xff] %vm2614, %v3752
  %v3769 = vld [vmem:[#allocation5 + $0x2] sm:$0xff]
  %v3770 = vld [vmem:[#allocation5 + $0x22] sm:$0xff]
  %v3771 = vld [vmem:[#allocation5 + $0x42] sm:$0xff]
  %v3772 = vld [vmem:[#allocation5 + $0x62] sm:$0xff]
  %v3773 = vld [vmem:[#allocation5 + $0xa2] sm:$0xff]
  %v3774 = vld [vmem:[#allocation5 + $0xc2] sm:$0xff]
  %v3775 = vld [vmem:[#allocation5 + $0xe2] sm:$0xff]
  %v3776 = vld [vmem:[#allocation5 + $0x102] sm:$0xff]
  %3785 = vrot.lane.b32.xlu0 %v3769, 32
  %v3786 = vpop.permute.xlu0 %3785
  %3787 = vrot.lane.b32.xlu0 %v3770, 32
  %v3788 = vpop.permute.xlu0 %3787
  %3789 = vrot.lane.b32.xlu0 %v3771, 32
  %v3790 = vpop.permute.xlu0 %3789
  %3791 = vrot.lane.b32.xlu0 %v3772, 32
  %v3792 = vpop.permute.xlu0 %3791
  %3793 = vrot.lane.b32.xlu0 %v3773, 32
  %v3794 = vpop.permute.xlu0 %3793
  %3795 = vrot.lane.b32.xlu0 %v3774, 32
  %v3796 = vpop.permute.xlu0 %3795
  %3797 = vrot.lane.b32.xlu0 %v3775, 32
  %v3798 = vpop.permute.xlu0 %3797
  %3799 = vrot.lane.b32.xlu0 %v3776, 32
  %v3800 = vpop.permute.xlu0 %3799
  %3809 = vst.msk [vmem:[#allocation6] sm:$0xff] %vm2711, %v3786
  %3810 = vst.msk [vmem:[#allocation6 + $0x10] sm:$0xff] %vm2711, %v3788
  %3811 = vst.msk [vmem:[#allocation6 + $0x20] sm:$0xff] %vm2711, %v3790
  %3812 = vst.msk [vmem:[#allocation6 + $0x30] sm:$0xff] %vm2711, %v3792
  %3813 = vst.msk [vmem:[#allocation6 + $0x40] sm:$0xff] %vm2711, %v3794
  %3814 = vst.msk [vmem:[#allocation6 + $0x50] sm:$0xff] %vm2711, %v3796
  %3815 = vst.msk [vmem:[#allocation6 + $0x60] sm:$0xff] %vm2711, %v3798
  %3816 = vst.msk [vmem:[#allocation6 + $0x70] sm:$0xff] %vm2711, %v3800
  %v3817 = vld [vmem:[%s3688] sm:$0xff]
  %v3818 = vld [vmem:[%s3688 + $0x20] sm:$0xff]
  %v3819 = vld [vmem:[%s3688 + $0x40] sm:$0xff]
  %v3820 = vld [vmem:[%s3688 + $0x60] sm:$0xff]
  %v3821 = vld [vmem:[%s3688 + $0xa0] sm:$0xff]
  %v3822 = vld [vmem:[%s3688 + $0xc0] sm:$0xff]
  %v3823 = vld [vmem:[%s3688 + $0xe0] sm:$0xff]
  %v3824 = vld [vmem:[%s3688 + $0x100] sm:$0xff]
  %3833 = vrot.lane.b32.xlu0 %v3817, 48
  %v3834 = vpop.permute.xlu0 %3833
  %3835 = vrot.lane.b32.xlu0 %v3818, 48
  %v3836 = vpop.permute.xlu0 %3835
  %3837 = vrot.lane.b32.xlu0 %v3819, 48
  %v3838 = vpop.permute.xlu0 %3837
  %3839 = vrot.lane.b32.xlu0 %v3820, 48
  %v3840 = vpop.permute.xlu0 %3839
  %3841 = vrot.lane.b32.xlu0 %v3821, 48
  %v3842 = vpop.permute.xlu0 %3841
  %3843 = vrot.lane.b32.xlu0 %v3822, 48
  %v3844 = vpop.permute.xlu0 %3843
  %3845 = vrot.lane.b32.xlu0 %v3823, 48
  %v3846 = vpop.permute.xlu0 %3845
  %3847 = vrot.lane.b32.xlu0 %v3824, 48
  %v3848 = vpop.permute.xlu0 %3847
  %3857 = vst.msk [vmem:[#allocation6] sm:$0xff] %vm2808, %v3834
  %3858 = vst.msk [vmem:[#allocation6 + $0x10] sm:$0xff] %vm2808, %v3836
  %3859 = vst.msk [vmem:[#allocation6 + $0x20] sm:$0xff] %vm2808, %v3838
  %3860 = vst.msk [vmem:[#allocation6 + $0x30] sm:$0xff] %vm2808, %v3840
  %3861 = vst.msk [vmem:[#allocation6 + $0x40] sm:$0xff] %vm2808, %v3842
  %3862 = vst.msk [vmem:[#allocation6 + $0x50] sm:$0xff] %vm2808, %v3844
  %3863 = vst.msk [vmem:[#allocation6 + $0x60] sm:$0xff] %vm2808, %v3846
  %3864 = vst.msk [vmem:[#allocation6 + $0x70] sm:$0xff] %vm2808, %v3848
  %v3865 = vld [vmem:[%s3688 + $0x1] sm:$0xff]
  %v3866 = vld [vmem:[%s3688 + $0x21] sm:$0xff]
  %v3867 = vld [vmem:[%s3688 + $0x41] sm:$0xff]
  %v3868 = vld [vmem:[%s3688 + $0x61] sm:$0xff]
  %v3869 = vld [vmem:[%s3688 + $0xa1] sm:$0xff]
  %v3870 = vld [vmem:[%s3688 + $0xc1] sm:$0xff]
  %v3871 = vld [vmem:[%s3688 + $0xe1] sm:$0xff]
  %v3872 = vld [vmem:[%s3688 + $0x101] sm:$0xff]
  %3881 = vrot.lane.b32.xlu0 %v3865, 64
  %v3882 = vpop.permute.xlu0 %3881
  %3883 = vrot.lane.b32.xlu0 %v3866, 64
  %v3884 = vpop.permute.xlu0 %3883
  %3885 = vrot.lane.b32.xlu0 %v3867, 64
  %v3886 = vpop.permute.xlu0 %3885
  %3887 = vrot.lane.b32.xlu0 %v3868, 64
  %v3888 = vpop.permute.xlu0 %3887
  %3889 = vrot.lane.b32.xlu0 %v3869, 64
  %v3890 = vpop.permute.xlu0 %3889
  %3891 = vrot.lane.b32.xlu0 %v3870, 64
  %v3892 = vpop.permute.xlu0 %3891
  %3893 = vrot.lane.b32.xlu0 %v3871, 64
  %v3894 = vpop.permute.xlu0 %3893
  %3895 = vrot.lane.b32.xlu0 %v3872, 64
  %v3896 = vpop.permute.xlu0 %3895
  %3905 = vst.msk [vmem:[#allocation6] sm:$0xff] %vm2905, %v3882
  %3906 = vst.msk [vmem:[#allocation6 + $0x10] sm:$0xff] %vm2905, %v3884
  %3907 = vst.msk [vmem:[#allocation6 + $0x20] sm:$0xff] %vm2905, %v3886
  %3908 = vst.msk [vmem:[#allocation6 + $0x30] sm:$0xff] %vm2905, %v3888
  %3909 = vst.msk [vmem:[#allocation6 + $0x40] sm:$0xff] %vm2905, %v3890
  %3910 = vst.msk [vmem:[#allocation6 + $0x50] sm:$0xff] %vm2905, %v3892
  %3911 = vst.msk [vmem:[#allocation6 + $0x60] sm:$0xff] %vm2905, %v3894
  %3912 = vst.msk [vmem:[#allocation6 + $0x70] sm:$0xff] %vm2905, %v3896
  %v3913 = vld [vmem:[%s3688 + $0x2] sm:$0xff]
  %v3914 = vld [vmem:[%s3688 + $0x22] sm:$0xff]
  %v3915 = vld [vmem:[%s3688 + $0x42] sm:$0xff]
  %v3916 = vld [vmem:[%s3688 + $0x62] sm:$0xff]
  %v3917 = vld [vmem:[%s3688 + $0xa2] sm:$0xff]
  %v3918 = vld [vmem:[%s3688 + $0xc2] sm:$0xff]
  %v3919 = vld [vmem:[%s3688 + $0xe2] sm:$0xff]
  %v3920 = vld [vmem:[%s3688 + $0x102] sm:$0xff]
  %3929 = vrot.lane.b32.xlu0 %v3913, 80
  %v3930 = vpop.permute.xlu0 %3929
  %3931 = vrot.lane.b32.xlu0 %v3914, 80
  %v3932 = vpop.permute.xlu0 %3931
  %3933 = vrot.lane.b32.xlu0 %v3915, 80
  %v3934 = vpop.permute.xlu0 %3933
  %3935 = vrot.lane.b32.xlu0 %v3916, 80
  %v3936 = vpop.permute.xlu0 %3935
  %3937 = vrot.lane.b32.xlu0 %v3917, 80
  %v3938 = vpop.permute.xlu0 %3937
  %3939 = vrot.lane.b32.xlu0 %v3918, 80
  %v3940 = vpop.permute.xlu0 %3939
  %3941 = vrot.lane.b32.xlu0 %v3919, 80
  %v3942 = vpop.permute.xlu0 %3941
  %3943 = vrot.lane.b32.xlu0 %v3920, 80
  %v3944 = vpop.permute.xlu0 %3943
  %3953 = vst.msk [vmem:[#allocation6] sm:$0xff] %vm3002, %v3930
  %3954 = vst.msk [vmem:[#allocation6 + $0x10] sm:$0xff] %vm3002, %v3932
  %3955 = vst.msk [vmem:[#allocation6 + $0x20] sm:$0xff] %vm3002, %v3934
  %3956 = vst.msk [vmem:[#allocation6 + $0x30] sm:$0xff] %vm3002, %v3936
  %3957 = vst.msk [vmem:[#allocation6 + $0x40] sm:$0xff] %vm3002, %v3938
  %3958 = vst.msk [vmem:[#allocation6 + $0x50] sm:$0xff] %vm3002, %v3940
  %3959 = vst.msk [vmem:[#allocation6 + $0x60] sm:$0xff] %vm3002, %v3942
  %3960 = vst.msk [vmem:[#allocation6 + $0x70] sm:$0xff] %vm3002, %v3944
  %s3961 = scalar_lea.vmem [#allocation5], 32
  %v3962 = vld [vmem:[%s3961] sm:$0xff]
  %v3963 = vld [vmem:[%s3961 + $0x20] sm:$0xff]
  %v3964 = vld [vmem:[%s3961 + $0x40] sm:$0xff]
  %v3965 = vld [vmem:[%s3961 + $0x60] sm:$0xff]
  %v3966 = vld [vmem:[%s3961 + $0xa0] sm:$0xff]
  %v3967 = vld [vmem:[%s3961 + $0xc0] sm:$0xff]
  %v3968 = vld [vmem:[%s3961 + $0xe0] sm:$0xff]
  %v3969 = vld [vmem:[%s3961 + $0x100] sm:$0xff]
  %3978 = vrot.lane.b32.xlu0 %v3962, 96
  %v3979 = vpop.permute.xlu0 %3978
  %3980 = vrot.lane.b32.xlu0 %v3963, 96
  %v3981 = vpop.permute.xlu0 %3980
  %3982 = vrot.lane.b32.xlu0 %v3964, 96
  %v3983 = vpop.permute.xlu0 %3982
  %3984 = vrot.lane.b32.xlu0 %v3965, 96
  %v3985 = vpop.permute.xlu0 %3984
  %3986 = vrot.lane.b32.xlu0 %v3966, 96
  %v3987 = vpop.permute.xlu0 %3986
  %3988 = vrot.lane.b32.xlu0 %v3967, 96
  %v3989 = vpop.permute.xlu0 %3988
  %3990 = vrot.lane.b32.xlu0 %v3968, 96
  %v3991 = vpop.permute.xlu0 %3990
  %3992 = vrot.lane.b32.xlu0 %v3969, 96
  %v3993 = vpop.permute.xlu0 %3992
  %4002 = vst.msk [vmem:[#allocation6] sm:$0xff] %vm3100, %v3979
  %4003 = vst.msk [vmem:[#allocation6 + $0x10] sm:$0xff] %vm3100, %v3981
  %4004 = vst.msk [vmem:[#allocation6 + $0x20] sm:$0xff] %vm3100, %v3983
  %4005 = vst.msk [vmem:[#allocation6 + $0x30] sm:$0xff] %vm3100, %v3985
  %4006 = vst.msk [vmem:[#allocation6 + $0x40] sm:$0xff] %vm3100, %v3987
  %4007 = vst.msk [vmem:[#allocation6 + $0x50] sm:$0xff] %vm3100, %v3989
  %4008 = vst.msk [vmem:[#allocation6 + $0x60] sm:$0xff] %vm3100, %v3991
  %4009 = vst.msk [vmem:[#allocation6 + $0x70] sm:$0xff] %vm3100, %v3993
  %v4010 = vld [vmem:[%s3961 + $0x1] sm:$0xff]
  %v4011 = vld [vmem:[%s3961 + $0x21] sm:$0xff]
  %v4012 = vld [vmem:[%s3961 + $0x41] sm:$0xff]
  %v4013 = vld [vmem:[%s3961 + $0x61] sm:$0xff]
  %v4014 = vld [vmem:[%s3961 + $0xa1] sm:$0xff]
  %v4015 = vld [vmem:[%s3961 + $0xc1] sm:$0xff]
  %v4016 = vld [vmem:[%s3961 + $0xe1] sm:$0xff]
  %v4017 = vld [vmem:[%s3961 + $0x101] sm:$0xff]
  %4026 = vrot.lane.b32.xlu0 %v4010, 112
  %v4027 = vpop.permute.xlu0 %4026
  %4028 = vrot.lane.b32.xlu0 %v4011, 112
  %v4029 = vpop.permute.xlu0 %4028
  %4030 = vrot.lane.b32.xlu0 %v4012, 112
  %v4031 = vpop.permute.xlu0 %4030
  %4032 = vrot.lane.b32.xlu0 %v4013, 112
  %v4033 = vpop.permute.xlu0 %4032
  %4034 = vrot.lane.b32.xlu0 %v4014, 112
  %v4035 = vpop.permute.xlu0 %4034
  %4036 = vrot.lane.b32.xlu0 %v4015, 112
  %v4037 = vpop.permute.xlu0 %4036
  %4038 = vrot.lane.b32.xlu0 %v4016, 112
  %v4039 = vpop.permute.xlu0 %4038
  %4040 = vrot.lane.b32.xlu0 %v4017, 112
  %v4041 = vpop.permute.xlu0 %4040
  %4050 = vst.msk [vmem:[#allocation6] sm:$0xff] %vm3197, %v4027
  %4051 = vst.msk [vmem:[#allocation6 + $0x10] sm:$0xff] %vm3197, %v4029
  %4052 = vst.msk [vmem:[#allocation6 + $0x20] sm:$0xff] %vm3197, %v4031
  %4053 = vst.msk [vmem:[#allocation6 + $0x30] sm:$0xff] %vm3197, %v4033
  %4054 = vst.msk [vmem:[#allocation6 + $0x40] sm:$0xff] %vm3197, %v4035
  %4055 = vst.msk [vmem:[#allocation6 + $0x50] sm:$0xff] %vm3197, %v4037
  %4056 = vst.msk [vmem:[#allocation6 + $0x60] sm:$0xff] %vm3197, %v4039
  %4057 = vst.msk [vmem:[#allocation6 + $0x70] sm:$0xff] %vm3197, %v4041
  %v4058 = vld [vmem:[%s3961 + $0x2] sm:$0xff]
  %v4059 = vld [vmem:[%s3961 + $0x22] sm:$0xff]
  %v4060 = vld [vmem:[%s3961 + $0x42] sm:$0xff]
  %v4061 = vld [vmem:[%s3961 + $0x62] sm:$0xff]
  %v4062 = vld [vmem:[%s3961 + $0xa2] sm:$0xff]
  %v4063 = vld [vmem:[%s3961 + $0xc2] sm:$0xff]
  %v4064 = vld [vmem:[%s3961 + $0xe2] sm:$0xff]
  %v4065 = vld [vmem:[%s3961 + $0x102] sm:$0xff]
  %4066 = vst.msk [vmem:[#allocation6 + $0x8] sm:$0xff] %vm2289, %v4058
  %4067 = vst.msk [vmem:[#allocation6 + $0x18] sm:$0xff] %vm2289, %v4059
  %4068 = vst.msk [vmem:[#allocation6 + $0x28] sm:$0xff] %vm2289, %v4060
  %4069 = vst.msk [vmem:[#allocation6 + $0x38] sm:$0xff] %vm2289, %v4061
  %4070 = vst.msk [vmem:[#allocation6 + $0x48] sm:$0xff] %vm2289, %v4062
  %4071 = vst.msk [vmem:[#allocation6 + $0x58] sm:$0xff] %vm2289, %v4063
  %4072 = vst.msk [vmem:[#allocation6 + $0x68] sm:$0xff] %vm2289, %v4064
  %4073 = vst.msk [vmem:[#allocation6 + $0x78] sm:$0xff] %vm2289, %v4065
  %v4074 = vld [vmem:[#allocation6] sm:$0xff]
  %v4075 = vld [vmem:[#allocation6 + $0x8] sm:$0xff]
  %v4076 = vld [vmem:[#allocation6 + $0x10] sm:$0xff]
  %v4077 = vld [vmem:[#allocation6 + $0x18] sm:$0xff]
  %v4078 = vld [vmem:[#allocation6 + $0x20] sm:$0xff]
  %v4079 = vld [vmem:[#allocation6 + $0x28] sm:$0xff]
  %v4080 = vld [vmem:[#allocation6 + $0x30] sm:$0xff]
  %v4081 = vld [vmem:[#allocation6 + $0x38] sm:$0xff]
  %v4082 = vld [vmem:[#allocation6 + $0x40] sm:$0xff]
  %v4083 = vld [vmem:[#allocation6 + $0x48] sm:$0xff]
  %v4084 = vld [vmem:[#allocation6 + $0x50] sm:$0xff]
  %v4085 = vld [vmem:[#allocation6 + $0x58] sm:$0xff]
  %v4086 = vld [vmem:[#allocation6 + $0x60] sm:$0xff]
  %v4087 = vld [vmem:[#allocation6 + $0x68] sm:$0xff]
  %v4088 = vld [vmem:[#allocation6 + $0x70] sm:$0xff]
  %v4089 = vld [vmem:[#allocation6 + $0x78] sm:$0xff]
  %v4090 = vld [vmem:[%s7] sm:$0xff]
  %v4091 = vld [vmem:[%s7 + $0x8] sm:$0xff]
  %v4092 = vld [vmem:[%s7 + $0x10] sm:$0xff]
  %v4093 = vld [vmem:[%s7 + $0x18] sm:$0xff]
  %v4094 = vld [vmem:[%s7 + $0x20] sm:$0xff]
  %v4095 = vld [vmem:[%s7 + $0x28] sm:$0xff]
  %v4096 = vld [vmem:[%s7 + $0x30] sm:$0xff]
  %v4097 = vld [vmem:[%s7 + $0x38] sm:$0xff]
  %v4098 = vld [vmem:[%s7 + $0x40] sm:$0xff]
  %v4099 = vld [vmem:[%s7 + $0x48] sm:$0xff]
  %v4100 = vld [vmem:[%s7 + $0x50] sm:$0xff]
  %v4101 = vld [vmem:[%s7 + $0x58] sm:$0xff]
  %v4102 = vld [vmem:[%s7 + $0x60] sm:$0xff]
  %v4103 = vld [vmem:[%s7 + $0x68] sm:$0xff]
  %v4104 = vld [vmem:[%s7 + $0x70] sm:$0xff]
  %v4105 = vld [vmem:[%s7 + $0x78] sm:$0xff]
  %v4106 = vld [vmem:[%s7 + $0x80] sm:$0xff]
  %v4107 = vld [vmem:[%s7 + $0x88] sm:$0xff]
  %v4108 = vlaneseq
  %v4109 = vshrl.u32 %v4108, 7
  %v4110 = vadd.s32 %v4109, 8
  %v4111 = vadd.s32 %v4109, 16
  %v4112 = vadd.s32 %v4109, 24
  %v4113 = vadd.s32 %v4109, 32
  %v4114 = vadd.s32 %v4109, 40
  %v4115 = vadd.s32 %v4109, 48
  %v4116 = vadd.s32 %v4109, 56
  %v4117 = vand.u32 %v4109, 1
  %v4118 = vand.u32 %v4110, 1
  %v4119 = vand.u32 %v4111, 1
  %v4120 = vand.u32 %v4112, 1
  %v4121 = vand.u32 %v4113, 1
  %v4122 = vand.u32 %v4114, 1
  %v4123 = vand.u32 %v4115, 1
  %v4124 = vand.u32 %v4116, 1
  %vm4125 = vcmp.eq.s32.totalorder %v4117, 0
  %vm4126 = vcmp.eq.s32.totalorder %v4118, 0
  %vm4127 = vcmp.eq.s32.totalorder %v4119, 0
  %vm4128 = vcmp.eq.s32.totalorder %v4120, 0
  %vm4129 = vcmp.eq.s32.totalorder %v4121, 0
  %vm4130 = vcmp.eq.s32.totalorder %v4122, 0
  %vm4131 = vcmp.eq.s32.totalorder %v4123, 0
  %vm4132 = vcmp.eq.s32.totalorder %v4124, 0
  %v4133 = vsel %vm4125, 1, 0
  %v4134 = vsel %vm4126, 1, 0
  %v4135 = vsel %vm4127, 1, 0
  %v4136 = vsel %vm4128, 1, 0
  %v4137 = vsel %vm4129, 1, 0
  %v4138 = vsel %vm4130, 1, 0
  %v4139 = vsel %vm4131, 1, 0
  %v4140 = vsel %vm4132, 1, 0
  %v4141 = vcvt.s32.f32 %v4133
  %v4142 = vcvt.s32.f32 %v4134
  %v4143 = vcvt.s32.f32 %v4135
  %v4144 = vcvt.s32.f32 %v4136
  %v4145 = vcvt.s32.f32 %v4137
  %v4146 = vcvt.s32.f32 %v4138
  %v4147 = vcvt.s32.f32 %v4139
  %v4148 = vcvt.s32.f32 %v4140
  %v4149 = vld [vmem:[%s8] sm:$0x1]
  %v4150 = vld [vmem:[%s8 + $0x1] sm:$0x1]
  %v4151 = vld [vmem:[%s8 + $0x2] sm:$0x1]
  %v4152 = vperm.slane %v4149, 0
  %v4154 = vsel %vm2289, %v4075, 0
  %v4157 = vsel %vm2289, %v4077, 0
  %v4160 = vsel %vm2289, %v4079, 0
  %v4163 = vsel %vm2289, %v4081, 0
  %v4166 = vsel %vm2289, %v4083, 0
  %v4169 = vsel %vm2289, %v4085, 0
  %v4172 = vsel %vm2289, %v4087, 0
  %v4175 = vsel %vm2289, %v4089, 0
  %4177 = vmatpush.msra.mxu0 %v4105
  %4178 = vmatpush.msra.mxu0 %v4104
  %4179 = vmatpush.msra.mxu0 %v4103
  %4180 = vmatpush.msra.mxu0 %v4102
  %4181 = vmatpush.msra.mxu0 %v4101
  %4182 = vmatpush.msra.mxu0 %v4100
  %4183 = vmatpush.msra.mxu0 %v4099
  %4184 = vmatpush.msra.mxu0 %v4098
  %4185 = vmatpush.msra.mxu0 %v4097
  %4186 = vmatpush.msra.mxu0 %v4096
  %4187 = vmatpush.msra.mxu0 %v4095
  %4188 = vmatpush.msra.mxu0 %v4094
  %4189 = vmatpush.msra.mxu0 %v4093
  %4190 = vmatpush.msra.mxu0 %v4092
  %4191 = vmatpush.msra.mxu0 %v4091
  %4192 = vmatpush.msra.mxu0 %v4090
  %4193 = vmatmul.f32.gmra.mxu0 %v4074
  %v4194 = vpop.f32.mrf.mxu0
  %v4195 = vadd.f32 %v4152, %v4194
  %4196 = vmatmul.f32.gmra.mxu0 %v4076
  %v4197 = vpop.f32.mrf.mxu0
  %v4198 = vadd.f32 %v4152, %v4197
  %4199 = vmatmul.f32.gmra.mxu0 %v4078
  %v4200 = vpop.f32.mrf.mxu0
  %v4201 = vadd.f32 %v4152, %v4200
  %4202 = vmatmul.f32.gmra.mxu0 %v4080
  %v4203 = vpop.f32.mrf.mxu0
  %v4204 = vadd.f32 %v4152, %v4203
  %4205 = vmatmul.f32.gmra.mxu0 %v4082
  %v4206 = vpop.f32.mrf.mxu0
  %v4207 = vadd.f32 %v4152, %v4206
  %4208 = vmatmul.f32.gmra.mxu0 %v4084
  %v4209 = vpop.f32.mrf.mxu0
  %v4210 = vadd.f32 %v4152, %v4209
  %4211 = vmatmul.f32.gmra.mxu0 %v4086
  %v4212 = vpop.f32.mrf.mxu0
  %v4213 = vadd.f32 %v4152, %v4212
  %4214 = vmatmul.f32.gmra.mxu0 %v4088
  %v4215 = vpop.f32.mrf.mxu0
  %v4216 = vadd.f32 %v4152, %v4215
  %4217 = vdwg.mxu0
  %4218 = vmatpush.msra.mxu0 0.0
  %4219 = vmatpush.msra.mxu0 0.0
  %4220 = vmatpush.msra.mxu0 0.0
  %4221 = vmatpush.msra.mxu0 0.0
  %4222 = vmatpush.msra.mxu0 0.0
  %4223 = vmatpush.msra.mxu0 0.0
  %4224 = vmatpush.msra.mxu0 0.0
  %4225 = vmatpush.msra.mxu0 0.0
  %4226 = vmatpush.msra.mxu0 0.0
  %4227 = vmatpush.msra.mxu0 0.0
  %4228 = vmatpush.msra.mxu0 0.0
  %4229 = vmatpush.msra.mxu0 0.0
  %4230 = vmatpush.msra.mxu0 0.0
  %4231 = vmatpush.msra.mxu0 0.0
  %4232 = vmatpush.msra.mxu0 %v4107
  %4233 = vmatpush.msra.mxu0 %v4106
  %4234 = vmatmul.f32.gmra.mxu0 %v4154
  %v4235 = vpop.f32.mrf.mxu0
  %v4236 = vadd.f32 %v4195, %v4235
  %4237 = vmatmul.f32.gmra.mxu0 %v4157
  %v4238 = vpop.f32.mrf.mxu0
  %v4239 = vadd.f32 %v4198, %v4238
  %4240 = vmatmul.f32.gmra.mxu0 %v4160
  %v4241 = vpop.f32.mrf.mxu0
  %v4242 = vadd.f32 %v4201, %v4241
  %4243 = vmatmul.f32.gmra.mxu0 %v4163
  %v4244 = vpop.f32.mrf.mxu0
  %v4245 = vadd.f32 %v4204, %v4244
  %4246 = vmatmul.f32.gmra.mxu0 %v4166
  %v4247 = vpop.f32.mrf.mxu0
  %v4248 = vadd.f32 %v4207, %v4247
  %4249 = vmatmul.f32.gmra.mxu0 %v4169
  %v4250 = vpop.f32.mrf.mxu0
  %v4251 = vadd.f32 %v4210, %v4250
  %4252 = vmatmul.f32.gmra.mxu0 %v4172
  %v4253 = vpop.f32.mrf.mxu0
  %v4254 = vadd.f32 %v4213, %v4253
  %4255 = vmatmul.f32.gmra.mxu0 %v4175
  %v4256 = vpop.f32.mrf.mxu0
  %v4257 = vadd.f32 %v4216, %v4256
  %4258 = vdwg.mxu0
  %v4259 = vmax.f32 %v4236, 0.0
  %v4260 = vmax.f32 %v4239, 0.0
  %v4261 = vmax.f32 %v4242, 0.0
  %v4262 = vmax.f32 %v4245, 0.0
  %v4263 = vmax.f32 %v4248, 0.0
  %v4264 = vmax.f32 %v4251, 0.0
  %v4265 = vmax.f32 %v4254, 0.0
  %v4266 = vmax.f32 %v4257, 0.0
  %v4267 = vmul.f32 %v4259, %v4141
  %v4268 = vmul.f32 %v4260, %v4142
  %v4269 = vmul.f32 %v4261, %v4143
  %v4270 = vmul.f32 %v4262, %v4144
  %v4271 = vmul.f32 %v4263, %v4145
  %v4272 = vmul.f32 %v4264, %v4146
  %v4273 = vmul.f32 %v4265, %v4147
  %v4274 = vmul.f32 %v4266, %v4148
  %v4275 = vsel %vm104, %v4267, 0.0
  %v4276 = vsel %vm104, %v4268, 0.0
  %v4277 = vadd.f32 %v4275, %v4276
  %v4278 = vsel %vm104, %v4269, 0.0
  %v4279 = vadd.f32 %v4277, %v4278
  %v4280 = vsel %vm104, %v4270, 0.0
  %v4281 = vadd.f32 %v4279, %v4280
  %v4282 = vsel %vm104, %v4271, 0.0
  %v4283 = vadd.f32 %v4281, %v4282
  %v4284 = vsel %vm104, %v4272, 0.0
  %v4285 = vadd.f32 %v4283, %v4284
  %v4286 = vsel %vm104, %v4273, 0.0
  %v4287 = vadd.f32 %v4285, %v4286
  %v4288 = vsel %vm104, %v4274, 0.0
  %v4289 = vadd.f32 %v4287, %v4288
  %v4290 = vrot.slane %v4289, 4
  %v4291 = vadd.f32 %v4289, %v4290
  %v4292 = vrot.slane %v4291, 2
  %v4293 = vadd.f32 %v4291, %v4292
  %v4294 = vrot.slane %v4293, 1
  %v4295 = vadd.f32 %v4293, %v4294
  %v4296 = vmul.f32 %v4295, 0.03125
  %v4297 = vsub.f32 %v4259, %v4296
  %v4298 = vsub.f32 %v4260, %v4296
  %v4299 = vsub.f32 %v4261, %v4296
  %v4300 = vsub.f32 %v4262, %v4296
  %v4301 = vsub.f32 %v4263, %v4296
  %v4302 = vsub.f32 %v4264, %v4296
  %v4303 = vsub.f32 %v4265, %v4296
  %v4304 = vsub.f32 %v4266, %v4296
  %v4305 = vmul.f32 %v4297, %v4297
  %v4306 = vmul.f32 %v4298, %v4298
  %v4307 = vmul.f32 %v4299, %v4299
  %v4308 = vmul.f32 %v4300, %v4300
  %v4309 = vmul.f32 %v4301, %v4301
  %v4310 = vmul.f32 %v4302, %v4302
  %v4311 = vmul.f32 %v4303, %v4303
  %v4312 = vmul.f32 %v4304, %v4304
  %v4313 = vmul.f32 %v4305, %v4141
  %v4314 = vmul.f32 %v4306, %v4142
  %v4315 = vmul.f32 %v4307, %v4143
  %v4316 = vmul.f32 %v4308, %v4144
  %v4317 = vmul.f32 %v4309, %v4145
  %v4318 = vmul.f32 %v4310, %v4146
  %v4319 = vmul.f32 %v4311, %v4147
  %v4320 = vmul.f32 %v4312, %v4148
  %v4321 = vsel %vm104, %v4313, 0.0
  %v4322 = vsel %vm104, %v4314, 0.0
  %v4323 = vadd.f32 %v4321, %v4322
  %v4324 = vsel %vm104, %v4315, 0.0
  %v4325 = vadd.f32 %v4323, %v4324
  %v4326 = vsel %vm104, %v4316, 0.0
  %v4327 = vadd.f32 %v4325, %v4326
  %v4328 = vsel %vm104, %v4317, 0.0
  %v4329 = vadd.f32 %v4327, %v4328
  %v4330 = vsel %vm104, %v4318, 0.0
  %v4331 = vadd.f32 %v4329, %v4330
  %v4332 = vsel %vm104, %v4319, 0.0
  %v4333 = vadd.f32 %v4331, %v4332
  %v4334 = vsel %vm104, %v4320, 0.0
  %v4335 = vadd.f32 %v4333, %v4334
  %v4336 = vrot.slane %v4335, 4
  %v4337 = vadd.f32 %v4335, %v4336
  %v4338 = vrot.slane %v4337, 2
  %v4339 = vadd.f32 %v4337, %v4338
  %v4340 = vrot.slane %v4339, 1
  %v4341 = vadd.f32 %v4339, %v4340
  %v4342 = vmul.f32 %v4341, 0.03125
  %v4343 = vadd.f32 %v4342, 1e-05
  %v4344 = vrsqrt.pop %v4343
  %v4345 = vmul.f32 %v4344, %v4343
  %v4346 = vmul.f32 %v4345, %v4344
  %v4347 = vmul.f32 0.5, %v4346
  %v4348 = vsub.f32 1.5, %v4347
  %v4349 = vmul.f32 %v4344, %v4348
  %vm4350 = vweird.f32 %v4343
  %vm4351 = vweird.f32 %v4344
  %vm4352 = vmor %vm4350, %vm4351
  %v4353 = vsel %vm4352, %v4344, %v4349
  %v4354 = vmul.f32 %v4150, %v4353
  %v4355 = vperm.slane %v4354, 0
  %v4356 = vmul.f32 %v4297, %v4355
  %v4357 = vmul.f32 %v4298, %v4355
  %v4358 = vmul.f32 %v4299, %v4355
  %v4359 = vmul.f32 %v4300, %v4355
  %v4360 = vmul.f32 %v4301, %v4355
  %v4361 = vmul.f32 %v4302, %v4355
  %v4362 = vmul.f32 %v4303, %v4355
  %v4363 = vmul.f32 %v4304, %v4355
  %v4364 = vperm.slane %v4151, 0
  %v4365 = vadd.f32 %v4356, %v4364
  %v4366 = vadd.f32 %v4357, %v4364
  %v4367 = vadd.f32 %v4358, %v4364
  %v4368 = vadd.f32 %v4359, %v4364
  %v4369 = vadd.f32 %v4360, %v4364
  %v4370 = vadd.f32 %v4361, %v4364
  %v4371 = vadd.f32 %v4362, %v4364
  %v4372 = vadd.f32 %v4363, %v4364
  %4373 = vst.msk [vmem:[%s9] sm:$0xff] %vm104, %v4365
  %4374 = vst.msk [vmem:[%s9 + $0x8] sm:$0xff] %vm104, %v4366
  %4375 = vst.msk [vmem:[%s9 + $0x10] sm:$0xff] %vm104, %v4367
  %4376 = vst.msk [vmem:[%s9 + $0x18] sm:$0xff] %vm104, %v4368
  %4377 = vst.msk [vmem:[%s9 + $0x20] sm:$0xff] %vm104, %v4369
  %4378 = vst.msk [vmem:[%s9 + $0x28] sm:$0xff] %vm104, %v4370
  %4379 = vst.msk [vmem:[%s9 + $0x30] sm:$0xff] %vm104, %v4371
  %4380 = vst.msk [vmem:[%s9 + $0x38] sm:$0xff] %vm104, %v4372
  // Predicated region
  $region38: #{forward.1} parent=0 // pred_check
    _
  $region39: #{forward.1} parent=0 // pred_check_branch
    %4382 = sbr.rel (0) target = $region41
  $region40: #{forward.1} parent=0 // pred_region
    _
  $region41: #{forward.1} parent=0 // pred_fallthru
    _
  // Predicated region
  $region42: #{forward.1} parent=0 // pred_check
    _
  $region43: #{forward.1} parent=0 // pred_check_branch
    %4384 = sbr.rel (0) target = $region45
  $region44: #{forward.1} parent=0 // pred_region
    _
  $region45: #{forward.1} parent=0 // pred_fallthru
    _

</llo_original>
